<compile_context>
chip_gen: v7x
topology: tpu7x:2x2x1
jax: 0.10.0
libtpu: 0.0.40
codegen_flags: <defaults>
</compile_context>

<pallas_src>
import math
from typing import NamedTuple

import jax
import jax.numpy as jnp
from jax.experimental import pallas as pl
from jax.experimental.pallas import tpu as pltpu


# ------------------------------ helpers ---------------------------------------
def _round_up(x, m):
    return ((x + m - 1) // m) * m


def _nbytes(shape, dtype):
    return math.prod(shape) * jnp.dtype(dtype).itemsize


class LSTMConfig(NamedTuple):
    num_layers: int
    H: int        # real hidden width
    Hp: int       # lane-padded hidden width (h/c/hseq width, matmul K dim)
    S: int        # per-gate stride in the gate axis
    G: int        # padded gate width (matmul N dim of the recurrence)
    N: int        # real head output width (num_items)
    Np: int       # padded head output width
    Tn: int       # head output tile (W_out streams when Np > Tn)
    packed: bool  # True -> 4 gates packed into one 128-lane block (4*H <= 128)


def _pad_gate_cols(w_t, H, S, G):
    """w_t: (K, 4H), PyTorch gate order i|f|g|o -> (K, G) with gate g at
    columns [g*S, g*S + H); all other columns zero (inert padding)."""
    K = w_t.shape[0]
    out = jnp.zeros((K, G), jnp.float32)
    for g in range(4):
        out = out.at[:, g * S:g * S + H].set(w_t[:, g * H:(g + 1) * H])
    return out


def _pad_rows(w, K, Kp):
    if Kp == K:
        return w
    return jnp.concatenate([w, jnp.zeros((Kp - K, w.shape[1]), w.dtype)], axis=0)


# ------------------------- one-time parameter prep -----------------------------
def prepare_params(params, weight_dtype=jnp.bfloat16):
    """Pad/transpose/cast weights ONCE (outside the jitted forward)."""
    lstm_params = params["lstm"]
    L = len(lstm_params)
    H = lstm_params[0][1].shape[1]            # w_hh: (4H, H)
    N = params["w_out"].shape[0]

    packed = (4 * H) <= 128
    Hp = _round_up(H, 128)
    S = H if packed else Hp
    G = _round_up(4 * S, 128)
    Np = _round_up(N, 128)
    Tn = Np if Np <= 1024 else 512            # stream W_out in Tn-wide tiles
    Np = _round_up(Np, Tn)

    def f32(a):
        return jnp.asarray(a, jnp.float32)

    w_ih0, w_hh0, b_ih0, b_hh0 = (f32(a) for a in lstm_params[0])
    prepped = {
        # Layer-0 input projection runs in XLA (off the recurrence) -> keep f32.
        "wih0": _pad_gate_cols(w_ih0.T, H, S, G),                               # (E, G)
        "b0": _pad_gate_cols((b_ih0 + b_hh0).reshape(1, 4 * H), H, S, G),        # (1, G)
        "whh0": _pad_rows(_pad_gate_cols(w_hh0.T, H, S, G), H, Hp).astype(weight_dtype),
        "wih": [], "whh": [], "b": [],
    }
    for l in range(1, L):
        w_ih, w_hh, b_ih, b_hh = (f32(a) for a in lstm_params[l])
        prepped["wih"].append(
            _pad_rows(_pad_gate_cols(w_ih.T, H, S, G), H, Hp).astype(weight_dtype))
        prepped["whh"].append(
            _pad_rows(_pad_gate_cols(w_hh.T, H, S, G), H, Hp).astype(weight_dtype))
        prepped["b"].append(
            _pad_gate_cols((b_ih + b_hh).reshape(1, 4 * H), H, S, G))
    wout = jnp.zeros((Hp, Np), jnp.float32).at[:H, :N].set(f32(params["w_out"]).T)
    prepped["wout"] = wout.astype(weight_dtype)
    prepped["bout"] = jnp.zeros((1, Np), jnp.float32).at[0, :N].set(f32(params["b_out"]))

    cfg = LSTMConfig(num_layers=L, H=H, Hp=Hp, S=S, G=G, N=N, Np=Np, Tn=Tn,
                     packed=packed)
    return cfg, prepped


# ------------------------------ fused kernel ----------------------------------
def _make_kernel(cfg, T, Bc):
    L, H, Hp, G, packed = cfg.num_layers, cfg.H, cfg.Hp, cfg.G, cfg.packed
    multi = L > 1

    def kernel(*refs):
        xg0_ref, whh0_ref = refs[0], refs[1]
        pos = 2
        layer_refs = []
        for _ in range(L - 1):
            layer_refs.append(tuple(refs[pos:pos + 3]))     # (wih, whh, bias)
            pos += 3
        wout_ref = refs[pos]
        bout_ref = refs[pos + 1]
        out_ref = refs[pos + 2]
        hlast_ref = refs[pos + 3]                            # (Bc, Hp) scratch
        if multi:
            gbuf = refs[pos + 4]                             # (T*Bc, G) scratch
            hseq = refs[pos + 5]                             # (T*Bc, Hp) scratch

        wdt = whh0_ref.dtype

        # Recurrence runs only on the first head tile; its result persists in
        # hlast_ref for the remaining (streamed) head tiles.
        @pl.when(pl.program_id(1) == 0)
        def _recurrence():
            pad_zeros = (jnp.zeros((Bc, Hp - H), jnp.float32)
                         if (packed and Hp > H) else None)
            h = None
            for layer in range(L):
                if layer == 0:
                    whh = whh0_ref

                    def load_gates(t):
                        return xg0_ref[t]                    # (Bc, G), whole tiles
                else:
                    wih_ref, whh, b_ref = layer_refs[layer - 1]
                    # Bulk input projection for the whole sequence: one batched
                    # MXU matmul, off the recurrent critical path.
                    gbuf[...] = (
                        jnp.dot(hseq[...].astype(wdt), wih_ref[...],
                                preferred_element_type=jnp.float32)
                        + b_ref[...]
                    )

                    def load_gates(t):
                        return gbuf[t * Bc:(t + 1) * Bc, :]  # Bc % 8 == 0 -> aligned
                write_seq = multi and (layer < L - 1)

                h = jnp.zeros((Bc, Hp), jnp.float32)
                c = jnp.zeros((Bc, H if packed else Hp), jnp.float32)
                # T is small & static -> full unroll keeps everything schedulable.
                for t in range(T):
                    gates = load_gates(t) + jnp.dot(
                        h.astype(wdt), whh[...], preferred_element_type=jnp.float32)
                    if packed:
                        # Gates packed into one 128-lane block: narrow (N=128)
                        # recurrent matmul; split by static lane slices.
                        i_g = jax.nn.sigmoid(gates[:, 0 * H:1 * H])
                        f_g = jax.nn.sigmoid(gates[:, 1 * H:2 * H])
                        g_g = jnp.tanh(gates[:, 2 * H:3 * H])
                        o_g = jax.nn.sigmoid(gates[:, 3 * H:4 * H])
                        c = f_g * c + i_g * g_g
                        h_n = o_g * jnp.tanh(c)
                        h = (h_n if pad_zeros is None
                             else jnp.concatenate([h_n, pad_zeros], axis=1))
                    else:
                        # Per-gate 128-lane layout: whole-vreg gate slices.
                        i_g = jax.nn.sigmoid(gates[:, 0 * Hp:1 * Hp])
                        f_g = jax.nn.sigmoid(gates[:, 1 * Hp:2 * Hp])
                        g_g = jnp.tanh(gates[:, 2 * Hp:3 * Hp])
                        o_g = jax.nn.sigmoid(gates[:, 3 * Hp:4 * Hp])
                        c = f_g * c + i_g * g_g
                        h = o_g * jnp.tanh(c)
                    if write_seq:
                        hseq[t * Bc:(t + 1) * Bc, :] = h     # aligned whole-tile store
            hlast_ref[...] = h

        # Streamed head: every (i, j) grid step multiplies the resident h_last
        # by the current Tn-wide slab of W_out (lane-dense store).
        out_ref[...] = (
            jnp.dot(hlast_ref[...].astype(wdt), wout_ref[...],
                    preferred_element_type=jnp.float32)
            + bout_ref[...]
        )

    return kernel


# --------------------------------- wrapper ------------------------------------
def lstm_interaction_encoder(item_embedded, prepped, cfg):
    """item_embedded: (B, T, E) batch_first, as in the PyTorch module."""
    B, T, E = item_embedded.shape
    L, H, Hp, G, N, Np, Tn = (cfg.num_layers, cfg.H, cfg.Hp, cfg.G,
                              cfg.N, cfg.Np, cfg.Tn)

    # Batch tiling: sublane-aligned, split into <=128-row tiles for the
    # "parallel" grid axis (megacore on v7x, xg0 streamed per tile).
    Bp = _round_up(B, 8)
    Bc = Bp if Bp <= 128 else 128
    Bp = _round_up(Bp, Bc)
    nb = Bp // Bc
    nt = Np // Tn

    wdt = prepped["whh0"].dtype

    # Layer-0 input projection hoisted out of the recurrence (one batched XLA
    # matmul, bias folded in), laid out time-major / tile-aligned (T, Bp, G).
    x = item_embedded.astype(jnp.float32)
    xg0 = jnp.einsum("bte,eg->tbg", x, prepped["wih0"]) + prepped["b0"]
    if Bp != B:
        xg0 = jnp.pad(xg0, ((0, 0), (0, Bp - B), (0, 0)))

    inputs = [xg0, prepped["whh0"]]
    in_specs = [
        pl.BlockSpec((T, Bc, G), lambda i, j: (0, i, 0)),
        pl.BlockSpec((Hp, G), lambda i, j: (0, 0)),
    ]
    for l in range(L - 1):
        inputs += [prepped["wih"][l], prepped["whh"][l], prepped["b"][l]]
        in_specs += [
            pl.BlockSpec((Hp, G), lambda i, j: (0, 0)),
            pl.BlockSpec((Hp, G), lambda i, j: (0, 0)),
            pl.BlockSpec((1, G), lambda i, j: (0, 0)),
        ]
    inputs += [prepped["wout"], prepped["bout"]]
    in_specs += [
        pl.BlockSpec((Hp, Tn), lambda i, j: (0, j)),      # W_out streams over j
        pl.BlockSpec((1, Tn), lambda i, j: (0, j)),
    ]

    scratch = [pltpu.VMEM((Bc, Hp), jnp.float32)]          # h_last (persists over j)
    if L > 1:
        scratch += [
            pltpu.VMEM((T * Bc, G), jnp.float32),          # gate projections, layers > 0
            pltpu.VMEM((T * Bc, Hp), jnp.float32),         # inter-layer hidden sequence
        ]

    # VMEM budget + scheduler hints.
    block_bytes = (_nbytes((T, Bc, G), jnp.float32)
                   + (2 * L - 1) * _nbytes((Hp, G), wdt)
                   + (L - 1) * _nbytes((1, G), jnp.float32)
                   + _nbytes((Hp, Tn), wdt) + _nbytes((1, Tn), jnp.float32)
                   + _nbytes((Bc, Tn), jnp.float32))
    scratch_bytes = sum(_nbytes(s.shape, s.dtype) for s in scratch)
    vmem_limit = int(min(max(2 * block_bytes + scratch_bytes + (4 << 20), 32 << 20),
                         100 << 20))
    flops = int(2 * T * Bp * Hp * G * (2 * L - 1) + 2 * Bp * Hp * Np)
    transcendentals = int(L * T * Bp * (G + Hp))
    bytes_accessed = int(sum(int(a.size) * a.dtype.itemsize for a in inputs)
                         + Bp * Np * 4)

    out_padded = pl.pallas_call(
        _make_kernel(cfg, T, Bc),
        out_shape=jax.ShapeDtypeStruct((Bp, Np), jnp.float32),
        grid=(nb, nt),
        in_specs=in_specs,
        out_specs=pl.BlockSpec((Bc, Tn), lambda i, j: (i, j)),
        scratch_shapes=scratch,
        compiler_params=pltpu.CompilerParams(
            dimension_semantics=("parallel", "arbitrary"),
            vmem_limit_bytes=vmem_limit),
        cost_estimate=pl.CostEstimate(flops=flops,
                                      transcendentals=transcendentals,
                                      bytes_accessed=bytes_accessed),
    )(*inputs)
    return out_padded[:B, :N]


# ----------------------------- parameter init ---------------------------------
def init_params(key, num_items, embedding_dim, lstm_hidden_dim, num_layers):
    params = {"lstm": []}
    H = lstm_hidden_dim
    k_lstm = 1.0 / math.sqrt(H)
    for layer in range(num_layers):
        in_dim = embedding_dim if layer == 0 else H
        key, k1, k2, k3, k4 = jax.random.split(key, 5)
        w_ih = jax.random.uniform(k1, (4 * H, in_dim), jnp.float32, -k_lstm, k_lstm)
        w_hh = jax.random.uniform(k2, (4 * H, H), jnp.float32, -k_lstm, k_lstm)
        b_ih = jax.random.uniform(k3, (4 * H,), jnp.float32, -k_lstm, k_lstm)
        b_hh = jax.random.uniform(k4, (4 * H,), jnp.float32, -k_lstm, k_lstm)
        params["lstm"].append((w_ih, w_hh, b_ih, b_hh))
    key, k1, k2 = jax.random.split(key, 3)
    k_lin = 1.0 / math.sqrt(H)
    params["w_out"] = jax.random.uniform(k1, (num_items, H), jnp.float32, -k_lin, k_lin)
    params["b_out"] = jax.random.uniform(k2, (num_items,), jnp.float32, -k_lin, k_lin)
    return params


# --------------------------------- reference ----------------------------------
def _reference(item_embedded, params):
    x = item_embedded
    B, T, _ = x.shape
    for (w_ih, w_hh, b_ih, b_hh) in params["lstm"]:
        H = w_hh.shape[1]
        h = jnp.zeros((B, H), jnp.float32)
        c = jnp.zeros((B, H), jnp.float32)
        ys = []
        for t in range(T):
            g = x[:, t, :] @ w_ih.T + b_ih + h @ w_hh.T + b_hh
            i = jax.nn.sigmoid(g[:, :H])
            f = jax.nn.sigmoid(g[:, H:2 * H])
            gg = jnp.tanh(g[:, 2 * H:3 * H])
            o = jax.nn.sigmoid(g[:, 3 * H:])
            c = f * c + i * gg
            h = o * jnp.tanh(c)
            ys.append(h)
        x = jnp.stack(ys, axis=1)
    return x[:, -1, :] @ params["w_out"].T + params["b_out"]


if __name__ == "__main__":
    B, T, E, H = 2, 8, 32, 32
    NUM_LAYERS, NUM_ITEMS = 2, 16

    key = jax.random.PRNGKey(0)
    key, pkey, xkey = jax.random.split(key, 3)
    params = init_params(pkey, NUM_ITEMS, E, H, NUM_LAYERS)
    item_embedded = jax.random.normal(xkey, (B, T, E), jnp.float32)

    fwd = jax.jit(lstm_interaction_encoder, static_argnums=(2,))
    ref = _reference(item_embedded, params)

    # Exactness check: f32 weights must match the pure-JAX reference tightly.
    cfg32, prepped32 = prepare_params(params, weight_dtype=jnp.float32)
    out32 = jax.block_until_ready(fwd(item_embedded, prepped32, cfg32))
    assert out32.shape == (B, NUM_ITEMS)
    assert jnp.allclose(out32, ref, atol=1e-4, rtol=1e-4), "f32 mismatch vs reference"

    # Production path: bf16 weights, f32 state/accumulators (looser tolerance).
    cfg16, prepped16 = prepare_params(params, weight_dtype=jnp.bfloat16)
    out16 = jax.block_until_ready(fwd(item_embedded, prepped16, cfg16))
    assert out16.shape == (B, NUM_ITEMS)
    assert jnp.allclose(out16, ref, atol=5e-2, rtol=5e-2), "bf16 mismatch vs reference"

    print("KERNEL_OK")
</pallas_src>

<mosaic_0001>
module attributes {stable_mosaic.version = 11 : i64} {
  func.func @kernel(%arg0: i32, %arg1: i32, %arg2: memref<8x8x128xf32, #tpu.memory_space<vmem>>, %arg3: memref<128x128xf32, #tpu.memory_space<vmem>>, %arg4: memref<128x128xf32, #tpu.memory_space<vmem>>, %arg5: memref<128x128xf32, #tpu.memory_space<vmem>>, %arg6: memref<1x128xf32, #tpu.memory_space<vmem>>, %arg7: memref<128x128xf32, #tpu.memory_space<vmem>>, %arg8: memref<1x128xf32, #tpu.memory_space<vmem>>, %arg9: memref<8x128xf32, #tpu.memory_space<vmem>>, %arg10: memref<8x128xf32, #tpu.memory_space<vmem>>, %arg11: memref<64x128xf32, #tpu.memory_space<vmem>>, %arg12: memref<64x128xf32, #tpu.memory_space<vmem>>) attributes {dimension_semantics = [#tpu.dimension_semantics<parallel>, #tpu.dimension_semantics<arbitrary>], iteration_bounds = array<i64: 1, 1>, scalar_prefetch = 0 : i64, scratch_operands = 3 : i64, tpu.core_type = #tpu.core_type<tc>, window_params = [{transform_indices = @transform_0, window_bounds = array<i64: 8, 8, 128>}, {pipeline_mode = #tpu.pipeline_mode<synchronous>, transform_indices = @transform_1, window_bounds = array<i64: 128, 128>}, {pipeline_mode = #tpu.pipeline_mode<synchronous>, transform_indices = @transform_2, window_bounds = array<i64: 128, 128>}, {pipeline_mode = #tpu.pipeline_mode<synchronous>, transform_indices = @transform_3, window_bounds = array<i64: 128, 128>}, {pipeline_mode = #tpu.pipeline_mode<synchronous>, transform_indices = @transform_4, window_bounds = array<i64: 1, 128>}, {transform_indices = @transform_5, window_bounds = array<i64: 128, 128>}, {transform_indices = @transform_6, window_bounds = array<i64: 1, 128>}, {transform_indices = @transform_7, window_bounds = array<i64: 8, 128>}]} {
    %c0_i32 = arith.constant 0 : i32
    %0 = arith.cmpi eq, %arg1, %c0_i32 : i32
    %1 = arith.extui %0 : i1 to i32
    %c0_i32_0 = arith.constant 0 : i32
    %2 = arith.cmpi ne, %1, %c0_i32_0 : i32
    scf.if %2 {
      %cst_8 = arith.constant 0.000000e+00 : f32
      %10 = vector.broadcast %cst_8 : f32 to vector<8x96xf32>
      %cst_9 = arith.constant 0.000000e+00 : f32
      %11 = vector.broadcast %cst_9 : f32 to vector<8x128xf32>
      %cst_10 = arith.constant 0.000000e+00 : f32
      %12 = vector.broadcast %cst_10 : f32 to vector<8x32xf32>
      %c0_11 = arith.constant 0 : index
      %c0_12 = arith.constant 0 : index
      %c0_13 = arith.constant 0 : index
      %13 = vector.load %arg2[%c0_11, %c0_12, %c0_13] : memref<8x8x128xf32, #tpu.memory_space<vmem>>, vector<1x8x128xf32>
      %14 = vector.shape_cast %13 : vector<1x8x128xf32> to vector<8x128xf32>
      %c0_14 = arith.constant 0 : index
      %c0_15 = arith.constant 0 : index
      %15 = vector.load %arg3[%c0_14, %c0_15] : memref<128x128xf32, #tpu.memory_space<vmem>>, vector<128x128xf32>
      %cst_16 = arith.constant dense<0.000000e+00> : vector<8x128xf32>
      %16 = tpu.matmul %11, %15, %cst_16 {dimension_numbers = #tpu.dot_dimension_numbers<[1], [0], [0], [1], [0, 0, 1, 1], [], []>} : vector<8x128xf32>, vector<128x128xf32>, vector<8x128xf32> -> vector<8x128xf32>
      %17 = arith.addf %14, %16 : vector<8x128xf32>
      %18 = vector.extract_strided_slice %17 {offsets = [0, 0], sizes = [8, 32], strides = [1, 1]} : vector<8x128xf32> to vector<8x32xf32>
      %19 = arith.negf %18 : vector<8x32xf32>
      %20 = math.exp %19 : vector<8x32xf32>
      %cst_17 = arith.constant 1.000000e+00 : f32
      %21 = vector.broadcast %cst_17 : f32 to vector<8x32xf32>
      %22 = arith.addf %21, %20 : vector<8x32xf32>
      %23 = arith.divf %21, %22 : vector<8x32xf32>
      %24 = vector.extract_strided_slice %17 {offsets = [0, 32], sizes = [8, 32], strides = [1, 1]} : vector<8x128xf32> to vector<8x32xf32>
      %25 = arith.negf %24 : vector<8x32xf32>
      %26 = math.exp %25 : vector<8x32xf32>
      %cst_18 = arith.constant 1.000000e+00 : f32
      %27 = vector.broadcast %cst_18 : f32 to vector<8x32xf32>
      %28 = arith.addf %27, %26 : vector<8x32xf32>
      %29 = arith.divf %27, %28 : vector<8x32xf32>
      %30 = vector.extract_strided_slice %17 {offsets = [0, 64], sizes = [8, 32], strides = [1, 1]} : vector<8x128xf32> to vector<8x32xf32>
      %31 = math.tanh %30 : vector<8x32xf32>
      %32 = vector.extract_strided_slice %17 {offsets = [0, 96], sizes = [8, 32], strides = [1, 1]} : vector<8x128xf32> to vector<8x32xf32>
      %33 = arith.negf %32 : vector<8x32xf32>
      %34 = math.exp %33 : vector<8x32xf32>
      %cst_19 = arith.constant 1.000000e+00 : f32
      %35 = vector.broadcast %cst_19 : f32 to vector<8x32xf32>
      %36 = arith.addf %35, %34 : vector<8x32xf32>
      %37 = arith.divf %35, %36 : vector<8x32xf32>
      %38 = arith.mulf %29, %12 : vector<8x32xf32>
      %39 = arith.mulf %23, %31 : vector<8x32xf32>
      %40 = arith.addf %38, %39 : vector<8x32xf32>
      %41 = math.tanh %40 : vector<8x32xf32>
      %42 = arith.mulf %37, %41 : vector<8x32xf32>
      %43 = tpu.concatenate %42, %10 in 1 : vector<8x32xf32>, vector<8x96xf32> -> vector<8x128xf32>
      %c0_20 = arith.constant 0 : index
      %c0_21 = arith.constant 0 : index
      %44 = vector.load %arg12[%c0_20, %c0_21] : memref<64x128xf32, #tpu.memory_space<vmem>>, vector<8x128xf32>
      tpu.vector_store %arg12[%c0_20, %c0_21], %43 {strides = array<i32>} : memref<64x128xf32, #tpu.memory_space<vmem>>, vector<8x128xf32>,
      %c1 = arith.constant 1 : index
      %c0_22 = arith.constant 0 : index
      %c0_23 = arith.constant 0 : index
      %45 = vector.load %arg2[%c1, %c0_22, %c0_23] : memref<8x8x128xf32, #tpu.memory_space<vmem>>, vector<1x8x128xf32>
      %46 = vector.shape_cast %45 : vector<1x8x128xf32> to vector<8x128xf32>
      %c0_24 = arith.constant 0 : index
      %c0_25 = arith.constant 0 : index
      %47 = vector.load %arg3[%c0_24, %c0_25] : memref<128x128xf32, #tpu.memory_space<vmem>>, vector<128x128xf32>
      %cst_26 = arith.constant dense<0.000000e+00> : vector<8x128xf32>
      %48 = tpu.matmul %43, %47, %cst_26 {dimension_numbers = #tpu.dot_dimension_numbers<[1], [0], [0], [1], [0, 0, 1, 1], [], []>} : vector<8x128xf32>, vector<128x128xf32>, vector<8x128xf32> -> vector<8x128xf32>
      %49 = arith.addf %46, %48 : vector<8x128xf32>
      %50 = vector.extract_strided_slice %49 {offsets = [0, 0], sizes = [8, 32], strides = [1, 1]} : vector<8x128xf32> to vector<8x32xf32>
      %51 = arith.negf %50 : vector<8x32xf32>
      %52 = math.exp %51 : vector<8x32xf32>
      %cst_27 = arith.constant 1.000000e+00 : f32
      %53 = vector.broadcast %cst_27 : f32 to vector<8x32xf32>
      %54 = arith.addf %53, %52 : vector<8x32xf32>
      %55 = arith.divf %53, %54 : vector<8x32xf32>
      %56 = vector.extract_strided_slice %49 {offsets = [0, 32], sizes = [8, 32], strides = [1, 1]} : vector<8x128xf32> to vector<8x32xf32>
      %57 = arith.negf %56 : vector<8x32xf32>
      %58 = math.exp %57 : vector<8x32xf32>
      %cst_28 = arith.constant 1.000000e+00 : f32
      %59 = vector.broadcast %cst_28 : f32 to vector<8x32xf32>
      %60 = arith.addf %59, %58 : vector<8x32xf32>
      %61 = arith.divf %59, %60 : vector<8x32xf32>
      %62 = vector.extract_strided_slice %49 {offsets = [0, 64], sizes = [8, 32], strides = [1, 1]} : vector<8x128xf32> to vector<8x32xf32>
      %63 = math.tanh %62 : vector<8x32xf32>
      %64 = vector.extract_strided_slice %49 {offsets = [0, 96], sizes = [8, 32], strides = [1, 1]} : vector<8x128xf32> to vector<8x32xf32>
      %65 = arith.negf %64 : vector<8x32xf32>
      %66 = math.exp %65 : vector<8x32xf32>
      %cst_29 = arith.constant 1.000000e+00 : f32
      %67 = vector.broadcast %cst_29 : f32 to vector<8x32xf32>
      %68 = arith.addf %67, %66 : vector<8x32xf32>
      %69 = arith.divf %67, %68 : vector<8x32xf32>
      %70 = arith.mulf %61, %40 : vector<8x32xf32>
      %71 = arith.mulf %55, %63 : vector<8x32xf32>
      %72 = arith.addf %70, %71 : vector<8x32xf32>
      %73 = math.tanh %72 : vector<8x32xf32>
      %74 = arith.mulf %69, %73 : vector<8x32xf32>
      %75 = tpu.concatenate %74, %10 in 1 : vector<8x32xf32>, vector<8x96xf32> -> vector<8x128xf32>
      %c8 = arith.constant 8 : index
      %c0_30 = arith.constant 0 : index
      %76 = vector.load %arg12[%c8, %c0_30] : memref<64x128xf32, #tpu.memory_space<vmem>>, vector<8x128xf32>
      tpu.vector_store %arg12[%c8, %c0_30], %75 {strides = array<i32>} : memref<64x128xf32, #tpu.memory_space<vmem>>, vector<8x128xf32>,
      %c2 = arith.constant 2 : index
      %c0_31 = arith.constant 0 : index
      %c0_32 = arith.constant 0 : index
      %77 = vector.load %arg2[%c2, %c0_31, %c0_32] : memref<8x8x128xf32, #tpu.memory_space<vmem>>, vector<1x8x128xf32>
      %78 = vector.shape_cast %77 : vector<1x8x128xf32> to vector<8x128xf32>
      %c0_33 = arith.constant 0 : index
      %c0_34 = arith.constant 0 : index
      %79 = vector.load %arg3[%c0_33, %c0_34] : memref<128x128xf32, #tpu.memory_space<vmem>>, vector<128x128xf32>
      %cst_35 = arith.constant dense<0.000000e+00> : vector<8x128xf32>
      %80 = tpu.matmul %75, %79, %cst_35 {dimension_numbers = #tpu.dot_dimension_numbers<[1], [0], [0], [1], [0, 0, 1, 1], [], []>} : vector<8x128xf32>, vector<128x128xf32>, vector<8x128xf32> -> vector<8x128xf32>
      %81 = arith.addf %78, %80 : vector<8x128xf32>
      %82 = vector.extract_strided_slice %81 {offsets = [0, 0], sizes = [8, 32], strides = [1, 1]} : vector<8x128xf32> to vector<8x32xf32>
      %83 = arith.negf %82 : vector<8x32xf32>
      %84 = math.exp %83 : vector<8x32xf32>
      %cst_36 = arith.constant 1.000000e+00 : f32
      %85 = vector.broadcast %cst_36 : f32 to vector<8x32xf32>
      %86 = arith.addf %85, %84 : vector<8x32xf32>
      %87 = arith.divf %85, %86 : vector<8x32xf32>
      %88 = vector.extract_strided_slice %81 {offsets = [0, 32], sizes = [8, 32], strides = [1, 1]} : vector<8x128xf32> to vector<8x32xf32>
      %89 = arith.negf %88 : vector<8x32xf32>
      %90 = math.exp %89 : vector<8x32xf32>
      %cst_37 = arith.constant 1.000000e+00 : f32
      %91 = vector.broadcast %cst_37 : f32 to vector<8x32xf32>
      %92 = arith.addf %91, %90 : vector<8x32xf32>
      %93 = arith.divf %91, %92 : vector<8x32xf32>
      %94 = vector.extract_strided_slice %81 {offsets = [0, 64], sizes = [8, 32], strides = [1, 1]} : vector<8x128xf32> to vector<8x32xf32>
      %95 = math.tanh %94 : vector<8x32xf32>
      %96 = vector.extract_strided_slice %81 {offsets = [0, 96], sizes = [8, 32], strides = [1, 1]} : vector<8x128xf32> to vector<8x32xf32>
      %97 = arith.negf %96 : vector<8x32xf32>
      %98 = math.exp %97 : vector<8x32xf32>
      %cst_38 = arith.constant 1.000000e+00 : f32
      %99 = vector.broadcast %cst_38 : f32 to vector<8x32xf32>
      %100 = arith.addf %99, %98 : vector<8x32xf32>
      %101 = arith.divf %99, %100 : vector<8x32xf32>
      %102 = arith.mulf %93, %72 : vector<8x32xf32>
      %103 = arith.mulf %87, %95 : vector<8x32xf32>
      %104 = arith.addf %102, %103 : vector<8x32xf32>
      %105 = math.tanh %104 : vector<8x32xf32>
      %106 = arith.mulf %101, %105 : vector<8x32xf32>
      %107 = tpu.concatenate %106, %10 in 1 : vector<8x32xf32>, vector<8x96xf32> -> vector<8x128xf32>
      %c16 = arith.constant 16 : index
      %c0_39 = arith.constant 0 : index
      %108 = vector.load %arg12[%c16, %c0_39] : memref<64x128xf32, #tpu.memory_space<vmem>>, vector<8x128xf32>
      tpu.vector_store %arg12[%c16, %c0_39], %107 {strides = array<i32>} : memref<64x128xf32, #tpu.memory_space<vmem>>, vector<8x128xf32>,
      %c3 = arith.constant 3 : index
      %c0_40 = arith.constant 0 : index
      %c0_41 = arith.constant 0 : index
      %109 = vector.load %arg2[%c3, %c0_40, %c0_41] : memref<8x8x128xf32, #tpu.memory_space<vmem>>, vector<1x8x128xf32>
      %110 = vector.shape_cast %109 : vector<1x8x128xf32> to vector<8x128xf32>
      %c0_42 = arith.constant 0 : index
      %c0_43 = arith.constant 0 : index
      %111 = vector.load %arg3[%c0_42, %c0_43] : memref<128x128xf32, #tpu.memory_space<vmem>>, vector<128x128xf32>
      %cst_44 = arith.constant dense<0.000000e+00> : vector<8x128xf32>
      %112 = tpu.matmul %107, %111, %cst_44 {dimension_numbers = #tpu.dot_dimension_numbers<[1], [0], [0], [1], [0, 0, 1, 1], [], []>} : vector<8x128xf32>, vector<128x128xf32>, vector<8x128xf32> -> vector<8x128xf32>
      %113 = arith.addf %110, %112 : vector<8x128xf32>
      %114 = vector.extract_strided_slice %113 {offsets = [0, 0], sizes = [8, 32], strides = [1, 1]} : vector<8x128xf32> to vector<8x32xf32>
      %115 = arith.negf %114 : vector<8x32xf32>
      %116 = math.exp %115 : vector<8x32xf32>
      %cst_45 = arith.constant 1.000000e+00 : f32
      %117 = vector.broadcast %cst_45 : f32 to vector<8x32xf32>
      %118 = arith.addf %117, %116 : vector<8x32xf32>
      %119 = arith.divf %117, %118 : vector<8x32xf32>
      %120 = vector.extract_strided_slice %113 {offsets = [0, 32], sizes = [8, 32], strides = [1, 1]} : vector<8x128xf32> to vector<8x32xf32>
      %121 = arith.negf %120 : vector<8x32xf32>
      %122 = math.exp %121 : vector<8x32xf32>
      %cst_46 = arith.constant 1.000000e+00 : f32
      %123 = vector.broadcast %cst_46 : f32 to vector<8x32xf32>
      %124 = arith.addf %123, %122 : vector<8x32xf32>
      %125 = arith.divf %123, %124 : vector<8x32xf32>
      %126 = vector.extract_strided_slice %113 {offsets = [0, 64], sizes = [8, 32], strides = [1, 1]} : vector<8x128xf32> to vector<8x32xf32>
      %127 = math.tanh %126 : vector<8x32xf32>
      %128 = vector.extract_strided_slice %113 {offsets = [0, 96], sizes = [8, 32], strides = [1, 1]} : vector<8x128xf32> to vector<8x32xf32>
      %129 = arith.negf %128 : vector<8x32xf32>
      %130 = math.exp %129 : vector<8x32xf32>
      %cst_47 = arith.constant 1.000000e+00 : f32
      %131 = vector.broadcast %cst_47 : f32 to vector<8x32xf32>
      %132 = arith.addf %131, %130 : vector<8x32xf32>
      %133 = arith.divf %131, %132 : vector<8x32xf32>
      %134 = arith.mulf %125, %104 : vector<8x32xf32>
      %135 = arith.mulf %119, %127 : vector<8x32xf32>
      %136 = arith.addf %134, %135 : vector<8x32xf32>
      %137 = math.tanh %136 : vector<8x32xf32>
      %138 = arith.mulf %133, %137 : vector<8x32xf32>
      %139 = tpu.concatenate %138, %10 in 1 : vector<8x32xf32>, vector<8x96xf32> -> vector<8x128xf32>
      %c24 = arith.constant 24 : index
      %c0_48 = arith.constant 0 : index
      %140 = vector.load %arg12[%c24, %c0_48] : memref<64x128xf32, #tpu.memory_space<vmem>>, vector<8x128xf32>
      tpu.vector_store %arg12[%c24, %c0_48], %139 {strides = array<i32>} : memref<64x128xf32, #tpu.memory_space<vmem>>, vector<8x128xf32>,
      %c4 = arith.constant 4 : index
      %c0_49 = arith.constant 0 : index
      %c0_50 = arith.constant 0 : index
      %141 = vector.load %arg2[%c4, %c0_49, %c0_50] : memref<8x8x128xf32, #tpu.memory_space<vmem>>, vector<1x8x128xf32>
      %142 = vector.shape_cast %141 : vector<1x8x128xf32> to vector<8x128xf32>
      %c0_51 = arith.constant 0 : index
      %c0_52 = arith.constant 0 : index
      %143 = vector.load %arg3[%c0_51, %c0_52] : memref<128x128xf32, #tpu.memory_space<vmem>>, vector<128x128xf32>
      %cst_53 = arith.constant dense<0.000000e+00> : vector<8x128xf32>
      %144 = tpu.matmul %139, %143, %cst_53 {dimension_numbers = #tpu.dot_dimension_numbers<[1], [0], [0], [1], [0, 0, 1, 1], [], []>} : vector<8x128xf32>, vector<128x128xf32>, vector<8x128xf32> -> vector<8x128xf32>
      %145 = arith.addf %142, %144 : vector<8x128xf32>
      %146 = vector.extract_strided_slice %145 {offsets = [0, 0], sizes = [8, 32], strides = [1, 1]} : vector<8x128xf32> to vector<8x32xf32>
      %147 = arith.negf %146 : vector<8x32xf32>
      %148 = math.exp %147 : vector<8x32xf32>
      %cst_54 = arith.constant 1.000000e+00 : f32
      %149 = vector.broadcast %cst_54 : f32 to vector<8x32xf32>
      %150 = arith.addf %149, %148 : vector<8x32xf32>
      %151 = arith.divf %149, %150 : vector<8x32xf32>
      %152 = vector.extract_strided_slice %145 {offsets = [0, 32], sizes = [8, 32], strides = [1, 1]} : vector<8x128xf32> to vector<8x32xf32>
      %153 = arith.negf %152 : vector<8x32xf32>
      %154 = math.exp %153 : vector<8x32xf32>
      %cst_55 = arith.constant 1.000000e+00 : f32
      %155 = vector.broadcast %cst_55 : f32 to vector<8x32xf32>
      %156 = arith.addf %155, %154 : vector<8x32xf32>
      %157 = arith.divf %155, %156 : vector<8x32xf32>
      %158 = vector.extract_strided_slice %145 {offsets = [0, 64], sizes = [8, 32], strides = [1, 1]} : vector<8x128xf32> to vector<8x32xf32>
      %159 = math.tanh %158 : vector<8x32xf32>
      %160 = vector.extract_strided_slice %145 {offsets = [0, 96], sizes = [8, 32], strides = [1, 1]} : vector<8x128xf32> to vector<8x32xf32>
      %161 = arith.negf %160 : vector<8x32xf32>
      %162 = math.exp %161 : vector<8x32xf32>
      %cst_56 = arith.constant 1.000000e+00 : f32
      %163 = vector.broadcast %cst_56 : f32 to vector<8x32xf32>
      %164 = arith.addf %163, %162 : vector<8x32xf32>
      %165 = arith.divf %163, %164 : vector<8x32xf32>
      %166 = arith.mulf %157, %136 : vector<8x32xf32>
      %167 = arith.mulf %151, %159 : vector<8x32xf32>
      %168 = arith.addf %166, %167 : vector<8x32xf32>
      %169 = math.tanh %168 : vector<8x32xf32>
      %170 = arith.mulf %165, %169 : vector<8x32xf32>
      %171 = tpu.concatenate %170, %10 in 1 : vector<8x32xf32>, vector<8x96xf32> -> vector<8x128xf32>
      %c32 = arith.constant 32 : index
      %c0_57 = arith.constant 0 : index
      %172 = vector.load %arg12[%c32, %c0_57] : memref<64x128xf32, #tpu.memory_space<vmem>>, vector<8x128xf32>
      tpu.vector_store %arg12[%c32, %c0_57], %171 {strides = array<i32>} : memref<64x128xf32, #tpu.memory_space<vmem>>, vector<8x128xf32>,
      %c5 = arith.constant 5 : index
      %c0_58 = arith.constant 0 : index
      %c0_59 = arith.constant 0 : index
      %173 = vector.load %arg2[%c5, %c0_58, %c0_59] : memref<8x8x128xf32, #tpu.memory_space<vmem>>, vector<1x8x128xf32>
      %174 = vector.shape_cast %173 : vector<1x8x128xf32> to vector<8x128xf32>
      %c0_60 = arith.constant 0 : index
      %c0_61 = arith.constant 0 : index
      %175 = vector.load %arg3[%c0_60, %c0_61] : memref<128x128xf32, #tpu.memory_space<vmem>>, vector<128x128xf32>
      %cst_62 = arith.constant dense<0.000000e+00> : vector<8x128xf32>
      %176 = tpu.matmul %171, %175, %cst_62 {dimension_numbers = #tpu.dot_dimension_numbers<[1], [0], [0], [1], [0, 0, 1, 1], [], []>} : vector<8x128xf32>, vector<128x128xf32>, vector<8x128xf32> -> vector<8x128xf32>
      %177 = arith.addf %174, %176 : vector<8x128xf32>
      %178 = vector.extract_strided_slice %177 {offsets = [0, 0], sizes = [8, 32], strides = [1, 1]} : vector<8x128xf32> to vector<8x32xf32>
      %179 = arith.negf %178 : vector<8x32xf32>
      %180 = math.exp %179 : vector<8x32xf32>
      %cst_63 = arith.constant 1.000000e+00 : f32
      %181 = vector.broadcast %cst_63 : f32 to vector<8x32xf32>
      %182 = arith.addf %181, %180 : vector<8x32xf32>
      %183 = arith.divf %181, %182 : vector<8x32xf32>
      %184 = vector.extract_strided_slice %177 {offsets = [0, 32], sizes = [8, 32], strides = [1, 1]} : vector<8x128xf32> to vector<8x32xf32>
      %185 = arith.negf %184 : vector<8x32xf32>
      %186 = math.exp %185 : vector<8x32xf32>
      %cst_64 = arith.constant 1.000000e+00 : f32
      %187 = vector.broadcast %cst_64 : f32 to vector<8x32xf32>
      %188 = arith.addf %187, %186 : vector<8x32xf32>
      %189 = arith.divf %187, %188 : vector<8x32xf32>
      %190 = vector.extract_strided_slice %177 {offsets = [0, 64], sizes = [8, 32], strides = [1, 1]} : vector<8x128xf32> to vector<8x32xf32>
      %191 = math.tanh %190 : vector<8x32xf32>
      %192 = vector.extract_strided_slice %177 {offsets = [0, 96], sizes = [8, 32], strides = [1, 1]} : vector<8x128xf32> to vector<8x32xf32>
      %193 = arith.negf %192 : vector<8x32xf32>
      %194 = math.exp %193 : vector<8x32xf32>
      %cst_65 = arith.constant 1.000000e+00 : f32
      %195 = vector.broadcast %cst_65 : f32 to vector<8x32xf32>
      %196 = arith.addf %195, %194 : vector<8x32xf32>
      %197 = arith.divf %195, %196 : vector<8x32xf32>
      %198 = arith.mulf %189, %168 : vector<8x32xf32>
      %199 = arith.mulf %183, %191 : vector<8x32xf32>
      %200 = arith.addf %198, %199 : vector<8x32xf32>
      %201 = math.tanh %200 : vector<8x32xf32>
      %202 = arith.mulf %197, %201 : vector<8x32xf32>
      %203 = tpu.concatenate %202, %10 in 1 : vector<8x32xf32>, vector<8x96xf32> -> vector<8x128xf32>
      %c40 = arith.constant 40 : index
      %c0_66 = arith.constant 0 : index
      %204 = vector.load %arg12[%c40, %c0_66] : memref<64x128xf32, #tpu.memory_space<vmem>>, vector<8x128xf32>
      tpu.vector_store %arg12[%c40, %c0_66], %203 {strides = array<i32>} : memref<64x128xf32, #tpu.memory_space<vmem>>, vector<8x128xf32>,
      %c6 = arith.constant 6 : index
      %c0_67 = arith.constant 0 : index
      %c0_68 = arith.constant 0 : index
      %205 = vector.load %arg2[%c6, %c0_67, %c0_68] : memref<8x8x128xf32, #tpu.memory_space<vmem>>, vector<1x8x128xf32>
      %206 = vector.shape_cast %205 : vector<1x8x128xf32> to vector<8x128xf32>
      %c0_69 = arith.constant 0 : index
      %c0_70 = arith.constant 0 : index
      %207 = vector.load %arg3[%c0_69, %c0_70] : memref<128x128xf32, #tpu.memory_space<vmem>>, vector<128x128xf32>
      %cst_71 = arith.constant dense<0.000000e+00> : vector<8x128xf32>
      %208 = tpu.matmul %203, %207, %cst_71 {dimension_numbers = #tpu.dot_dimension_numbers<[1], [0], [0], [1], [0, 0, 1, 1], [], []>} : vector<8x128xf32>, vector<128x128xf32>, vector<8x128xf32> -> vector<8x128xf32>
      %209 = arith.addf %206, %208 : vector<8x128xf32>
      %210 = vector.extract_strided_slice %209 {offsets = [0, 0], sizes = [8, 32], strides = [1, 1]} : vector<8x128xf32> to vector<8x32xf32>
      %211 = arith.negf %210 : vector<8x32xf32>
      %212 = math.exp %211 : vector<8x32xf32>
      %cst_72 = arith.constant 1.000000e+00 : f32
      %213 = vector.broadcast %cst_72 : f32 to vector<8x32xf32>
      %214 = arith.addf %213, %212 : vector<8x32xf32>
      %215 = arith.divf %213, %214 : vector<8x32xf32>
      %216 = vector.extract_strided_slice %209 {offsets = [0, 32], sizes = [8, 32], strides = [1, 1]} : vector<8x128xf32> to vector<8x32xf32>
      %217 = arith.negf %216 : vector<8x32xf32>
      %218 = math.exp %217 : vector<8x32xf32>
      %cst_73 = arith.constant 1.000000e+00 : f32
      %219 = vector.broadcast %cst_73 : f32 to vector<8x32xf32>
      %220 = arith.addf %219, %218 : vector<8x32xf32>
      %221 = arith.divf %219, %220 : vector<8x32xf32>
      %222 = vector.extract_strided_slice %209 {offsets = [0, 64], sizes = [8, 32], strides = [1, 1]} : vector<8x128xf32> to vector<8x32xf32>
      %223 = math.tanh %222 : vector<8x32xf32>
      %224 = vector.extract_strided_slice %209 {offsets = [0, 96], sizes = [8, 32], strides = [1, 1]} : vector<8x128xf32> to vector<8x32xf32>
      %225 = arith.negf %224 : vector<8x32xf32>
      %226 = math.exp %225 : vector<8x32xf32>
      %cst_74 = arith.constant 1.000000e+00 : f32
      %227 = vector.broadcast %cst_74 : f32 to vector<8x32xf32>
      %228 = arith.addf %227, %226 : vector<8x32xf32>
      %229 = arith.divf %227, %228 : vector<8x32xf32>
      %230 = arith.mulf %221, %200 : vector<8x32xf32>
      %231 = arith.mulf %215, %223 : vector<8x32xf32>
      %232 = arith.addf %230, %231 : vector<8x32xf32>
      %233 = math.tanh %232 : vector<8x32xf32>
      %234 = arith.mulf %229, %233 : vector<8x32xf32>
      %235 = tpu.concatenate %234, %10 in 1 : vector<8x32xf32>, vector<8x96xf32> -> vector<8x128xf32>
      %c48 = arith.constant 48 : index
      %c0_75 = arith.constant 0 : index
      %236 = vector.load %arg12[%c48, %c0_75] : memref<64x128xf32, #tpu.memory_space<vmem>>, vector<8x128xf32>
      tpu.vector_store %arg12[%c48, %c0_75], %235 {strides = array<i32>} : memref<64x128xf32, #tpu.memory_space<vmem>>, vector<8x128xf32>,
      %c7 = arith.constant 7 : index
      %c0_76 = arith.constant 0 : index
      %c0_77 = arith.constant 0 : index
      %237 = vector.load %arg2[%c7, %c0_76, %c0_77] : memref<8x8x128xf32, #tpu.memory_space<vmem>>, vector<1x8x128xf32>
      %238 = vector.shape_cast %237 : vector<1x8x128xf32> to vector<8x128xf32>
      %c0_78 = arith.constant 0 : index
      %c0_79 = arith.constant 0 : index
      %239 = vector.load %arg3[%c0_78, %c0_79] : memref<128x128xf32, #tpu.memory_space<vmem>>, vector<128x128xf32>
      %cst_80 = arith.constant dense<0.000000e+00> : vector<8x128xf32>
      %240 = tpu.matmul %235, %239, %cst_80 {dimension_numbers = #tpu.dot_dimension_numbers<[1], [0], [0], [1], [0, 0, 1, 1], [], []>} : vector<8x128xf32>, vector<128x128xf32>, vector<8x128xf32> -> vector<8x128xf32>
      %241 = arith.addf %238, %240 : vector<8x128xf32>
      %242 = vector.extract_strided_slice %241 {offsets = [0, 0], sizes = [8, 32], strides = [1, 1]} : vector<8x128xf32> to vector<8x32xf32>
      %243 = arith.negf %242 : vector<8x32xf32>
      %244 = math.exp %243 : vector<8x32xf32>
      %cst_81 = arith.constant 1.000000e+00 : f32
      %245 = vector.broadcast %cst_81 : f32 to vector<8x32xf32>
      %246 = arith.addf %245, %244 : vector<8x32xf32>
      %247 = arith.divf %245, %246 : vector<8x32xf32>
      %248 = vector.extract_strided_slice %241 {offsets = [0, 32], sizes = [8, 32], strides = [1, 1]} : vector<8x128xf32> to vector<8x32xf32>
      %249 = arith.negf %248 : vector<8x32xf32>
      %250 = math.exp %249 : vector<8x32xf32>
      %cst_82 = arith.constant 1.000000e+00 : f32
      %251 = vector.broadcast %cst_82 : f32 to vector<8x32xf32>
      %252 = arith.addf %251, %250 : vector<8x32xf32>
      %253 = arith.divf %251, %252 : vector<8x32xf32>
      %254 = vector.extract_strided_slice %241 {offsets = [0, 64], sizes = [8, 32], strides = [1, 1]} : vector<8x128xf32> to vector<8x32xf32>
      %255 = math.tanh %254 : vector<8x32xf32>
      %256 = vector.extract_strided_slice %241 {offsets = [0, 96], sizes = [8, 32], strides = [1, 1]} : vector<8x128xf32> to vector<8x32xf32>
      %257 = arith.negf %256 : vector<8x32xf32>
      %258 = math.exp %257 : vector<8x32xf32>
      %cst_83 = arith.constant 1.000000e+00 : f32
      %259 = vector.broadcast %cst_83 : f32 to vector<8x32xf32>
      %260 = arith.addf %259, %258 : vector<8x32xf32>
      %261 = arith.divf %259, %260 : vector<8x32xf32>
      %262 = arith.mulf %253, %232 : vector<8x32xf32>
      %263 = arith.mulf %247, %255 : vector<8x32xf32>
      %264 = arith.addf %262, %263 : vector<8x32xf32>
      %265 = math.tanh %264 : vector<8x32xf32>
      %266 = arith.mulf %261, %265 : vector<8x32xf32>
      %267 = tpu.concatenate %266, %10 in 1 : vector<8x32xf32>, vector<8x96xf32> -> vector<8x128xf32>
      %c56 = arith.constant 56 : index
      %c0_84 = arith.constant 0 : index
      %268 = vector.load %arg12[%c56, %c0_84] : memref<64x128xf32, #tpu.memory_space<vmem>>, vector<8x128xf32>
      tpu.vector_store %arg12[%c56, %c0_84], %267 {strides = array<i32>} : memref<64x128xf32, #tpu.memory_space<vmem>>, vector<8x128xf32>,
      %c0_85 = arith.constant 0 : index
      %c0_86 = arith.constant 0 : index
      %269 = vector.load %arg12[%c0_85, %c0_86] : memref<64x128xf32, #tpu.memory_space<vmem>>, vector<64x128xf32>
      %c0_87 = arith.constant 0 : index
      %c0_88 = arith.constant 0 : index
      %270 = vector.load %arg4[%c0_87, %c0_88] : memref<128x128xf32, #tpu.memory_space<vmem>>, vector<128x128xf32>
      %cst_89 = arith.constant dense<0.000000e+00> : vector<64x128xf32>
      %271 = tpu.matmul %269, %270, %cst_89 {dimension_numbers = #tpu.dot_dimension_numbers<[1], [0], [0], [1], [0, 0, 1, 1], [], []>} : vector<64x128xf32>, vector<128x128xf32>, vector<64x128xf32> -> vector<64x128xf32>
      %c0_90 = arith.constant 0 : index
      %c0_91 = arith.constant 0 : index
      %272 = vector.load %arg6[%c0_90, %c0_91] : memref<1x128xf32, #tpu.memory_space<vmem>>, vector<1x128xf32>
      %273 = vector.broadcast %272 : vector<1x128xf32> to vector<64x128xf32>
      %274 = arith.addf %271, %273 : vector<64x128xf32>
      %c0_92 = arith.constant 0 : index
      %c0_93 = arith.constant 0 : index
      %275 = vector.load %arg11[%c0_92, %c0_93] : memref<64x128xf32, #tpu.memory_space<vmem>>, vector<64x128xf32>
      tpu.vector_store %arg11[%c0_92, %c0_93], %274 {strides = array<i32>} : memref<64x128xf32, #tpu.memory_space<vmem>>, vector<64x128xf32>,
      %cst_94 = arith.constant 0.000000e+00 : f32
      %276 = vector.broadcast %cst_94 : f32 to vector<8x128xf32>
      %cst_95 = arith.constant 0.000000e+00 : f32
      %277 = vector.broadcast %cst_95 : f32 to vector<8x32xf32>
      %c0_96 = arith.constant 0 : index
      %c0_97 = arith.constant 0 : index
      %278 = vector.load %arg11[%c0_96, %c0_97] : memref<64x128xf32, #tpu.memory_space<vmem>>, vector<8x128xf32>
      %c0_98 = arith.constant 0 : index
      %c0_99 = arith.constant 0 : index
      %279 = vector.load %arg5[%c0_98, %c0_99] : memref<128x128xf32, #tpu.memory_space<vmem>>, vector<128x128xf32>
      %cst_100 = arith.constant dense<0.000000e+00> : vector<8x128xf32>
      %280 = tpu.matmul %276, %279, %cst_100 {dimension_numbers = #tpu.dot_dimension_numbers<[1], [0], [0], [1], [0, 0, 1, 1], [], []>} : vector<8x128xf32>, vector<128x128xf32>, vector<8x128xf32> -> vector<8x128xf32>
      %281 = arith.addf %278, %280 : vector<8x128xf32>
      %282 = vector.extract_strided_slice %281 {offsets = [0, 0], sizes = [8, 32], strides = [1, 1]} : vector<8x128xf32> to vector<8x32xf32>
      %283 = arith.negf %282 : vector<8x32xf32>
      %284 = math.exp %283 : vector<8x32xf32>
      %cst_101 = arith.constant 1.000000e+00 : f32
      %285 = vector.broadcast %cst_101 : f32 to vector<8x32xf32>
      %286 = arith.addf %285, %284 : vector<8x32xf32>
      %287 = arith.divf %285, %286 : vector<8x32xf32>
      %288 = vector.extract_strided_slice %281 {offsets = [0, 32], sizes = [8, 32], strides = [1, 1]} : vector<8x128xf32> to vector<8x32xf32>
      %289 = arith.negf %288 : vector<8x32xf32>
      %290 = math.exp %289 : vector<8x32xf32>
      %cst_102 = arith.constant 1.000000e+00 : f32
      %291 = vector.broadcast %cst_102 : f32 to vector<8x32xf32>
      %292 = arith.addf %291, %290 : vector<8x32xf32>
      %293 = arith.divf %291, %292 : vector<8x32xf32>
      %294 = vector.extract_strided_slice %281 {offsets = [0, 64], sizes = [8, 32], strides = [1, 1]} : vector<8x128xf32> to vector<8x32xf32>
      %295 = math.tanh %294 : vector<8x32xf32>
      %296 = vector.extract_strided_slice %281 {offsets = [0, 96], sizes = [8, 32], strides = [1, 1]} : vector<8x128xf32> to vector<8x32xf32>
      %297 = arith.negf %296 : vector<8x32xf32>
      %298 = math.exp %297 : vector<8x32xf32>
      %cst_103 = arith.constant 1.000000e+00 : f32
      %299 = vector.broadcast %cst_103 : f32 to vector<8x32xf32>
      %300 = arith.addf %299, %298 : vector<8x32xf32>
      %301 = arith.divf %299, %300 : vector<8x32xf32>
      %302 = arith.mulf %293, %277 : vector<8x32xf32>
      %303 = arith.mulf %287, %295 : vector<8x32xf32>
      %304 = arith.addf %302, %303 : vector<8x32xf32>
      %305 = math.tanh %304 : vector<8x32xf32>
      %306 = arith.mulf %301, %305 : vector<8x32xf32>
      %307 = tpu.concatenate %306, %10 in 1 : vector<8x32xf32>, vector<8x96xf32> -> vector<8x128xf32>
      %c8_104 = arith.constant 8 : index
      %c0_105 = arith.constant 0 : index
      %308 = vector.load %arg11[%c8_104, %c0_105] : memref<64x128xf32, #tpu.memory_space<vmem>>, vector<8x128xf32>
      %c0_106 = arith.constant 0 : index
      %c0_107 = arith.constant 0 : index
      %309 = vector.load %arg5[%c0_106, %c0_107] : memref<128x128xf32, #tpu.memory_space<vmem>>, vector<128x128xf32>
      %cst_108 = arith.constant dense<0.000000e+00> : vector<8x128xf32>
      %310 = tpu.matmul %307, %309, %cst_108 {dimension_numbers = #tpu.dot_dimension_numbers<[1], [0], [0], [1], [0, 0, 1, 1], [], []>} : vector<8x128xf32>, vector<128x128xf32>, vector<8x128xf32> -> vector<8x128xf32>
      %311 = arith.addf %308, %310 : vector<8x128xf32>
      %312 = vector.extract_strided_slice %311 {offsets = [0, 0], sizes = [8, 32], strides = [1, 1]} : vector<8x128xf32> to vector<8x32xf32>
      %313 = arith.negf %312 : vector<8x32xf32>
      %314 = math.exp %313 : vector<8x32xf32>
      %cst_109 = arith.constant 1.000000e+00 : f32
      %315 = vector.broadcast %cst_109 : f32 to vector<8x32xf32>
      %316 = arith.addf %315, %314 : vector<8x32xf32>
      %317 = arith.divf %315, %316 : vector<8x32xf32>
      %318 = vector.extract_strided_slice %311 {offsets = [0, 32], sizes = [8, 32], strides = [1, 1]} : vector<8x128xf32> to vector<8x32xf32>
      %319 = arith.negf %318 : vector<8x32xf32>
      %320 = math.exp %319 : vector<8x32xf32>
      %cst_110 = arith.constant 1.000000e+00 : f32
      %321 = vector.broadcast %cst_110 : f32 to vector<8x32xf32>
      %322 = arith.addf %321, %320 : vector<8x32xf32>
      %323 = arith.divf %321, %322 : vector<8x32xf32>
      %324 = vector.extract_strided_slice %311 {offsets = [0, 64], sizes = [8, 32], strides = [1, 1]} : vector<8x128xf32> to vector<8x32xf32>
      %325 = math.tanh %324 : vector<8x32xf32>
      %326 = vector.extract_strided_slice %311 {offsets = [0, 96], sizes = [8, 32], strides = [1, 1]} : vector<8x128xf32> to vector<8x32xf32>
      %327 = arith.negf %326 : vector<8x32xf32>
      %328 = math.exp %327 : vector<8x32xf32>
      %cst_111 = arith.constant 1.000000e+00 : f32
      %329 = vector.broadcast %cst_111 : f32 to vector<8x32xf32>
      %330 = arith.addf %329, %328 : vector<8x32xf32>
      %331 = arith.divf %329, %330 : vector<8x32xf32>
      %332 = arith.mulf %323, %304 : vector<8x32xf32>
      %333 = arith.mulf %317, %325 : vector<8x32xf32>
      %334 = arith.addf %332, %333 : vector<8x32xf32>
      %335 = math.tanh %334 : vector<8x32xf32>
      %336 = arith.mulf %331, %335 : vector<8x32xf32>
      %337 = tpu.concatenate %336, %10 in 1 : vector<8x32xf32>, vector<8x96xf32> -> vector<8x128xf32>
      %c16_112 = arith.constant 16 : index
      %c0_113 = arith.constant 0 : index
      %338 = vector.load %arg11[%c16_112, %c0_113] : memref<64x128xf32, #tpu.memory_space<vmem>>, vector<8x128xf32>
      %c0_114 = arith.constant 0 : index
      %c0_115 = arith.constant 0 : index
      %339 = vector.load %arg5[%c0_114, %c0_115] : memref<128x128xf32, #tpu.memory_space<vmem>>, vector<128x128xf32>
      %cst_116 = arith.constant dense<0.000000e+00> : vector<8x128xf32>
      %340 = tpu.matmul %337, %339, %cst_116 {dimension_numbers = #tpu.dot_dimension_numbers<[1], [0], [0], [1], [0, 0, 1, 1], [], []>} : vector<8x128xf32>, vector<128x128xf32>, vector<8x128xf32> -> vector<8x128xf32>
      %341 = arith.addf %338, %340 : vector<8x128xf32>
      %342 = vector.extract_strided_slice %341 {offsets = [0, 0], sizes = [8, 32], strides = [1, 1]} : vector<8x128xf32> to vector<8x32xf32>
      %343 = arith.negf %342 : vector<8x32xf32>
      %344 = math.exp %343 : vector<8x32xf32>
      %cst_117 = arith.constant 1.000000e+00 : f32
      %345 = vector.broadcast %cst_117 : f32 to vector<8x32xf32>
      %346 = arith.addf %345, %344 : vector<8x32xf32>
      %347 = arith.divf %345, %346 : vector<8x32xf32>
      %348 = vector.extract_strided_slice %341 {offsets = [0, 32], sizes = [8, 32], strides = [1, 1]} : vector<8x128xf32> to vector<8x32xf32>
      %349 = arith.negf %348 : vector<8x32xf32>
      %350 = math.exp %349 : vector<8x32xf32>
      %cst_118 = arith.constant 1.000000e+00 : f32
      %351 = vector.broadcast %cst_118 : f32 to vector<8x32xf32>
      %352 = arith.addf %351, %350 : vector<8x32xf32>
      %353 = arith.divf %351, %352 : vector<8x32xf32>
      %354 = vector.extract_strided_slice %341 {offsets = [0, 64], sizes = [8, 32], strides = [1, 1]} : vector<8x128xf32> to vector<8x32xf32>
      %355 = math.tanh %354 : vector<8x32xf32>
      %356 = vector.extract_strided_slice %341 {offsets = [0, 96], sizes = [8, 32], strides = [1, 1]} : vector<8x128xf32> to vector<8x32xf32>
      %357 = arith.negf %356 : vector<8x32xf32>
      %358 = math.exp %357 : vector<8x32xf32>
      %cst_119 = arith.constant 1.000000e+00 : f32
      %359 = vector.broadcast %cst_119 : f32 to vector<8x32xf32>
      %360 = arith.addf %359, %358 : vector<8x32xf32>
      %361 = arith.divf %359, %360 : vector<8x32xf32>
      %362 = arith.mulf %353, %334 : vector<8x32xf32>
      %363 = arith.mulf %347, %355 : vector<8x32xf32>
      %364 = arith.addf %362, %363 : vector<8x32xf32>
      %365 = math.tanh %364 : vector<8x32xf32>
      %366 = arith.mulf %361, %365 : vector<8x32xf32>
      %367 = tpu.concatenate %366, %10 in 1 : vector<8x32xf32>, vector<8x96xf32> -> vector<8x128xf32>
      %c24_120 = arith.constant 24 : index
      %c0_121 = arith.constant 0 : index
      %368 = vector.load %arg11[%c24_120, %c0_121] : memref<64x128xf32, #tpu.memory_space<vmem>>, vector<8x128xf32>
      %c0_122 = arith.constant 0 : index
      %c0_123 = arith.constant 0 : index
      %369 = vector.load %arg5[%c0_122, %c0_123] : memref<128x128xf32, #tpu.memory_space<vmem>>, vector<128x128xf32>
      %cst_124 = arith.constant dense<0.000000e+00> : vector<8x128xf32>
      %370 = tpu.matmul %367, %369, %cst_124 {dimension_numbers = #tpu.dot_dimension_numbers<[1], [0], [0], [1], [0, 0, 1, 1], [], []>} : vector<8x128xf32>, vector<128x128xf32>, vector<8x128xf32> -> vector<8x128xf32>
      %371 = arith.addf %368, %370 : vector<8x128xf32>
      %372 = vector.extract_strided_slice %371 {offsets = [0, 0], sizes = [8, 32], strides = [1, 1]} : vector<8x128xf32> to vector<8x32xf32>
      %373 = arith.negf %372 : vector<8x32xf32>
      %374 = math.exp %373 : vector<8x32xf32>
      %cst_125 = arith.constant 1.000000e+00 : f32
      %375 = vector.broadcast %cst_125 : f32 to vector<8x32xf32>
      %376 = arith.addf %375, %374 : vector<8x32xf32>
      %377 = arith.divf %375, %376 : vector<8x32xf32>
      %378 = vector.extract_strided_slice %371 {offsets = [0, 32], sizes = [8, 32], strides = [1, 1]} : vector<8x128xf32> to vector<8x32xf32>
      %379 = arith.negf %378 : vector<8x32xf32>
      %380 = math.exp %379 : vector<8x32xf32>
      %cst_126 = arith.constant 1.000000e+00 : f32
      %381 = vector.broadcast %cst_126 : f32 to vector<8x32xf32>
      %382 = arith.addf %381, %380 : vector<8x32xf32>
      %383 = arith.divf %381, %382 : vector<8x32xf32>
      %384 = vector.extract_strided_slice %371 {offsets = [0, 64], sizes = [8, 32], strides = [1, 1]} : vector<8x128xf32> to vector<8x32xf32>
      %385 = math.tanh %384 : vector<8x32xf32>
      %386 = vector.extract_strided_slice %371 {offsets = [0, 96], sizes = [8, 32], strides = [1, 1]} : vector<8x128xf32> to vector<8x32xf32>
      %387 = arith.negf %386 : vector<8x32xf32>
      %388 = math.exp %387 : vector<8x32xf32>
      %cst_127 = arith.constant 1.000000e+00 : f32
      %389 = vector.broadcast %cst_127 : f32 to vector<8x32xf32>
      %390 = arith.addf %389, %388 : vector<8x32xf32>
      %391 = arith.divf %389, %390 : vector<8x32xf32>
      %392 = arith.mulf %383, %364 : vector<8x32xf32>
      %393 = arith.mulf %377, %385 : vector<8x32xf32>
      %394 = arith.addf %392, %393 : vector<8x32xf32>
      %395 = math.tanh %394 : vector<8x32xf32>
      %396 = arith.mulf %391, %395 : vector<8x32xf32>
      %397 = tpu.concatenate %396, %10 in 1 : vector<8x32xf32>, vector<8x96xf32> -> vector<8x128xf32>
      %c32_128 = arith.constant 32 : index
      %c0_129 = arith.constant 0 : index
      %398 = vector.load %arg11[%c32_128, %c0_129] : memref<64x128xf32, #tpu.memory_space<vmem>>, vector<8x128xf32>
      %c0_130 = arith.constant 0 : index
      %c0_131 = arith.constant 0 : index
      %399 = vector.load %arg5[%c0_130, %c0_131] : memref<128x128xf32, #tpu.memory_space<vmem>>, vector<128x128xf32>
      %cst_132 = arith.constant dense<0.000000e+00> : vector<8x128xf32>
      %400 = tpu.matmul %397, %399, %cst_132 {dimension_numbers = #tpu.dot_dimension_numbers<[1], [0], [0], [1], [0, 0, 1, 1], [], []>} : vector<8x128xf32>, vector<128x128xf32>, vector<8x128xf32> -> vector<8x128xf32>
      %401 = arith.addf %398, %400 : vector<8x128xf32>
      %402 = vector.extract_strided_slice %401 {offsets = [0, 0], sizes = [8, 32], strides = [1, 1]} : vector<8x128xf32> to vector<8x32xf32>
      %403 = arith.negf %402 : vector<8x32xf32>
      %404 = math.exp %403 : vector<8x32xf32>
      %cst_133 = arith.constant 1.000000e+00 : f32
      %405 = vector.broadcast %cst_133 : f32 to vector<8x32xf32>
      %406 = arith.addf %405, %404 : vector<8x32xf32>
      %407 = arith.divf %405, %406 : vector<8x32xf32>
      %408 = vector.extract_strided_slice %401 {offsets = [0, 32], sizes = [8, 32], strides = [1, 1]} : vector<8x128xf32> to vector<8x32xf32>
      %409 = arith.negf %408 : vector<8x32xf32>
      %410 = math.exp %409 : vector<8x32xf32>
      %cst_134 = arith.constant 1.000000e+00 : f32
      %411 = vector.broadcast %cst_134 : f32 to vector<8x32xf32>
      %412 = arith.addf %411, %410 : vector<8x32xf32>
      %413 = arith.divf %411, %412 : vector<8x32xf32>
      %414 = vector.extract_strided_slice %401 {offsets = [0, 64], sizes = [8, 32], strides = [1, 1]} : vector<8x128xf32> to vector<8x32xf32>
      %415 = math.tanh %414 : vector<8x32xf32>
      %416 = vector.extract_strided_slice %401 {offsets = [0, 96], sizes = [8, 32], strides = [1, 1]} : vector<8x128xf32> to vector<8x32xf32>
      %417 = arith.negf %416 : vector<8x32xf32>
      %418 = math.exp %417 : vector<8x32xf32>
      %cst_135 = arith.constant 1.000000e+00 : f32
      %419 = vector.broadcast %cst_135 : f32 to vector<8x32xf32>
      %420 = arith.addf %419, %418 : vector<8x32xf32>
      %421 = arith.divf %419, %420 : vector<8x32xf32>
      %422 = arith.mulf %413, %394 : vector<8x32xf32>
      %423 = arith.mulf %407, %415 : vector<8x32xf32>
      %424 = arith.addf %422, %423 : vector<8x32xf32>
      %425 = math.tanh %424 : vector<8x32xf32>
      %426 = arith.mulf %421, %425 : vector<8x32xf32>
      %427 = tpu.concatenate %426, %10 in 1 : vector<8x32xf32>, vector<8x96xf32> -> vector<8x128xf32>
      %c40_136 = arith.constant 40 : index
      %c0_137 = arith.constant 0 : index
      %428 = vector.load %arg11[%c40_136, %c0_137] : memref<64x128xf32, #tpu.memory_space<vmem>>, vector<8x128xf32>
      %c0_138 = arith.constant 0 : index
      %c0_139 = arith.constant 0 : index
      %429 = vector.load %arg5[%c0_138, %c0_139] : memref<128x128xf32, #tpu.memory_space<vmem>>, vector<128x128xf32>
      %cst_140 = arith.constant dense<0.000000e+00> : vector<8x128xf32>
      %430 = tpu.matmul %427, %429, %cst_140 {dimension_numbers = #tpu.dot_dimension_numbers<[1], [0], [0], [1], [0, 0, 1, 1], [], []>} : vector<8x128xf32>, vector<128x128xf32>, vector<8x128xf32> -> vector<8x128xf32>
      %431 = arith.addf %428, %430 : vector<8x128xf32>
      %432 = vector.extract_strided_slice %431 {offsets = [0, 0], sizes = [8, 32], strides = [1, 1]} : vector<8x128xf32> to vector<8x32xf32>
      %433 = arith.negf %432 : vector<8x32xf32>
      %434 = math.exp %433 : vector<8x32xf32>
      %cst_141 = arith.constant 1.000000e+00 : f32
      %435 = vector.broadcast %cst_141 : f32 to vector<8x32xf32>
      %436 = arith.addf %435, %434 : vector<8x32xf32>
      %437 = arith.divf %435, %436 : vector<8x32xf32>
      %438 = vector.extract_strided_slice %431 {offsets = [0, 32], sizes = [8, 32], strides = [1, 1]} : vector<8x128xf32> to vector<8x32xf32>
      %439 = arith.negf %438 : vector<8x32xf32>
      %440 = math.exp %439 : vector<8x32xf32>
      %cst_142 = arith.constant 1.000000e+00 : f32
      %441 = vector.broadcast %cst_142 : f32 to vector<8x32xf32>
      %442 = arith.addf %441, %440 : vector<8x32xf32>
      %443 = arith.divf %441, %442 : vector<8x32xf32>
      %444 = vector.extract_strided_slice %431 {offsets = [0, 64], sizes = [8, 32], strides = [1, 1]} : vector<8x128xf32> to vector<8x32xf32>
      %445 = math.tanh %444 : vector<8x32xf32>
      %446 = vector.extract_strided_slice %431 {offsets = [0, 96], sizes = [8, 32], strides = [1, 1]} : vector<8x128xf32> to vector<8x32xf32>
      %447 = arith.negf %446 : vector<8x32xf32>
      %448 = math.exp %447 : vector<8x32xf32>
      %cst_143 = arith.constant 1.000000e+00 : f32
      %449 = vector.broadcast %cst_143 : f32 to vector<8x32xf32>
      %450 = arith.addf %449, %448 : vector<8x32xf32>
      %451 = arith.divf %449, %450 : vector<8x32xf32>
      %452 = arith.mulf %443, %424 : vector<8x32xf32>
      %453 = arith.mulf %437, %445 : vector<8x32xf32>
      %454 = arith.addf %452, %453 : vector<8x32xf32>
      %455 = math.tanh %454 : vector<8x32xf32>
      %456 = arith.mulf %451, %455 : vector<8x32xf32>
      %457 = tpu.concatenate %456, %10 in 1 : vector<8x32xf32>, vector<8x96xf32> -> vector<8x128xf32>
      %c48_144 = arith.constant 48 : index
      %c0_145 = arith.constant 0 : index
      %458 = vector.load %arg11[%c48_144, %c0_145] : memref<64x128xf32, #tpu.memory_space<vmem>>, vector<8x128xf32>
      %c0_146 = arith.constant 0 : index
      %c0_147 = arith.constant 0 : index
      %459 = vector.load %arg5[%c0_146, %c0_147] : memref<128x128xf32, #tpu.memory_space<vmem>>, vector<128x128xf32>
      %cst_148 = arith.constant dense<0.000000e+00> : vector<8x128xf32>
      %460 = tpu.matmul %457, %459, %cst_148 {dimension_numbers = #tpu.dot_dimension_numbers<[1], [0], [0], [1], [0, 0, 1, 1], [], []>} : vector<8x128xf32>, vector<128x128xf32>, vector<8x128xf32> -> vector<8x128xf32>
      %461 = arith.addf %458, %460 : vector<8x128xf32>
      %462 = vector.extract_strided_slice %461 {offsets = [0, 0], sizes = [8, 32], strides = [1, 1]} : vector<8x128xf32> to vector<8x32xf32>
      %463 = arith.negf %462 : vector<8x32xf32>
      %464 = math.exp %463 : vector<8x32xf32>
      %cst_149 = arith.constant 1.000000e+00 : f32
      %465 = vector.broadcast %cst_149 : f32 to vector<8x32xf32>
      %466 = arith.addf %465, %464 : vector<8x32xf32>
      %467 = arith.divf %465, %466 : vector<8x32xf32>
      %468 = vector.extract_strided_slice %461 {offsets = [0, 32], sizes = [8, 32], strides = [1, 1]} : vector<8x128xf32> to vector<8x32xf32>
      %469 = arith.negf %468 : vector<8x32xf32>
      %470 = math.exp %469 : vector<8x32xf32>
      %cst_150 = arith.constant 1.000000e+00 : f32
      %471 = vector.broadcast %cst_150 : f32 to vector<8x32xf32>
      %472 = arith.addf %471, %470 : vector<8x32xf32>
      %473 = arith.divf %471, %472 : vector<8x32xf32>
      %474 = vector.extract_strided_slice %461 {offsets = [0, 64], sizes = [8, 32], strides = [1, 1]} : vector<8x128xf32> to vector<8x32xf32>
      %475 = math.tanh %474 : vector<8x32xf32>
      %476 = vector.extract_strided_slice %461 {offsets = [0, 96], sizes = [8, 32], strides = [1, 1]} : vector<8x128xf32> to vector<8x32xf32>
      %477 = arith.negf %476 : vector<8x32xf32>
      %478 = math.exp %477 : vector<8x32xf32>
      %cst_151 = arith.constant 1.000000e+00 : f32
      %479 = vector.broadcast %cst_151 : f32 to vector<8x32xf32>
      %480 = arith.addf %479, %478 : vector<8x32xf32>
      %481 = arith.divf %479, %480 : vector<8x32xf32>
      %482 = arith.mulf %473, %454 : vector<8x32xf32>
      %483 = arith.mulf %467, %475 : vector<8x32xf32>
      %484 = arith.addf %482, %483 : vector<8x32xf32>
      %485 = math.tanh %484 : vector<8x32xf32>
      %486 = arith.mulf %481, %485 : vector<8x32xf32>
      %487 = tpu.concatenate %486, %10 in 1 : vector<8x32xf32>, vector<8x96xf32> -> vector<8x128xf32>
      %c56_152 = arith.constant 56 : index
      %c0_153 = arith.constant 0 : index
      %488 = vector.load %arg11[%c56_152, %c0_153] : memref<64x128xf32, #tpu.memory_space<vmem>>, vector<8x128xf32>
      %c0_154 = arith.constant 0 : index
      %c0_155 = arith.constant 0 : index
      %489 = vector.load %arg5[%c0_154, %c0_155] : memref<128x128xf32, #tpu.memory_space<vmem>>, vector<128x128xf32>
      %cst_156 = arith.constant dense<0.000000e+00> : vector<8x128xf32>
      %490 = tpu.matmul %487, %489, %cst_156 {dimension_numbers = #tpu.dot_dimension_numbers<[1], [0], [0], [1], [0, 0, 1, 1], [], []>} : vector<8x128xf32>, vector<128x128xf32>, vector<8x128xf32> -> vector<8x128xf32>
      %491 = arith.addf %488, %490 : vector<8x128xf32>
      %492 = vector.extract_strided_slice %491 {offsets = [0, 0], sizes = [8, 32], strides = [1, 1]} : vector<8x128xf32> to vector<8x32xf32>
      %493 = arith.negf %492 : vector<8x32xf32>
      %494 = math.exp %493 : vector<8x32xf32>
      %cst_157 = arith.constant 1.000000e+00 : f32
      %495 = vector.broadcast %cst_157 : f32 to vector<8x32xf32>
      %496 = arith.addf %495, %494 : vector<8x32xf32>
      %497 = arith.divf %495, %496 : vector<8x32xf32>
      %498 = vector.extract_strided_slice %491 {offsets = [0, 32], sizes = [8, 32], strides = [1, 1]} : vector<8x128xf32> to vector<8x32xf32>
      %499 = arith.negf %498 : vector<8x32xf32>
      %500 = math.exp %499 : vector<8x32xf32>
      %cst_158 = arith.constant 1.000000e+00 : f32
      %501 = vector.broadcast %cst_158 : f32 to vector<8x32xf32>
      %502 = arith.addf %501, %500 : vector<8x32xf32>
      %503 = arith.divf %501, %502 : vector<8x32xf32>
      %504 = vector.extract_strided_slice %491 {offsets = [0, 64], sizes = [8, 32], strides = [1, 1]} : vector<8x128xf32> to vector<8x32xf32>
      %505 = math.tanh %504 : vector<8x32xf32>
      %506 = vector.extract_strided_slice %491 {offsets = [0, 96], sizes = [8, 32], strides = [1, 1]} : vector<8x128xf32> to vector<8x32xf32>
      %507 = arith.negf %506 : vector<8x32xf32>
      %508 = math.exp %507 : vector<8x32xf32>
      %cst_159 = arith.constant 1.000000e+00 : f32
      %509 = vector.broadcast %cst_159 : f32 to vector<8x32xf32>
      %510 = arith.addf %509, %508 : vector<8x32xf32>
      %511 = arith.divf %509, %510 : vector<8x32xf32>
      %512 = arith.mulf %503, %484 : vector<8x32xf32>
      %513 = arith.mulf %497, %505 : vector<8x32xf32>
      %514 = arith.addf %512, %513 : vector<8x32xf32>
      %515 = math.tanh %514 : vector<8x32xf32>
      %516 = arith.mulf %511, %515 : vector<8x32xf32>
      %517 = tpu.concatenate %516, %10 in 1 : vector<8x32xf32>, vector<8x96xf32> -> vector<8x128xf32>
      %c0_160 = arith.constant 0 : index
      %c0_161 = arith.constant 0 : index
      %518 = vector.load %arg10[%c0_160, %c0_161] : memref<8x128xf32, #tpu.memory_space<vmem>>, vector<8x128xf32>
      tpu.vector_store %arg10[%c0_160, %c0_161], %517 {strides = array<i32>} : memref<8x128xf32, #tpu.memory_space<vmem>>, vector<8x128xf32>,
    } else {
    }
    %c0 = arith.constant 0 : index
    %c0_1 = arith.constant 0 : index
    %3 = vector.load %arg10[%c0, %c0_1] : memref<8x128xf32, #tpu.memory_space<vmem>>, vector<8x128xf32>
    %c0_2 = arith.constant 0 : index
    %c0_3 = arith.constant 0 : index
    %4 = vector.load %arg7[%c0_2, %c0_3] : memref<128x128xf32, #tpu.memory_space<vmem>>, vector<128x128xf32>
    %cst = arith.constant dense<0.000000e+00> : vector<8x128xf32>
    %5 = tpu.matmul %3, %4, %cst {dimension_numbers = #tpu.dot_dimension_numbers<[1], [0], [0], [1], [0, 0, 1, 1], [], []>} : vector<8x128xf32>, vector<128x128xf32>, vector<8x128xf32> -> vector<8x128xf32>
    %c0_4 = arith.constant 0 : index
    %c0_5 = arith.constant 0 : index
    %6 = vector.load %arg8[%c0_4, %c0_5] : memref<1x128xf32, #tpu.memory_space<vmem>>, vector<1x128xf32>
    %7 = vector.broadcast %6 : vector<1x128xf32> to vector<8x128xf32>
    %8 = arith.addf %5, %7 : vector<8x128xf32>
    %c0_6 = arith.constant 0 : index
    %c0_7 = arith.constant 0 : index
    %9 = vector.load %arg9[%c0_6, %c0_7] : memref<8x128xf32, #tpu.memory_space<vmem>>, vector<8x128xf32>
    tpu.vector_store %arg9[%c0_6, %c0_7], %8 {strides = array<i32>} : memref<8x128xf32, #tpu.memory_space<vmem>>, vector<8x128xf32>,
    return
  }
  func.func @transform_0(%arg0: i32, %arg1: i32) -> (i32, i32, i32) {
    %c0_i32 = arith.constant 0 : i32
    %c0_i32_0 = arith.constant 0 : i32
    %c0_i32_1 = arith.constant 0 : i32
    return %c0_i32, %arg0, %c0_i32_0 : i32, i32, i32
  }
  func.func @transform_1(%arg0: i32, %arg1: i32) -> (i32, i32) {
    %c0_i32 = arith.constant 0 : i32
    %c0_i32_0 = arith.constant 0 : i32
    %c0_i32_1 = arith.constant 0 : i32
    return %c0_i32, %c0_i32_0 : i32, i32
  }
  func.func @transform_2(%arg0: i32, %arg1: i32) -> (i32, i32) {
    %c0_i32 = arith.constant 0 : i32
    %c0_i32_0 = arith.constant 0 : i32
    %c0_i32_1 = arith.constant 0 : i32
    return %c0_i32, %c0_i32_0 : i32, i32
  }
  func.func @transform_3(%arg0: i32, %arg1: i32) -> (i32, i32) {
    %c0_i32 = arith.constant 0 : i32
    %c0_i32_0 = arith.constant 0 : i32
    %c0_i32_1 = arith.constant 0 : i32
    return %c0_i32, %c0_i32_0 : i32, i32
  }
  func.func @transform_4(%arg0: i32, %arg1: i32) -> (i32, i32) {
    %c0_i32 = arith.constant 0 : i32
    %c0_i32_0 = arith.constant 0 : i32
    %c0_i32_1 = arith.constant 0 : i32
    return %c0_i32, %c0_i32_0 : i32, i32
  }
  func.func @transform_5(%arg0: i32, %arg1: i32) -> (i32, i32) {
    %c0_i32 = arith.constant 0 : i32
    %c0_i32_0 = arith.constant 0 : i32
    return %c0_i32, %arg1 : i32, i32
  }
  func.func @transform_6(%arg0: i32, %arg1: i32) -> (i32, i32) {
    %c0_i32 = arith.constant 0 : i32
    %c0_i32_0 = arith.constant 0 : i32
    return %c0_i32, %arg1 : i32, i32
  }
  func.func @transform_7(%arg0: i32, %arg1: i32) -> (i32, i32) {
    %c0_i32 = arith.constant 0 : i32
    return %arg0, %arg1 : i32, i32
  }
}

</mosaic_0001>

<llo_original>
// kernel: lstm_interaction_encoder.1
$region0: #{lstm_interaction_encoder.1}
  #allocation0 [shape = 'u32[]', space=smem, size = 0x4, offset = 0x4, fixed_abs, tag = 'smem constant byte address 0x4 - core index']
  #allocation1 [shape = 'u32[144,128]{1,0:T(1,128)}', space=vmem, size = 0x12000, scoped, tag = 'internal scratch']
  #allocation2 [shape = 'f32[8,128]{1,0:T(8,128)}', space=vmem, size = 0x1000, scoped, tag = 'scratch operand']
  #allocation3 [shape = 'f32[64,128]{1,0:T(8,128)}', space=vmem, size = 0x8000, scoped, tag = 'scratch operand']
  #allocation4 [shape = 'f32[64,128]{1,0:T(8,128)}', space=vmem, size = 0x8000, scoped, tag = 'scratch operand']
  %s0 = inlined_call_operand.vmem [shape: f32[8,8,128], index: 0, kind: input, shape index: {}]
  %s1 = inlined_call_operand.vmem [shape: f32[128,128], index: 1, kind: input, shape index: {}]
  %s2 = inlined_call_operand.hbm [shape: f32[128,128], index: 2, kind: input, shape index: {}]
  %s3 = inlined_call_operand.hbm [shape: f32[128,128], index: 3, kind: input, shape index: {}]
  %s4 = inlined_call_operand.vmem [shape: f32[1,128], index: 4, kind: input, shape index: {}]
  %s5 = inlined_call_operand.hbm [shape: f32[128,128], index: 5, kind: input, shape index: {}]
  %s6 = inlined_call_operand.vmem [shape: f32[1,128], index: 6, kind: input, shape index: {}]
  %s7 = inlined_call_operand.vmem [shape: f32[8,128], index: 7, kind: output, shape index: {}]
  %s8 = sld [smem:[#allocation0]]
  $region54: #{lstm_interaction_encoder.1} parent=0
    _
  %s10 = ssub.s32 1, %s8
  %s11 = scalar_select 0, %s10, %s8
  $region1: #{lstm_interaction_encoder.1} parent=0
    #allocation5 [shape = 'u8[65536]{0}', space=vmem, size = 0x10000, scoped, tag = 'input window, operand 2, single buffered']
    #allocation6 [shape = 's32[1]{0}', space=sflag, size = 0x4, scoped, tag = 'scoped memory for lstm_interaction_encoder.1']
    #allocation7 [shape = 'u8[65536]{0}', space=vmem, size = 0x10000, scoped, tag = 'input window, operand 3, single buffered']
    #allocation8 [shape = 's32[1]{0}', space=sflag, size = 0x4, scoped, tag = 'scoped memory for lstm_interaction_encoder.1']
    #allocation9 [shape = 'u8[65536]{0}', space=vmem, size = 0x10000, scoped, tag = 'input window, operand 5, single buffered']
    %12 = vsyncpa [#allocation6], 0
    %13 = vsyncpa [#allocation8], 0
    // Predicated region
    $region2: #{lstm_interaction_encoder.1} parent=1 // pred_check
      _
    $region3: #{lstm_interaction_encoder.1} parent=1 // pred_check_branch
      %15 = sbr.rel (0) target = $region5
    $region4: #{lstm_interaction_encoder.1} parent=1 // pred_region
      _
    $region5: #{lstm_interaction_encoder.1} parent=1 // pred_fallthru
      _
    // Predicated region
    $region6: #{lstm_interaction_encoder.1} parent=1 // pred_check
      _
    $region7: #{lstm_interaction_encoder.1} parent=1 // pred_check_branch
      %17 = sbr.rel (0) target = $region9
    $region8: #{lstm_interaction_encoder.1} parent=1 // pred_region
      _
    $region9: #{lstm_interaction_encoder.1} parent=1 // pred_fallthru
      _
    // Predicated region
    $region10: #{lstm_interaction_encoder.1} parent=1 // pred_check
      _
    $region11: #{lstm_interaction_encoder.1} parent=1 // pred_check_branch
      %19 = sbr.rel (0) target = $region13
    $region12: #{lstm_interaction_encoder.1} parent=1 // pred_region
      %s21 = ssub.s32 2048, 2048
      %22 = vsyncadd [#allocation6], %s21
      %s23 = sshll.u32 [#allocation5], 4
      %s24 = int_to_ptr.vmem [resolvable:$true] %s23
      %29 = dma.hbm_to_vmem [thread:$0]  %s2, 2048, %s24, [#allocation6], 128, 128, 8
    $region13: #{lstm_interaction_encoder.1} parent=1 // pred_fallthru
      _
    // Predicated region
    $region14: #{lstm_interaction_encoder.1} parent=1 // pred_check
      _
    $region15: #{lstm_interaction_encoder.1} parent=1 // pred_check_branch
      %31 = sbr.rel (0) target = $region17
    $region16: #{lstm_interaction_encoder.1} parent=1 // pred_region
      %s33 = ssub.s32 2048, 2048
      %34 = vsyncadd [#allocation8], %s33
      %s35 = sshll.u32 [#allocation7], 4
      %s36 = int_to_ptr.vmem [resolvable:$true] %s35
      %41 = dma.hbm_to_vmem [thread:$0]  %s3, 2048, %s36, [#allocation8], 128, 128, 8
    $region17: #{lstm_interaction_encoder.1} parent=1 // pred_fallthru
      _
    // Predicated region
    $region18: #{lstm_interaction_encoder.1} parent=1 // pred_check
      _
    $region19: #{lstm_interaction_encoder.1} parent=1 // pred_check_branch
      %43 = sbr.rel (0) target = $region21
    $region20: #{lstm_interaction_encoder.1} parent=1 // pred_region
      _
    $region21: #{lstm_interaction_encoder.1} parent=1 // pred_fallthru
      _
    // Predicated region
    $region22: #{lstm_interaction_encoder.1} parent=1 // pred_check
      _
    $region23: #{lstm_interaction_encoder.1} parent=1 // pred_check_branch
      %45 = sbr.rel (0) target = $region25
    $region24: #{lstm_interaction_encoder.1} parent=1 // pred_region
      %s47 = ssub.s32 2048, 2048
      %48 = vsyncadd [#allocation8], %s47
      %s49 = sshll.u32 [#allocation9], 4
      %s50 = int_to_ptr.vmem [resolvable:$true] %s49
      %55 = dma.hbm_to_vmem [thread:$0]  %s5, 2048, %s50, [#allocation8], 128, 128, 8
    $region25: #{lstm_interaction_encoder.1} parent=1 // pred_fallthru
      _
    // Predicated region
    $region26: #{lstm_interaction_encoder.1} parent=1 // pred_check
      _
    $region27: #{lstm_interaction_encoder.1} parent=1 // pred_check_branch
      %57 = sbr.rel (0) target = $region29
    $region28: #{lstm_interaction_encoder.1} parent=1 // pred_region
      _
    $region29: #{lstm_interaction_encoder.1} parent=1 // pred_fallthru
      _
    // Predicated region
    $region30: #{lstm_interaction_encoder.1} parent=1 // pred_check
      _
    $region31: #{lstm_interaction_encoder.1} parent=1 // pred_check_branch
      %59 = sbr.rel (0) target = $region33
    $region32: #{lstm_interaction_encoder.1} parent=1 // pred_region
      %60 = dma.done [#allocation6], 2048
    $region33: #{lstm_interaction_encoder.1} parent=1 // pred_fallthru
      _
    // Predicated region
    $region34: #{lstm_interaction_encoder.1} parent=1 // pred_check
      _
    $region35: #{lstm_interaction_encoder.1} parent=1 // pred_check_branch
      %62 = sbr.rel (0) target = $region37
    $region36: #{lstm_interaction_encoder.1} parent=1 // pred_region
      %63 = dma.done [#allocation8], 2048
    $region37: #{lstm_interaction_encoder.1} parent=1 // pred_fallthru
      _
    // Predicated region
    $region38: #{lstm_interaction_encoder.1} parent=1 // pred_check
      _
    $region39: #{lstm_interaction_encoder.1} parent=1 // pred_check_branch
      %65 = sbr.rel (0) target = $region41
    $region40: #{lstm_interaction_encoder.1} parent=1 // pred_region
      %66 = dma.done [#allocation8], 2048
    $region41: #{lstm_interaction_encoder.1} parent=1 // pred_fallthru
      _
    %p67 = scmp.eq.s32.totalorder 0, 0
    // Predicated region
    $region42: #{lstm_interaction_encoder.1} parent=1 // pred_check
      %p68 = pneg %p67
    $region43: #{lstm_interaction_encoder.1} parent=1 // pred_check_branch
      %70 = sbr.rel (%p68) target = $region45
    $region44: #{lstm_interaction_encoder.1} parent=1 // pred_region
      %v71 = vld [vmem:[%s0] sm:$0xff]
      %v72 = vld [vmem:[%s1] sm:$0xff]
      %v73 = vld [vmem:[%s1 + $0x8] sm:$0xff]
      %v74 = vld [vmem:[%s1 + $0x10] sm:$0xff]
      %v75 = vld [vmem:[%s1 + $0x18] sm:$0xff]
      %v76 = vld [vmem:[%s1 + $0x20] sm:$0xff]
      %v77 = vld [vmem:[%s1 + $0x28] sm:$0xff]
      %v78 = vld [vmem:[%s1 + $0x30] sm:$0xff]
      %v79 = vld [vmem:[%s1 + $0x38] sm:$0xff]
      %v80 = vld [vmem:[%s1 + $0x40] sm:$0xff]
      %v81 = vld [vmem:[%s1 + $0x48] sm:$0xff]
      %v82 = vld [vmem:[%s1 + $0x50] sm:$0xff]
      %v83 = vld [vmem:[%s1 + $0x58] sm:$0xff]
      %v84 = vld [vmem:[%s1 + $0x60] sm:$0xff]
      %v85 = vld [vmem:[%s1 + $0x68] sm:$0xff]
      %v86 = vld [vmem:[%s1 + $0x70] sm:$0xff]
      %v87 = vld [vmem:[%s1 + $0x78] sm:$0xff]
      %88 = vmatprep.subr.mxu0 0.0
      %89 = vmatpush1.msra.mxu0 %v72
      %90 = vmatprep.subr.mxu0 0.0
      %91 = vmatpush1.msra.mxu0 %v73
      %92 = vmatprep.subr.mxu0 0.0
      %93 = vmatpush1.msra.mxu0 %v74
      %94 = vmatprep.subr.mxu0 0.0
      %95 = vmatpush1.msra.mxu0 %v75
      %96 = vmatprep.subr.mxu0 0.0
      %97 = vmatpush1.msra.mxu0 %v76
      %98 = vmatprep.subr.mxu0 0.0
      %99 = vmatpush1.msra.mxu0 %v77
      %100 = vmatprep.subr.mxu0 0.0
      %101 = vmatpush1.msra.mxu0 %v78
      %102 = vmatprep.subr.mxu0 0.0
      %103 = vmatpush1.msra.mxu0 %v79
      %104 = vmatprep.subr.mxu0 0.0
      %105 = vmatpush1.msra.mxu0 %v80
      %106 = vmatprep.subr.mxu0 0.0
      %107 = vmatpush1.msra.mxu0 %v81
      %108 = vmatprep.subr.mxu0 0.0
      %109 = vmatpush1.msra.mxu0 %v82
      %110 = vmatprep.subr.mxu0 0.0
      %111 = vmatpush1.msra.mxu0 %v83
      %112 = vmatprep.subr.mxu0 0.0
      %113 = vmatpush1.msra.mxu0 %v84
      %114 = vmatprep.subr.mxu0 0.0
      %115 = vmatpush1.msra.mxu0 %v85
      %116 = vmatprep.subr.mxu0 0.0
      %117 = vmatpush1.msra.mxu0 %v86
      %118 = vmatprep.subr.mxu0 0.0
      %119 = vmatpush1.msra.mxu0 %v87
      %120 = vmatprep.subr.mxu0 0.0
      %121 = vmatpush1.msra.mxu0 0.0
      %122 = vmatprep.subr.mxu0 0.0
      %123 = vmatpush1.msra.mxu0 0.0
      %124 = vmatprep.subr.mxu0 0.0
      %125 = vmatpush1.msra.mxu0 0.0
      %126 = vmatprep.subr.mxu0 0.0
      %127 = vmatpush1.msra.mxu0 0.0
      %128 = vmatprep.subr.mxu0 0.0
      %129 = vmatpush1.msra.mxu0 0.0
      %130 = vmatprep.subr.mxu0 0.0
      %131 = vmatpush1.msra.mxu0 0.0
      %132 = vmatprep.subr.mxu0 0.0
      %133 = vmatpush1.msra.mxu0 0.0
      %134 = vmatprep.subr.mxu0 0.0
      %135 = vmatpush1.msra.mxu0 0.0
      %136 = vmatprep.subr.mxu0 0.0
      %137 = vmatpush1.msra.mxu0 0.0
      %138 = vmatprep.subr.mxu0 0.0
      %139 = vmatpush1.msra.mxu0 0.0
      %140 = vmatprep.subr.mxu0 0.0
      %141 = vmatpush1.msra.mxu0 0.0
      %142 = vmatprep.subr.mxu0 0.0
      %143 = vmatpush1.msra.mxu0 0.0
      %144 = vmatprep.subr.mxu0 0.0
      %145 = vmatpush1.msra.mxu0 0.0
      %146 = vmatprep.subr.mxu0 0.0
      %147 = vmatpush1.msra.mxu0 0.0
      %148 = vmatprep.subr.mxu0 0.0
      %149 = vmatpush1.msra.mxu0 0.0
      %150 = vmatprep.subr.mxu0 0.0
      %151 = vmatpush1.msra.mxu0 0.0
      %152 = vmatprep.mubr.f32.mxu0 0.0
      %153 = vmatmul.mubr.f32.gmra.mrb[0].mxu0 0.0
      %v154 = vpop.f32.mrb[0].mxu0
      %v155 = vadd.f32 0.0, %v154
      %v156 = vpop.f32.mrb[0].mxu0
      %157 = vdwg.mxu0
      %v158 = vadd.f32 %v71, %v155
      %v159 = vxor.u32 %v158, 2147483648
      %v160 = vmul.f32 %v159, 1.442695
      %v161 = vpow.pop %v160
      %v162 = vadd.f32 %v161, 1.0
      %v163 = vrcp.pop %v162
      %v164 = vmul.f32 1.0, %v163
      %v165 = vtanh.pop %v158
      %v166 = vmul.f32 %v164, 0.0
      %168 = vrot.lane.b32.xlu0 %v165, 64
      %v169 = vpop.permute.xlu0 %168
      %v171 = vmul.f32 %v164, %v169
      %173 = vrot.lane.b32.xlu0 %v171, 32
      %v174 = vpop.permute.xlu0 %173
      %v176 = vadd.f32 %v166, %v174
      %v177 = vtanh.pop %v176
      %179 = vrot.lane.b32.xlu0 %v177, 64
      %v180 = vpop.permute.xlu0 %179
      %v182 = vmul.f32 %v164, %v180
      %184 = vrot.lane.b32.xlu0 %v182, 32
      %v185 = vpop.permute.xlu0 %184
      %vm187 = vcmask 261120
      %v188 = vsel %vm187, %v185, 0.0
      %189 = vst [vmem:[#allocation4] sm:$0xff] %v188
      %s190 = scalar_lea.vmem %s0, 8
      %v191 = vld [vmem:[%s190] sm:$0xff]
      %v192 = vld [vmem:[%s1] sm:$0xff]
      %v193 = vld [vmem:[%s1 + $0x8] sm:$0xff]
      %v194 = vld [vmem:[%s1 + $0x10] sm:$0xff]
      %v195 = vld [vmem:[%s1 + $0x18] sm:$0xff]
      %v196 = vld [vmem:[%s1 + $0x20] sm:$0xff]
      %v197 = vld [vmem:[%s1 + $0x28] sm:$0xff]
      %v198 = vld [vmem:[%s1 + $0x30] sm:$0xff]
      %v199 = vld [vmem:[%s1 + $0x38] sm:$0xff]
      %v200 = vld [vmem:[%s1 + $0x40] sm:$0xff]
      %v201 = vld [vmem:[%s1 + $0x48] sm:$0xff]
      %v202 = vld [vmem:[%s1 + $0x50] sm:$0xff]
      %v203 = vld [vmem:[%s1 + $0x58] sm:$0xff]
      %v204 = vld [vmem:[%s1 + $0x60] sm:$0xff]
      %v205 = vld [vmem:[%s1 + $0x68] sm:$0xff]
      %v206 = vld [vmem:[%s1 + $0x70] sm:$0xff]
      %v207 = vld [vmem:[%s1 + $0x78] sm:$0xff]
      %208 = vmatprep.subr.mxu0 0.0
      %209 = vmatpush1.msra.mxu0 %v192
      %210 = vmatprep.subr.mxu0 0.0
      %211 = vmatpush1.msra.mxu0 %v193
      %212 = vmatprep.subr.mxu0 0.0
      %213 = vmatpush1.msra.mxu0 %v194
      %214 = vmatprep.subr.mxu0 0.0
      %215 = vmatpush1.msra.mxu0 %v195
      %216 = vmatprep.subr.mxu0 0.0
      %217 = vmatpush1.msra.mxu0 %v196
      %218 = vmatprep.subr.mxu0 0.0
      %219 = vmatpush1.msra.mxu0 %v197
      %220 = vmatprep.subr.mxu0 0.0
      %221 = vmatpush1.msra.mxu0 %v198
      %222 = vmatprep.subr.mxu0 0.0
      %223 = vmatpush1.msra.mxu0 %v199
      %224 = vmatprep.subr.mxu0 0.0
      %225 = vmatpush1.msra.mxu0 %v200
      %226 = vmatprep.subr.mxu0 0.0
      %227 = vmatpush1.msra.mxu0 %v201
      %228 = vmatprep.subr.mxu0 0.0
      %229 = vmatpush1.msra.mxu0 %v202
      %230 = vmatprep.subr.mxu0 0.0
      %231 = vmatpush1.msra.mxu0 %v203
      %232 = vmatprep.subr.mxu0 0.0
      %233 = vmatpush1.msra.mxu0 %v204
      %234 = vmatprep.subr.mxu0 0.0
      %235 = vmatpush1.msra.mxu0 %v205
      %236 = vmatprep.subr.mxu0 0.0
      %237 = vmatpush1.msra.mxu0 %v206
      %238 = vmatprep.subr.mxu0 0.0
      %239 = vmatpush1.msra.mxu0 %v207
      %240 = vmatprep.subr.mxu0 0.0
      %241 = vmatpush1.msra.mxu0 0.0
      %242 = vmatprep.subr.mxu0 0.0
      %243 = vmatpush1.msra.mxu0 0.0
      %244 = vmatprep.subr.mxu0 0.0
      %245 = vmatpush1.msra.mxu0 0.0
      %246 = vmatprep.subr.mxu0 0.0
      %247 = vmatpush1.msra.mxu0 0.0
      %248 = vmatprep.subr.mxu0 0.0
      %249 = vmatpush1.msra.mxu0 0.0
      %250 = vmatprep.subr.mxu0 0.0
      %251 = vmatpush1.msra.mxu0 0.0
      %252 = vmatprep.subr.mxu0 0.0
      %253 = vmatpush1.msra.mxu0 0.0
      %254 = vmatprep.subr.mxu0 0.0
      %255 = vmatpush1.msra.mxu0 0.0
      %256 = vmatprep.subr.mxu0 0.0
      %257 = vmatpush1.msra.mxu0 0.0
      %258 = vmatprep.subr.mxu0 0.0
      %259 = vmatpush1.msra.mxu0 0.0
      %260 = vmatprep.subr.mxu0 0.0
      %261 = vmatpush1.msra.mxu0 0.0
      %262 = vmatprep.subr.mxu0 0.0
      %263 = vmatpush1.msra.mxu0 0.0
      %264 = vmatprep.subr.mxu0 0.0
      %265 = vmatpush1.msra.mxu0 0.0
      %266 = vmatprep.subr.mxu0 0.0
      %267 = vmatpush1.msra.mxu0 0.0
      %268 = vmatprep.subr.mxu0 0.0
      %269 = vmatpush1.msra.mxu0 0.0
      %270 = vmatprep.subr.mxu0 0.0
      %271 = vmatpush1.msra.mxu0 0.0
      %272 = vmatprep.mubr.f32.mxu0 0.0
      %273 = vmatmul.mubr.f32.gmra.mrb[0].mxu0 %v188
      %v274 = vpop.f32.mrb[0].mxu0
      %v275 = vadd.f32 0.0, %v274
      %v276 = vpop.f32.mrb[0].mxu0
      %277 = vdwg.mxu0
      %v278 = vadd.f32 %v191, %v275
      %v279 = vxor.u32 %v278, 2147483648
      %v280 = vmul.f32 %v279, 1.442695
      %v281 = vpow.pop %v280
      %v282 = vadd.f32 %v281, 1.0
      %v283 = vrcp.pop %v282
      %v284 = vmul.f32 1.0, %v283
      %v285 = vtanh.pop %v278
      %v286 = vmul.f32 %v284, %v176
      %288 = vrot.lane.b32.xlu0 %v285, 64
      %v289 = vpop.permute.xlu0 %288
      %v291 = vmul.f32 %v284, %v289
      %293 = vrot.lane.b32.xlu0 %v291, 32
      %v294 = vpop.permute.xlu0 %293
      %v296 = vadd.f32 %v286, %v294
      %v297 = vtanh.pop %v296
      %299 = vrot.lane.b32.xlu0 %v297, 64
      %v300 = vpop.permute.xlu0 %299
      %v302 = vmul.f32 %v284, %v300
      %304 = vrot.lane.b32.xlu0 %v302, 32
      %v305 = vpop.permute.xlu0 %304
      %v307 = vsel %vm187, %v305, 0.0
      %308 = vst [vmem:[#allocation4 + $0x8] sm:$0xff] %v307
      %s309 = scalar_lea.vmem %s0, 16
      %v310 = vld [vmem:[%s309] sm:$0xff]
      %v311 = vld [vmem:[%s1] sm:$0xff]
      %v312 = vld [vmem:[%s1 + $0x8] sm:$0xff]
      %v313 = vld [vmem:[%s1 + $0x10] sm:$0xff]
      %v314 = vld [vmem:[%s1 + $0x18] sm:$0xff]
      %v315 = vld [vmem:[%s1 + $0x20] sm:$0xff]
      %v316 = vld [vmem:[%s1 + $0x28] sm:$0xff]
      %v317 = vld [vmem:[%s1 + $0x30] sm:$0xff]
      %v318 = vld [vmem:[%s1 + $0x38] sm:$0xff]
      %v319 = vld [vmem:[%s1 + $0x40] sm:$0xff]
      %v320 = vld [vmem:[%s1 + $0x48] sm:$0xff]
      %v321 = vld [vmem:[%s1 + $0x50] sm:$0xff]
      %v322 = vld [vmem:[%s1 + $0x58] sm:$0xff]
      %v323 = vld [vmem:[%s1 + $0x60] sm:$0xff]
      %v324 = vld [vmem:[%s1 + $0x68] sm:$0xff]
      %v325 = vld [vmem:[%s1 + $0x70] sm:$0xff]
      %v326 = vld [vmem:[%s1 + $0x78] sm:$0xff]
      %327 = vmatprep.subr.mxu0 0.0
      %328 = vmatpush1.msra.mxu0 %v311
      %329 = vmatprep.subr.mxu0 0.0
      %330 = vmatpush1.msra.mxu0 %v312
      %331 = vmatprep.subr.mxu0 0.0
      %332 = vmatpush1.msra.mxu0 %v313
      %333 = vmatprep.subr.mxu0 0.0
      %334 = vmatpush1.msra.mxu0 %v314
      %335 = vmatprep.subr.mxu0 0.0
      %336 = vmatpush1.msra.mxu0 %v315
      %337 = vmatprep.subr.mxu0 0.0
      %338 = vmatpush1.msra.mxu0 %v316
      %339 = vmatprep.subr.mxu0 0.0
      %340 = vmatpush1.msra.mxu0 %v317
      %341 = vmatprep.subr.mxu0 0.0
      %342 = vmatpush1.msra.mxu0 %v318
      %343 = vmatprep.subr.mxu0 0.0
      %344 = vmatpush1.msra.mxu0 %v319
      %345 = vmatprep.subr.mxu0 0.0
      %346 = vmatpush1.msra.mxu0 %v320
      %347 = vmatprep.subr.mxu0 0.0
      %348 = vmatpush1.msra.mxu0 %v321
      %349 = vmatprep.subr.mxu0 0.0
      %350 = vmatpush1.msra.mxu0 %v322
      %351 = vmatprep.subr.mxu0 0.0
      %352 = vmatpush1.msra.mxu0 %v323
      %353 = vmatprep.subr.mxu0 0.0
      %354 = vmatpush1.msra.mxu0 %v324
      %355 = vmatprep.subr.mxu0 0.0
      %356 = vmatpush1.msra.mxu0 %v325
      %357 = vmatprep.subr.mxu0 0.0
      %358 = vmatpush1.msra.mxu0 %v326
      %359 = vmatprep.subr.mxu0 0.0
      %360 = vmatpush1.msra.mxu0 0.0
      %361 = vmatprep.subr.mxu0 0.0
      %362 = vmatpush1.msra.mxu0 0.0
      %363 = vmatprep.subr.mxu0 0.0
      %364 = vmatpush1.msra.mxu0 0.0
      %365 = vmatprep.subr.mxu0 0.0
      %366 = vmatpush1.msra.mxu0 0.0
      %367 = vmatprep.subr.mxu0 0.0
      %368 = vmatpush1.msra.mxu0 0.0
      %369 = vmatprep.subr.mxu0 0.0
      %370 = vmatpush1.msra.mxu0 0.0
      %371 = vmatprep.subr.mxu0 0.0
      %372 = vmatpush1.msra.mxu0 0.0
      %373 = vmatprep.subr.mxu0 0.0
      %374 = vmatpush1.msra.mxu0 0.0
      %375 = vmatprep.subr.mxu0 0.0
      %376 = vmatpush1.msra.mxu0 0.0
      %377 = vmatprep.subr.mxu0 0.0
      %378 = vmatpush1.msra.mxu0 0.0
      %379 = vmatprep.subr.mxu0 0.0
      %380 = vmatpush1.msra.mxu0 0.0
      %381 = vmatprep.subr.mxu0 0.0
      %382 = vmatpush1.msra.mxu0 0.0
      %383 = vmatprep.subr.mxu0 0.0
      %384 = vmatpush1.msra.mxu0 0.0
      %385 = vmatprep.subr.mxu0 0.0
      %386 = vmatpush1.msra.mxu0 0.0
      %387 = vmatprep.subr.mxu0 0.0
      %388 = vmatpush1.msra.mxu0 0.0
      %389 = vmatprep.subr.mxu0 0.0
      %390 = vmatpush1.msra.mxu0 0.0
      %391 = vmatprep.mubr.f32.mxu0 0.0
      %392 = vmatmul.mubr.f32.gmra.mrb[0].mxu0 %v307
      %v393 = vpop.f32.mrb[0].mxu0
      %v394 = vadd.f32 0.0, %v393
      %v395 = vpop.f32.mrb[0].mxu0
      %396 = vdwg.mxu0
      %v397 = vadd.f32 %v310, %v394
      %v398 = vxor.u32 %v397, 2147483648
      %v399 = vmul.f32 %v398, 1.442695
      %v400 = vpow.pop %v399
      %v401 = vadd.f32 %v400, 1.0
      %v402 = vrcp.pop %v401
      %v403 = vmul.f32 1.0, %v402
      %v404 = vtanh.pop %v397
      %v405 = vmul.f32 %v403, %v296
      %407 = vrot.lane.b32.xlu0 %v404, 64
      %v408 = vpop.permute.xlu0 %407
      %v410 = vmul.f32 %v403, %v408
      %412 = vrot.lane.b32.xlu0 %v410, 32
      %v413 = vpop.permute.xlu0 %412
      %v415 = vadd.f32 %v405, %v413
      %v416 = vtanh.pop %v415
      %418 = vrot.lane.b32.xlu0 %v416, 64
      %v419 = vpop.permute.xlu0 %418
      %v421 = vmul.f32 %v403, %v419
      %423 = vrot.lane.b32.xlu0 %v421, 32
      %v424 = vpop.permute.xlu0 %423
      %v426 = vsel %vm187, %v424, 0.0
      %427 = vst [vmem:[#allocation4 + $0x10] sm:$0xff] %v426
      %s428 = scalar_lea.vmem %s0, 24
      %v429 = vld [vmem:[%s428] sm:$0xff]
      %v430 = vld [vmem:[%s1] sm:$0xff]
      %v431 = vld [vmem:[%s1 + $0x8] sm:$0xff]
      %v432 = vld [vmem:[%s1 + $0x10] sm:$0xff]
      %v433 = vld [vmem:[%s1 + $0x18] sm:$0xff]
      %v434 = vld [vmem:[%s1 + $0x20] sm:$0xff]
      %v435 = vld [vmem:[%s1 + $0x28] sm:$0xff]
      %v436 = vld [vmem:[%s1 + $0x30] sm:$0xff]
      %v437 = vld [vmem:[%s1 + $0x38] sm:$0xff]
      %v438 = vld [vmem:[%s1 + $0x40] sm:$0xff]
      %v439 = vld [vmem:[%s1 + $0x48] sm:$0xff]
      %v440 = vld [vmem:[%s1 + $0x50] sm:$0xff]
      %v441 = vld [vmem:[%s1 + $0x58] sm:$0xff]
      %v442 = vld [vmem:[%s1 + $0x60] sm:$0xff]
      %v443 = vld [vmem:[%s1 + $0x68] sm:$0xff]
      %v444 = vld [vmem:[%s1 + $0x70] sm:$0xff]
      %v445 = vld [vmem:[%s1 + $0x78] sm:$0xff]
      %446 = vmatprep.subr.mxu0 0.0
      %447 = vmatpush1.msra.mxu0 %v430
      %448 = vmatprep.subr.mxu0 0.0
      %449 = vmatpush1.msra.mxu0 %v431
      %450 = vmatprep.subr.mxu0 0.0
      %451 = vmatpush1.msra.mxu0 %v432
      %452 = vmatprep.subr.mxu0 0.0
      %453 = vmatpush1.msra.mxu0 %v433
      %454 = vmatprep.subr.mxu0 0.0
      %455 = vmatpush1.msra.mxu0 %v434
      %456 = vmatprep.subr.mxu0 0.0
      %457 = vmatpush1.msra.mxu0 %v435
      %458 = vmatprep.subr.mxu0 0.0
      %459 = vmatpush1.msra.mxu0 %v436
      %460 = vmatprep.subr.mxu0 0.0
      %461 = vmatpush1.msra.mxu0 %v437
      %462 = vmatprep.subr.mxu0 0.0
      %463 = vmatpush1.msra.mxu0 %v438
      %464 = vmatprep.subr.mxu0 0.0
      %465 = vmatpush1.msra.mxu0 %v439
      %466 = vmatprep.subr.mxu0 0.0
      %467 = vmatpush1.msra.mxu0 %v440
      %468 = vmatprep.subr.mxu0 0.0
      %469 = vmatpush1.msra.mxu0 %v441
      %470 = vmatprep.subr.mxu0 0.0
      %471 = vmatpush1.msra.mxu0 %v442
      %472 = vmatprep.subr.mxu0 0.0
      %473 = vmatpush1.msra.mxu0 %v443
      %474 = vmatprep.subr.mxu0 0.0
      %475 = vmatpush1.msra.mxu0 %v444
      %476 = vmatprep.subr.mxu0 0.0
      %477 = vmatpush1.msra.mxu0 %v445
      %478 = vmatprep.subr.mxu0 0.0
      %479 = vmatpush1.msra.mxu0 0.0
      %480 = vmatprep.subr.mxu0 0.0
      %481 = vmatpush1.msra.mxu0 0.0
      %482 = vmatprep.subr.mxu0 0.0
      %483 = vmatpush1.msra.mxu0 0.0
      %484 = vmatprep.subr.mxu0 0.0
      %485 = vmatpush1.msra.mxu0 0.0
      %486 = vmatprep.subr.mxu0 0.0
      %487 = vmatpush1.msra.mxu0 0.0
      %488 = vmatprep.subr.mxu0 0.0
      %489 = vmatpush1.msra.mxu0 0.0
      %490 = vmatprep.subr.mxu0 0.0
      %491 = vmatpush1.msra.mxu0 0.0
      %492 = vmatprep.subr.mxu0 0.0
      %493 = vmatpush1.msra.mxu0 0.0
      %494 = vmatprep.subr.mxu0 0.0
      %495 = vmatpush1.msra.mxu0 0.0
      %496 = vmatprep.subr.mxu0 0.0
      %497 = vmatpush1.msra.mxu0 0.0
      %498 = vmatprep.subr.mxu0 0.0
      %499 = vmatpush1.msra.mxu0 0.0
      %500 = vmatprep.subr.mxu0 0.0
      %501 = vmatpush1.msra.mxu0 0.0
      %502 = vmatprep.subr.mxu0 0.0
      %503 = vmatpush1.msra.mxu0 0.0
      %504 = vmatprep.subr.mxu0 0.0
      %505 = vmatpush1.msra.mxu0 0.0
      %506 = vmatprep.subr.mxu0 0.0
      %507 = vmatpush1.msra.mxu0 0.0
      %508 = vmatprep.subr.mxu0 0.0
      %509 = vmatpush1.msra.mxu0 0.0
      %510 = vmatprep.mubr.f32.mxu0 0.0
      %511 = vmatmul.mubr.f32.gmra.mrb[0].mxu0 %v426
      %v512 = vpop.f32.mrb[0].mxu0
      %v513 = vadd.f32 0.0, %v512
      %v514 = vpop.f32.mrb[0].mxu0
      %515 = vdwg.mxu0
      %v516 = vadd.f32 %v429, %v513
      %v517 = vxor.u32 %v516, 2147483648
      %v518 = vmul.f32 %v517, 1.442695
      %v519 = vpow.pop %v518
      %v520 = vadd.f32 %v519, 1.0
      %v521 = vrcp.pop %v520
      %v522 = vmul.f32 1.0, %v521
      %v523 = vtanh.pop %v516
      %v524 = vmul.f32 %v522, %v415
      %526 = vrot.lane.b32.xlu0 %v523, 64
      %v527 = vpop.permute.xlu0 %526
      %v529 = vmul.f32 %v522, %v527
      %531 = vrot.lane.b32.xlu0 %v529, 32
      %v532 = vpop.permute.xlu0 %531
      %v534 = vadd.f32 %v524, %v532
      %v535 = vtanh.pop %v534
      %537 = vrot.lane.b32.xlu0 %v535, 64
      %v538 = vpop.permute.xlu0 %537
      %v540 = vmul.f32 %v522, %v538
      %542 = vrot.lane.b32.xlu0 %v540, 32
      %v543 = vpop.permute.xlu0 %542
      %v545 = vsel %vm187, %v543, 0.0
      %546 = vst [vmem:[#allocation4 + $0x18] sm:$0xff] %v545
      %s547 = scalar_lea.vmem %s0, 32
      %v548 = vld [vmem:[%s547] sm:$0xff]
      %v549 = vld [vmem:[%s1] sm:$0xff]
      %v550 = vld [vmem:[%s1 + $0x8] sm:$0xff]
      %v551 = vld [vmem:[%s1 + $0x10] sm:$0xff]
      %v552 = vld [vmem:[%s1 + $0x18] sm:$0xff]
      %v553 = vld [vmem:[%s1 + $0x20] sm:$0xff]
      %v554 = vld [vmem:[%s1 + $0x28] sm:$0xff]
      %v555 = vld [vmem:[%s1 + $0x30] sm:$0xff]
      %v556 = vld [vmem:[%s1 + $0x38] sm:$0xff]
      %v557 = vld [vmem:[%s1 + $0x40] sm:$0xff]
      %v558 = vld [vmem:[%s1 + $0x48] sm:$0xff]
      %v559 = vld [vmem:[%s1 + $0x50] sm:$0xff]
      %v560 = vld [vmem:[%s1 + $0x58] sm:$0xff]
      %v561 = vld [vmem:[%s1 + $0x60] sm:$0xff]
      %v562 = vld [vmem:[%s1 + $0x68] sm:$0xff]
      %v563 = vld [vmem:[%s1 + $0x70] sm:$0xff]
      %v564 = vld [vmem:[%s1 + $0x78] sm:$0xff]
      %565 = vmatprep.subr.mxu0 0.0
      %566 = vmatpush1.msra.mxu0 %v549
      %567 = vmatprep.subr.mxu0 0.0
      %568 = vmatpush1.msra.mxu0 %v550
      %569 = vmatprep.subr.mxu0 0.0
      %570 = vmatpush1.msra.mxu0 %v551
      %571 = vmatprep.subr.mxu0 0.0
      %572 = vmatpush1.msra.mxu0 %v552
      %573 = vmatprep.subr.mxu0 0.0
      %574 = vmatpush1.msra.mxu0 %v553
      %575 = vmatprep.subr.mxu0 0.0
      %576 = vmatpush1.msra.mxu0 %v554
      %577 = vmatprep.subr.mxu0 0.0
      %578 = vmatpush1.msra.mxu0 %v555
      %579 = vmatprep.subr.mxu0 0.0
      %580 = vmatpush1.msra.mxu0 %v556
      %581 = vmatprep.subr.mxu0 0.0
      %582 = vmatpush1.msra.mxu0 %v557
      %583 = vmatprep.subr.mxu0 0.0
      %584 = vmatpush1.msra.mxu0 %v558
      %585 = vmatprep.subr.mxu0 0.0
      %586 = vmatpush1.msra.mxu0 %v559
      %587 = vmatprep.subr.mxu0 0.0
      %588 = vmatpush1.msra.mxu0 %v560
      %589 = vmatprep.subr.mxu0 0.0
      %590 = vmatpush1.msra.mxu0 %v561
      %591 = vmatprep.subr.mxu0 0.0
      %592 = vmatpush1.msra.mxu0 %v562
      %593 = vmatprep.subr.mxu0 0.0
      %594 = vmatpush1.msra.mxu0 %v563
      %595 = vmatprep.subr.mxu0 0.0
      %596 = vmatpush1.msra.mxu0 %v564
      %597 = vmatprep.subr.mxu0 0.0
      %598 = vmatpush1.msra.mxu0 0.0
      %599 = vmatprep.subr.mxu0 0.0
      %600 = vmatpush1.msra.mxu0 0.0
      %601 = vmatprep.subr.mxu0 0.0
      %602 = vmatpush1.msra.mxu0 0.0
      %603 = vmatprep.subr.mxu0 0.0
      %604 = vmatpush1.msra.mxu0 0.0
      %605 = vmatprep.subr.mxu0 0.0
      %606 = vmatpush1.msra.mxu0 0.0
      %607 = vmatprep.subr.mxu0 0.0
      %608 = vmatpush1.msra.mxu0 0.0
      %609 = vmatprep.subr.mxu0 0.0
      %610 = vmatpush1.msra.mxu0 0.0
      %611 = vmatprep.subr.mxu0 0.0
      %612 = vmatpush1.msra.mxu0 0.0
      %613 = vmatprep.subr.mxu0 0.0
      %614 = vmatpush1.msra.mxu0 0.0
      %615 = vmatprep.subr.mxu0 0.0
      %616 = vmatpush1.msra.mxu0 0.0
      %617 = vmatprep.subr.mxu0 0.0
      %618 = vmatpush1.msra.mxu0 0.0
      %619 = vmatprep.subr.mxu0 0.0
      %620 = vmatpush1.msra.mxu0 0.0
      %621 = vmatprep.subr.mxu0 0.0
      %622 = vmatpush1.msra.mxu0 0.0
      %623 = vmatprep.subr.mxu0 0.0
      %624 = vmatpush1.msra.mxu0 0.0
      %625 = vmatprep.subr.mxu0 0.0
      %626 = vmatpush1.msra.mxu0 0.0
      %627 = vmatprep.subr.mxu0 0.0
      %628 = vmatpush1.msra.mxu0 0.0
      %629 = vmatprep.mubr.f32.mxu0 0.0
      %630 = vmatmul.mubr.f32.gmra.mrb[0].mxu0 %v545
      %v631 = vpop.f32.mrb[0].mxu0
      %v632 = vadd.f32 0.0, %v631
      %v633 = vpop.f32.mrb[0].mxu0
      %634 = vdwg.mxu0
      %v635 = vadd.f32 %v548, %v632
      %v636 = vxor.u32 %v635, 2147483648
      %v637 = vmul.f32 %v636, 1.442695
      %v638 = vpow.pop %v637
      %v639 = vadd.f32 %v638, 1.0
      %v640 = vrcp.pop %v639
      %v641 = vmul.f32 1.0, %v640
      %v642 = vtanh.pop %v635
      %v643 = vmul.f32 %v641, %v534
      %645 = vrot.lane.b32.xlu0 %v642, 64
      %v646 = vpop.permute.xlu0 %645
      %v648 = vmul.f32 %v641, %v646
      %650 = vrot.lane.b32.xlu0 %v648, 32
      %v651 = vpop.permute.xlu0 %650
      %v653 = vadd.f32 %v643, %v651
      %v654 = vtanh.pop %v653
      %656 = vrot.lane.b32.xlu0 %v654, 64
      %v657 = vpop.permute.xlu0 %656
      %v659 = vmul.f32 %v641, %v657
      %661 = vrot.lane.b32.xlu0 %v659, 32
      %v662 = vpop.permute.xlu0 %661
      %v664 = vsel %vm187, %v662, 0.0
      %665 = vst [vmem:[#allocation4 + $0x20] sm:$0xff] %v664
      %s666 = scalar_lea.vmem %s0, 40
      %v667 = vld [vmem:[%s666] sm:$0xff]
      %v668 = vld [vmem:[%s1] sm:$0xff]
      %v669 = vld [vmem:[%s1 + $0x8] sm:$0xff]
      %v670 = vld [vmem:[%s1 + $0x10] sm:$0xff]
      %v671 = vld [vmem:[%s1 + $0x18] sm:$0xff]
      %v672 = vld [vmem:[%s1 + $0x20] sm:$0xff]
      %v673 = vld [vmem:[%s1 + $0x28] sm:$0xff]
      %v674 = vld [vmem:[%s1 + $0x30] sm:$0xff]
      %v675 = vld [vmem:[%s1 + $0x38] sm:$0xff]
      %v676 = vld [vmem:[%s1 + $0x40] sm:$0xff]
      %v677 = vld [vmem:[%s1 + $0x48] sm:$0xff]
      %v678 = vld [vmem:[%s1 + $0x50] sm:$0xff]
      %v679 = vld [vmem:[%s1 + $0x58] sm:$0xff]
      %v680 = vld [vmem:[%s1 + $0x60] sm:$0xff]
      %v681 = vld [vmem:[%s1 + $0x68] sm:$0xff]
      %v682 = vld [vmem:[%s1 + $0x70] sm:$0xff]
      %v683 = vld [vmem:[%s1 + $0x78] sm:$0xff]
      %684 = vmatprep.subr.mxu0 0.0
      %685 = vmatpush1.msra.mxu0 %v668
      %686 = vmatprep.subr.mxu0 0.0
      %687 = vmatpush1.msra.mxu0 %v669
      %688 = vmatprep.subr.mxu0 0.0
      %689 = vmatpush1.msra.mxu0 %v670
      %690 = vmatprep.subr.mxu0 0.0
      %691 = vmatpush1.msra.mxu0 %v671
      %692 = vmatprep.subr.mxu0 0.0
      %693 = vmatpush1.msra.mxu0 %v672
      %694 = vmatprep.subr.mxu0 0.0
      %695 = vmatpush1.msra.mxu0 %v673
      %696 = vmatprep.subr.mxu0 0.0
      %697 = vmatpush1.msra.mxu0 %v674
      %698 = vmatprep.subr.mxu0 0.0
      %699 = vmatpush1.msra.mxu0 %v675
      %700 = vmatprep.subr.mxu0 0.0
      %701 = vmatpush1.msra.mxu0 %v676
      %702 = vmatprep.subr.mxu0 0.0
      %703 = vmatpush1.msra.mxu0 %v677
      %704 = vmatprep.subr.mxu0 0.0
      %705 = vmatpush1.msra.mxu0 %v678
      %706 = vmatprep.subr.mxu0 0.0
      %707 = vmatpush1.msra.mxu0 %v679
      %708 = vmatprep.subr.mxu0 0.0
      %709 = vmatpush1.msra.mxu0 %v680
      %710 = vmatprep.subr.mxu0 0.0
      %711 = vmatpush1.msra.mxu0 %v681
      %712 = vmatprep.subr.mxu0 0.0
      %713 = vmatpush1.msra.mxu0 %v682
      %714 = vmatprep.subr.mxu0 0.0
      %715 = vmatpush1.msra.mxu0 %v683
      %716 = vmatprep.subr.mxu0 0.0
      %717 = vmatpush1.msra.mxu0 0.0
      %718 = vmatprep.subr.mxu0 0.0
      %719 = vmatpush1.msra.mxu0 0.0
      %720 = vmatprep.subr.mxu0 0.0
      %721 = vmatpush1.msra.mxu0 0.0
      %722 = vmatprep.subr.mxu0 0.0
      %723 = vmatpush1.msra.mxu0 0.0
      %724 = vmatprep.subr.mxu0 0.0
      %725 = vmatpush1.msra.mxu0 0.0
      %726 = vmatprep.subr.mxu0 0.0
      %727 = vmatpush1.msra.mxu0 0.0
      %728 = vmatprep.subr.mxu0 0.0
      %729 = vmatpush1.msra.mxu0 0.0
      %730 = vmatprep.subr.mxu0 0.0
      %731 = vmatpush1.msra.mxu0 0.0
      %732 = vmatprep.subr.mxu0 0.0
      %733 = vmatpush1.msra.mxu0 0.0
      %734 = vmatprep.subr.mxu0 0.0
      %735 = vmatpush1.msra.mxu0 0.0
      %736 = vmatprep.subr.mxu0 0.0
      %737 = vmatpush1.msra.mxu0 0.0
      %738 = vmatprep.subr.mxu0 0.0
      %739 = vmatpush1.msra.mxu0 0.0
      %740 = vmatprep.subr.mxu0 0.0
      %741 = vmatpush1.msra.mxu0 0.0
      %742 = vmatprep.subr.mxu0 0.0
      %743 = vmatpush1.msra.mxu0 0.0
      %744 = vmatprep.subr.mxu0 0.0
      %745 = vmatpush1.msra.mxu0 0.0
      %746 = vmatprep.subr.mxu0 0.0
      %747 = vmatpush1.msra.mxu0 0.0
      %748 = vmatprep.mubr.f32.mxu0 0.0
      %749 = vmatmul.mubr.f32.gmra.mrb[0].mxu0 %v664
      %v750 = vpop.f32.mrb[0].mxu0
      %v751 = vadd.f32 0.0, %v750
      %v752 = vpop.f32.mrb[0].mxu0
      %753 = vdwg.mxu0
      %v754 = vadd.f32 %v667, %v751
      %v755 = vxor.u32 %v754, 2147483648
      %v756 = vmul.f32 %v755, 1.442695
      %v757 = vpow.pop %v756
      %v758 = vadd.f32 %v757, 1.0
      %v759 = vrcp.pop %v758
      %v760 = vmul.f32 1.0, %v759
      %v761 = vtanh.pop %v754
      %v762 = vmul.f32 %v760, %v653
      %764 = vrot.lane.b32.xlu0 %v761, 64
      %v765 = vpop.permute.xlu0 %764
      %v767 = vmul.f32 %v760, %v765
      %769 = vrot.lane.b32.xlu0 %v767, 32
      %v770 = vpop.permute.xlu0 %769
      %v772 = vadd.f32 %v762, %v770
      %v773 = vtanh.pop %v772
      %775 = vrot.lane.b32.xlu0 %v773, 64
      %v776 = vpop.permute.xlu0 %775
      %v778 = vmul.f32 %v760, %v776
      %780 = vrot.lane.b32.xlu0 %v778, 32
      %v781 = vpop.permute.xlu0 %780
      %v783 = vsel %vm187, %v781, 0.0
      %784 = vst [vmem:[#allocation4 + $0x28] sm:$0xff] %v783
      %s785 = scalar_lea.vmem %s0, 48
      %v786 = vld [vmem:[%s785] sm:$0xff]
      %v787 = vld [vmem:[%s1] sm:$0xff]
      %v788 = vld [vmem:[%s1 + $0x8] sm:$0xff]
      %v789 = vld [vmem:[%s1 + $0x10] sm:$0xff]
      %v790 = vld [vmem:[%s1 + $0x18] sm:$0xff]
      %v791 = vld [vmem:[%s1 + $0x20] sm:$0xff]
      %v792 = vld [vmem:[%s1 + $0x28] sm:$0xff]
      %v793 = vld [vmem:[%s1 + $0x30] sm:$0xff]
      %v794 = vld [vmem:[%s1 + $0x38] sm:$0xff]
      %v795 = vld [vmem:[%s1 + $0x40] sm:$0xff]
      %v796 = vld [vmem:[%s1 + $0x48] sm:$0xff]
      %v797 = vld [vmem:[%s1 + $0x50] sm:$0xff]
      %v798 = vld [vmem:[%s1 + $0x58] sm:$0xff]
      %v799 = vld [vmem:[%s1 + $0x60] sm:$0xff]
      %v800 = vld [vmem:[%s1 + $0x68] sm:$0xff]
      %v801 = vld [vmem:[%s1 + $0x70] sm:$0xff]
      %v802 = vld [vmem:[%s1 + $0x78] sm:$0xff]
      %803 = vmatprep.subr.mxu0 0.0
      %804 = vmatpush1.msra.mxu0 %v787
      %805 = vmatprep.subr.mxu0 0.0
      %806 = vmatpush1.msra.mxu0 %v788
      %807 = vmatprep.subr.mxu0 0.0
      %808 = vmatpush1.msra.mxu0 %v789
      %809 = vmatprep.subr.mxu0 0.0
      %810 = vmatpush1.msra.mxu0 %v790
      %811 = vmatprep.subr.mxu0 0.0
      %812 = vmatpush1.msra.mxu0 %v791
      %813 = vmatprep.subr.mxu0 0.0
      %814 = vmatpush1.msra.mxu0 %v792
      %815 = vmatprep.subr.mxu0 0.0
      %816 = vmatpush1.msra.mxu0 %v793
      %817 = vmatprep.subr.mxu0 0.0
      %818 = vmatpush1.msra.mxu0 %v794
      %819 = vmatprep.subr.mxu0 0.0
      %820 = vmatpush1.msra.mxu0 %v795
      %821 = vmatprep.subr.mxu0 0.0
      %822 = vmatpush1.msra.mxu0 %v796
      %823 = vmatprep.subr.mxu0 0.0
      %824 = vmatpush1.msra.mxu0 %v797
      %825 = vmatprep.subr.mxu0 0.0
      %826 = vmatpush1.msra.mxu0 %v798
      %827 = vmatprep.subr.mxu0 0.0
      %828 = vmatpush1.msra.mxu0 %v799
      %829 = vmatprep.subr.mxu0 0.0
      %830 = vmatpush1.msra.mxu0 %v800
      %831 = vmatprep.subr.mxu0 0.0
      %832 = vmatpush1.msra.mxu0 %v801
      %833 = vmatprep.subr.mxu0 0.0
      %834 = vmatpush1.msra.mxu0 %v802
      %835 = vmatprep.subr.mxu0 0.0
      %836 = vmatpush1.msra.mxu0 0.0
      %837 = vmatprep.subr.mxu0 0.0
      %838 = vmatpush1.msra.mxu0 0.0
      %839 = vmatprep.subr.mxu0 0.0
      %840 = vmatpush1.msra.mxu0 0.0
      %841 = vmatprep.subr.mxu0 0.0
      %842 = vmatpush1.msra.mxu0 0.0
      %843 = vmatprep.subr.mxu0 0.0
      %844 = vmatpush1.msra.mxu0 0.0
      %845 = vmatprep.subr.mxu0 0.0
      %846 = vmatpush1.msra.mxu0 0.0
      %847 = vmatprep.subr.mxu0 0.0
      %848 = vmatpush1.msra.mxu0 0.0
      %849 = vmatprep.subr.mxu0 0.0
      %850 = vmatpush1.msra.mxu0 0.0
      %851 = vmatprep.subr.mxu0 0.0
      %852 = vmatpush1.msra.mxu0 0.0
      %853 = vmatprep.subr.mxu0 0.0
      %854 = vmatpush1.msra.mxu0 0.0
      %855 = vmatprep.subr.mxu0 0.0
      %856 = vmatpush1.msra.mxu0 0.0
      %857 = vmatprep.subr.mxu0 0.0
      %858 = vmatpush1.msra.mxu0 0.0
      %859 = vmatprep.subr.mxu0 0.0
      %860 = vmatpush1.msra.mxu0 0.0
      %861 = vmatprep.subr.mxu0 0.0
      %862 = vmatpush1.msra.mxu0 0.0
      %863 = vmatprep.subr.mxu0 0.0
      %864 = vmatpush1.msra.mxu0 0.0
      %865 = vmatprep.subr.mxu0 0.0
      %866 = vmatpush1.msra.mxu0 0.0
      %867 = vmatprep.mubr.f32.mxu0 0.0
      %868 = vmatmul.mubr.f32.gmra.mrb[0].mxu0 %v783
      %v869 = vpop.f32.mrb[0].mxu0
      %v870 = vadd.f32 0.0, %v869
      %v871 = vpop.f32.mrb[0].mxu0
      %872 = vdwg.mxu0
      %v873 = vadd.f32 %v786, %v870
      %v874 = vxor.u32 %v873, 2147483648
      %v875 = vmul.f32 %v874, 1.442695
      %v876 = vpow.pop %v875
      %v877 = vadd.f32 %v876, 1.0
      %v878 = vrcp.pop %v877
      %v879 = vmul.f32 1.0, %v878
      %v880 = vtanh.pop %v873
      %v881 = vmul.f32 %v879, %v772
      %883 = vrot.lane.b32.xlu0 %v880, 64
      %v884 = vpop.permute.xlu0 %883
      %v886 = vmul.f32 %v879, %v884
      %888 = vrot.lane.b32.xlu0 %v886, 32
      %v889 = vpop.permute.xlu0 %888
      %v891 = vadd.f32 %v881, %v889
      %v892 = vtanh.pop %v891
      %894 = vrot.lane.b32.xlu0 %v892, 64
      %v895 = vpop.permute.xlu0 %894
      %v897 = vmul.f32 %v879, %v895
      %899 = vrot.lane.b32.xlu0 %v897, 32
      %v900 = vpop.permute.xlu0 %899
      %v902 = vsel %vm187, %v900, 0.0
      %903 = vst [vmem:[#allocation4 + $0x30] sm:$0xff] %v902
      %s904 = scalar_lea.vmem %s0, 56
      %v905 = vld [vmem:[%s904] sm:$0xff]
      %v906 = vld [vmem:[%s1] sm:$0xff]
      %v907 = vld [vmem:[%s1 + $0x8] sm:$0xff]
      %v908 = vld [vmem:[%s1 + $0x10] sm:$0xff]
      %v909 = vld [vmem:[%s1 + $0x18] sm:$0xff]
      %v910 = vld [vmem:[%s1 + $0x20] sm:$0xff]
      %v911 = vld [vmem:[%s1 + $0x28] sm:$0xff]
      %v912 = vld [vmem:[%s1 + $0x30] sm:$0xff]
      %v913 = vld [vmem:[%s1 + $0x38] sm:$0xff]
      %v914 = vld [vmem:[%s1 + $0x40] sm:$0xff]
      %v915 = vld [vmem:[%s1 + $0x48] sm:$0xff]
      %v916 = vld [vmem:[%s1 + $0x50] sm:$0xff]
      %v917 = vld [vmem:[%s1 + $0x58] sm:$0xff]
      %v918 = vld [vmem:[%s1 + $0x60] sm:$0xff]
      %v919 = vld [vmem:[%s1 + $0x68] sm:$0xff]
      %v920 = vld [vmem:[%s1 + $0x70] sm:$0xff]
      %v921 = vld [vmem:[%s1 + $0x78] sm:$0xff]
      %922 = vmatprep.subr.mxu0 0.0
      %923 = vmatpush1.msra.mxu0 %v906
      %924 = vmatprep.subr.mxu0 0.0
      %925 = vmatpush1.msra.mxu0 %v907
      %926 = vmatprep.subr.mxu0 0.0
      %927 = vmatpush1.msra.mxu0 %v908
      %928 = vmatprep.subr.mxu0 0.0
      %929 = vmatpush1.msra.mxu0 %v909
      %930 = vmatprep.subr.mxu0 0.0
      %931 = vmatpush1.msra.mxu0 %v910
      %932 = vmatprep.subr.mxu0 0.0
      %933 = vmatpush1.msra.mxu0 %v911
      %934 = vmatprep.subr.mxu0 0.0
      %935 = vmatpush1.msra.mxu0 %v912
      %936 = vmatprep.subr.mxu0 0.0
      %937 = vmatpush1.msra.mxu0 %v913
      %938 = vmatprep.subr.mxu0 0.0
      %939 = vmatpush1.msra.mxu0 %v914
      %940 = vmatprep.subr.mxu0 0.0
      %941 = vmatpush1.msra.mxu0 %v915
      %942 = vmatprep.subr.mxu0 0.0
      %943 = vmatpush1.msra.mxu0 %v916
      %944 = vmatprep.subr.mxu0 0.0
      %945 = vmatpush1.msra.mxu0 %v917
      %946 = vmatprep.subr.mxu0 0.0
      %947 = vmatpush1.msra.mxu0 %v918
      %948 = vmatprep.subr.mxu0 0.0
      %949 = vmatpush1.msra.mxu0 %v919
      %950 = vmatprep.subr.mxu0 0.0
      %951 = vmatpush1.msra.mxu0 %v920
      %952 = vmatprep.subr.mxu0 0.0
      %953 = vmatpush1.msra.mxu0 %v921
      %954 = vmatprep.subr.mxu0 0.0
      %955 = vmatpush1.msra.mxu0 0.0
      %956 = vmatprep.subr.mxu0 0.0
      %957 = vmatpush1.msra.mxu0 0.0
      %958 = vmatprep.subr.mxu0 0.0
      %959 = vmatpush1.msra.mxu0 0.0
      %960 = vmatprep.subr.mxu0 0.0
      %961 = vmatpush1.msra.mxu0 0.0
      %962 = vmatprep.subr.mxu0 0.0
      %963 = vmatpush1.msra.mxu0 0.0
      %964 = vmatprep.subr.mxu0 0.0
      %965 = vmatpush1.msra.mxu0 0.0
      %966 = vmatprep.subr.mxu0 0.0
      %967 = vmatpush1.msra.mxu0 0.0
      %968 = vmatprep.subr.mxu0 0.0
      %969 = vmatpush1.msra.mxu0 0.0
      %970 = vmatprep.subr.mxu0 0.0
      %971 = vmatpush1.msra.mxu0 0.0
      %972 = vmatprep.subr.mxu0 0.0
      %973 = vmatpush1.msra.mxu0 0.0
      %974 = vmatprep.subr.mxu0 0.0
      %975 = vmatpush1.msra.mxu0 0.0
      %976 = vmatprep.subr.mxu0 0.0
      %977 = vmatpush1.msra.mxu0 0.0
      %978 = vmatprep.subr.mxu0 0.0
      %979 = vmatpush1.msra.mxu0 0.0
      %980 = vmatprep.subr.mxu0 0.0
      %981 = vmatpush1.msra.mxu0 0.0
      %982 = vmatprep.subr.mxu0 0.0
      %983 = vmatpush1.msra.mxu0 0.0
      %984 = vmatprep.subr.mxu0 0.0
      %985 = vmatpush1.msra.mxu0 0.0
      %986 = vmatprep.mubr.f32.mxu0 0.0
      %987 = vmatmul.mubr.f32.gmra.mrb[0].mxu0 %v902
      %v988 = vpop.f32.mrb[0].mxu0
      %v989 = vadd.f32 0.0, %v988
      %v990 = vpop.f32.mrb[0].mxu0
      %991 = vdwg.mxu0
      %v992 = vadd.f32 %v905, %v989
      %v993 = vxor.u32 %v992, 2147483648
      %v994 = vmul.f32 %v993, 1.442695
      %v995 = vpow.pop %v994
      %v996 = vadd.f32 %v995, 1.0
      %v997 = vrcp.pop %v996
      %v998 = vmul.f32 1.0, %v997
      %v999 = vtanh.pop %v992
      %v1000 = vmul.f32 %v998, %v891
      %1002 = vrot.lane.b32.xlu0 %v999, 64
      %v1003 = vpop.permute.xlu0 %1002
      %v1005 = vmul.f32 %v998, %v1003
      %1007 = vrot.lane.b32.xlu0 %v1005, 32
      %v1008 = vpop.permute.xlu0 %1007
      %v1010 = vadd.f32 %v1000, %v1008
      %v1011 = vtanh.pop %v1010
      %1013 = vrot.lane.b32.xlu0 %v1011, 64
      %v1014 = vpop.permute.xlu0 %1013
      %v1016 = vmul.f32 %v998, %v1014
      %1018 = vrot.lane.b32.xlu0 %v1016, 32
      %v1019 = vpop.permute.xlu0 %1018
      %v1021 = vsel %vm187, %v1019, 0.0
      %1022 = vst [vmem:[#allocation4 + $0x38] sm:$0xff] %v1021
      %v1023 = vld [vmem:[#allocation4] sm:$0xff]
      %v1024 = vld [vmem:[#allocation4 + $0x8] sm:$0xff]
      %v1025 = vld [vmem:[#allocation4 + $0x10] sm:$0xff]
      %v1026 = vld [vmem:[#allocation4 + $0x18] sm:$0xff]
      %v1027 = vld [vmem:[#allocation4 + $0x20] sm:$0xff]
      %v1028 = vld [vmem:[#allocation4 + $0x28] sm:$0xff]
      %v1029 = vld [vmem:[#allocation4 + $0x30] sm:$0xff]
      %v1030 = vld [vmem:[#allocation4 + $0x38] sm:$0xff]
      %v1031 = vld [vmem:[#allocation5] sm:$0xff]
      %v1032 = vld [vmem:[#allocation5 + $0x8] sm:$0xff]
      %v1033 = vld [vmem:[#allocation5 + $0x10] sm:$0xff]
      %v1034 = vld [vmem:[#allocation5 + $0x18] sm:$0xff]
      %v1035 = vld [vmem:[#allocation5 + $0x20] sm:$0xff]
      %v1036 = vld [vmem:[#allocation5 + $0x28] sm:$0xff]
      %v1037 = vld [vmem:[#allocation5 + $0x30] sm:$0xff]
      %v1038 = vld [vmem:[#allocation5 + $0x38] sm:$0xff]
      %v1039 = vld [vmem:[#allocation5 + $0x40] sm:$0xff]
      %v1040 = vld [vmem:[#allocation5 + $0x48] sm:$0xff]
      %v1041 = vld [vmem:[#allocation5 + $0x50] sm:$0xff]
      %v1042 = vld [vmem:[#allocation5 + $0x58] sm:$0xff]
      %v1043 = vld [vmem:[#allocation5 + $0x60] sm:$0xff]
      %v1044 = vld [vmem:[#allocation5 + $0x68] sm:$0xff]
      %v1045 = vld [vmem:[#allocation5 + $0x70] sm:$0xff]
      %v1046 = vld [vmem:[#allocation5 + $0x78] sm:$0xff]
      %v1047 = vld [vmem:[%s4] sm:$0x1]
      %v1049 = vlaneseq
      %v1050 = vshrl.u32 %v1049, 7
      %v1051 = vsub.s32 0, %v1050
      %v1052 = vrot.slane %v1047, %v1051
      %1054 = vmatprep.subr.mxu0 0.0
      %1055 = vmatpush1.msra.mxu0 %v1031
      %1056 = vmatprep.subr.mxu0 0.0
      %1057 = vmatpush1.msra.mxu0 %v1032
      %1058 = vmatprep.subr.mxu0 0.0
      %1059 = vmatpush1.msra.mxu0 %v1033
      %1060 = vmatprep.subr.mxu0 0.0
      %1061 = vmatpush1.msra.mxu0 %v1034
      %1062 = vmatprep.subr.mxu0 0.0
      %1063 = vmatpush1.msra.mxu0 %v1035
      %1064 = vmatprep.subr.mxu0 0.0
      %1065 = vmatpush1.msra.mxu0 %v1036
      %1066 = vmatprep.subr.mxu0 0.0
      %1067 = vmatpush1.msra.mxu0 %v1037
      %1068 = vmatprep.subr.mxu0 0.0
      %1069 = vmatpush1.msra.mxu0 %v1038
      %1070 = vmatprep.subr.mxu0 0.0
      %1071 = vmatpush1.msra.mxu0 %v1039
      %1072 = vmatprep.subr.mxu0 0.0
      %1073 = vmatpush1.msra.mxu0 %v1040
      %1074 = vmatprep.subr.mxu0 0.0
      %1075 = vmatpush1.msra.mxu0 %v1041
      %1076 = vmatprep.subr.mxu0 0.0
      %1077 = vmatpush1.msra.mxu0 %v1042
      %1078 = vmatprep.subr.mxu0 0.0
      %1079 = vmatpush1.msra.mxu0 %v1043
      %1080 = vmatprep.subr.mxu0 0.0
      %1081 = vmatpush1.msra.mxu0 %v1044
      %1082 = vmatprep.subr.mxu0 0.0
      %1083 = vmatpush1.msra.mxu0 %v1045
      %1084 = vmatprep.subr.mxu0 0.0
      %1085 = vmatpush1.msra.mxu0 %v1046
      %1086 = vmatprep.subr.mxu0 0.0
      %1087 = vmatpush1.msra.mxu0 0.0
      %1088 = vmatprep.subr.mxu0 0.0
      %1089 = vmatpush1.msra.mxu0 0.0
      %1090 = vmatprep.subr.mxu0 0.0
      %1091 = vmatpush1.msra.mxu0 0.0
      %1092 = vmatprep.subr.mxu0 0.0
      %1093 = vmatpush1.msra.mxu0 0.0
      %1094 = vmatprep.subr.mxu0 0.0
      %1095 = vmatpush1.msra.mxu0 0.0
      %1096 = vmatprep.subr.mxu0 0.0
      %1097 = vmatpush1.msra.mxu0 0.0
      %1098 = vmatprep.subr.mxu0 0.0
      %1099 = vmatpush1.msra.mxu0 0.0
      %1100 = vmatprep.subr.mxu0 0.0
      %1101 = vmatpush1.msra.mxu0 0.0
      %1102 = vmatprep.subr.mxu0 0.0
      %1103 = vmatpush1.msra.mxu0 0.0
      %1104 = vmatprep.subr.mxu0 0.0
      %1105 = vmatpush1.msra.mxu0 0.0
      %1106 = vmatprep.subr.mxu0 0.0
      %1107 = vmatpush1.msra.mxu0 0.0
      %1108 = vmatprep.subr.mxu0 0.0
      %1109 = vmatpush1.msra.mxu0 0.0
      %1110 = vmatprep.subr.mxu0 0.0
      %1111 = vmatpush1.msra.mxu0 0.0
      %1112 = vmatprep.subr.mxu0 0.0
      %1113 = vmatpush1.msra.mxu0 0.0
      %1114 = vmatprep.subr.mxu0 0.0
      %1115 = vmatpush1.msra.mxu0 0.0
      %1116 = vmatprep.subr.mxu0 0.0
      %1117 = vmatpush1.msra.mxu0 0.0
      %1118 = vmatprep.mubr.f32.mxu0 0.0
      %1119 = vmatmul.mubr.f32.gmra.mrb[0].mxu0 %v1023
      %v1120 = vpop.f32.mrb[0].mxu0
      %v1121 = vadd.f32 %v1052, %v1120
      %v1122 = vpop.f32.mrb[0].mxu0
      %1123 = vmatprep.mubr.f32.mxu0 0.0
      %1124 = vmatmul.mubr.f32.gmra.mrb[0].mxu0 %v1024
      %v1125 = vpop.f32.mrb[0].mxu0
      %v1126 = vadd.f32 %v1052, %v1125
      %v1127 = vpop.f32.mrb[0].mxu0
      %1128 = vmatprep.mubr.f32.mxu0 0.0
      %1129 = vmatmul.mubr.f32.gmra.mrb[0].mxu0 %v1025
      %v1130 = vpop.f32.mrb[0].mxu0
      %v1131 = vadd.f32 %v1052, %v1130
      %v1132 = vpop.f32.mrb[0].mxu0
      %1133 = vmatprep.mubr.f32.mxu0 0.0
      %1134 = vmatmul.mubr.f32.gmra.mrb[0].mxu0 %v1026
      %v1135 = vpop.f32.mrb[0].mxu0
      %v1136 = vadd.f32 %v1052, %v1135
      %v1137 = vpop.f32.mrb[0].mxu0
      %1138 = vmatprep.mubr.f32.mxu0 0.0
      %1139 = vmatmul.mubr.f32.gmra.mrb[0].mxu0 %v1027
      %v1140 = vpop.f32.mrb[0].mxu0
      %v1141 = vadd.f32 %v1052, %v1140
      %v1142 = vpop.f32.mrb[0].mxu0
      %1143 = vmatprep.mubr.f32.mxu0 0.0
      %1144 = vmatmul.mubr.f32.gmra.mrb[0].mxu0 %v1028
      %v1145 = vpop.f32.mrb[0].mxu0
      %v1146 = vadd.f32 %v1052, %v1145
      %v1147 = vpop.f32.mrb[0].mxu0
      %1148 = vmatprep.mubr.f32.mxu0 0.0
      %1149 = vmatmul.mubr.f32.gmra.mrb[0].mxu0 %v1029
      %v1150 = vpop.f32.mrb[0].mxu0
      %v1151 = vadd.f32 %v1052, %v1150
      %v1152 = vpop.f32.mrb[0].mxu0
      %1153 = vmatprep.mubr.f32.mxu0 0.0
      %1154 = vmatmul.mubr.f32.gmra.mrb[0].mxu0 %v1030
      %v1155 = vpop.f32.mrb[0].mxu0
      %v1156 = vadd.f32 %v1052, %v1155
      %v1157 = vpop.f32.mrb[0].mxu0
      %1158 = vdwg.mxu0
      %1159 = vst [vmem:[#allocation3] sm:$0xff] %v1121
      %1160 = vst [vmem:[#allocation3 + $0x8] sm:$0xff] %v1126
      %1161 = vst [vmem:[#allocation3 + $0x10] sm:$0xff] %v1131
      %1162 = vst [vmem:[#allocation3 + $0x18] sm:$0xff] %v1136
      %1163 = vst [vmem:[#allocation3 + $0x20] sm:$0xff] %v1141
      %1164 = vst [vmem:[#allocation3 + $0x28] sm:$0xff] %v1146
      %1165 = vst [vmem:[#allocation3 + $0x30] sm:$0xff] %v1151
      %1166 = vst [vmem:[#allocation3 + $0x38] sm:$0xff] %v1156
      %v1167 = vld [vmem:[#allocation3] sm:$0xff]
      %v1168 = vld [vmem:[#allocation7] sm:$0xff]
      %v1169 = vld [vmem:[#allocation7 + $0x8] sm:$0xff]
      %v1170 = vld [vmem:[#allocation7 + $0x10] sm:$0xff]
      %v1171 = vld [vmem:[#allocation7 + $0x18] sm:$0xff]
      %v1172 = vld [vmem:[#allocation7 + $0x20] sm:$0xff]
      %v1173 = vld [vmem:[#allocation7 + $0x28] sm:$0xff]
      %v1174 = vld [vmem:[#allocation7 + $0x30] sm:$0xff]
      %v1175 = vld [vmem:[#allocation7 + $0x38] sm:$0xff]
      %v1176 = vld [vmem:[#allocation7 + $0x40] sm:$0xff]
      %v1177 = vld [vmem:[#allocation7 + $0x48] sm:$0xff]
      %v1178 = vld [vmem:[#allocation7 + $0x50] sm:$0xff]
      %v1179 = vld [vmem:[#allocation7 + $0x58] sm:$0xff]
      %v1180 = vld [vmem:[#allocation7 + $0x60] sm:$0xff]
      %v1181 = vld [vmem:[#allocation7 + $0x68] sm:$0xff]
      %v1182 = vld [vmem:[#allocation7 + $0x70] sm:$0xff]
      %v1183 = vld [vmem:[#allocation7 + $0x78] sm:$0xff]
      %1184 = vmatprep.subr.mxu0 0.0
      %1185 = vmatpush1.msra.mxu0 %v1168
      %1186 = vmatprep.subr.mxu0 0.0
      %1187 = vmatpush1.msra.mxu0 %v1169
      %1188 = vmatprep.subr.mxu0 0.0
      %1189 = vmatpush1.msra.mxu0 %v1170
      %1190 = vmatprep.subr.mxu0 0.0
      %1191 = vmatpush1.msra.mxu0 %v1171
      %1192 = vmatprep.subr.mxu0 0.0
      %1193 = vmatpush1.msra.mxu0 %v1172
      %1194 = vmatprep.subr.mxu0 0.0
      %1195 = vmatpush1.msra.mxu0 %v1173
      %1196 = vmatprep.subr.mxu0 0.0
      %1197 = vmatpush1.msra.mxu0 %v1174
      %1198 = vmatprep.subr.mxu0 0.0
      %1199 = vmatpush1.msra.mxu0 %v1175
      %1200 = vmatprep.subr.mxu0 0.0
      %1201 = vmatpush1.msra.mxu0 %v1176
      %1202 = vmatprep.subr.mxu0 0.0
      %1203 = vmatpush1.msra.mxu0 %v1177
      %1204 = vmatprep.subr.mxu0 0.0
      %1205 = vmatpush1.msra.mxu0 %v1178
      %1206 = vmatprep.subr.mxu0 0.0
      %1207 = vmatpush1.msra.mxu0 %v1179
      %1208 = vmatprep.subr.mxu0 0.0
      %1209 = vmatpush1.msra.mxu0 %v1180
      %1210 = vmatprep.subr.mxu0 0.0
      %1211 = vmatpush1.msra.mxu0 %v1181
      %1212 = vmatprep.subr.mxu0 0.0
      %1213 = vmatpush1.msra.mxu0 %v1182
      %1214 = vmatprep.subr.mxu0 0.0
      %1215 = vmatpush1.msra.mxu0 %v1183
      %1216 = vmatprep.subr.mxu0 0.0
      %1217 = vmatpush1.msra.mxu0 0.0
      %1218 = vmatprep.subr.mxu0 0.0
      %1219 = vmatpush1.msra.mxu0 0.0
      %1220 = vmatprep.subr.mxu0 0.0
      %1221 = vmatpush1.msra.mxu0 0.0
      %1222 = vmatprep.subr.mxu0 0.0
      %1223 = vmatpush1.msra.mxu0 0.0
      %1224 = vmatprep.subr.mxu0 0.0
      %1225 = vmatpush1.msra.mxu0 0.0
      %1226 = vmatprep.subr.mxu0 0.0
      %1227 = vmatpush1.msra.mxu0 0.0
      %1228 = vmatprep.subr.mxu0 0.0
      %1229 = vmatpush1.msra.mxu0 0.0
      %1230 = vmatprep.subr.mxu0 0.0
      %1231 = vmatpush1.msra.mxu0 0.0
      %1232 = vmatprep.subr.mxu0 0.0
      %1233 = vmatpush1.msra.mxu0 0.0
      %1234 = vmatprep.subr.mxu0 0.0
      %1235 = vmatpush1.msra.mxu0 0.0
      %1236 = vmatprep.subr.mxu0 0.0
      %1237 = vmatpush1.msra.mxu0 0.0
      %1238 = vmatprep.subr.mxu0 0.0
      %1239 = vmatpush1.msra.mxu0 0.0
      %1240 = vmatprep.subr.mxu0 0.0
      %1241 = vmatpush1.msra.mxu0 0.0
      %1242 = vmatprep.subr.mxu0 0.0
      %1243 = vmatpush1.msra.mxu0 0.0
      %1244 = vmatprep.subr.mxu0 0.0
      %1245 = vmatpush1.msra.mxu0 0.0
      %1246 = vmatprep.subr.mxu0 0.0
      %1247 = vmatpush1.msra.mxu0 0.0
      %1248 = vmatprep.mubr.f32.mxu0 0.0
      %1249 = vmatmul.mubr.f32.gmra.mrb[0].mxu0 0.0
      %v1250 = vpop.f32.mrb[0].mxu0
      %v1251 = vadd.f32 0.0, %v1250
      %v1252 = vpop.f32.mrb[0].mxu0
      %1253 = vdwg.mxu0
      %v1254 = vadd.f32 %v1167, %v1251
      %v1255 = vxor.u32 %v1254, 2147483648
      %v1256 = vmul.f32 %v1255, 1.442695
      %v1257 = vpow.pop %v1256
      %v1258 = vadd.f32 %v1257, 1.0
      %v1259 = vrcp.pop %v1258
      %v1260 = vmul.f32 1.0, %v1259
      %v1261 = vtanh.pop %v1254
      %v1262 = vmul.f32 %v1260, 0.0
      %1264 = vrot.lane.b32.xlu0 %v1261, 64
      %v1265 = vpop.permute.xlu0 %1264
      %v1267 = vmul.f32 %v1260, %v1265
      %1269 = vrot.lane.b32.xlu0 %v1267, 32
      %v1270 = vpop.permute.xlu0 %1269
      %v1272 = vadd.f32 %v1262, %v1270
      %v1273 = vtanh.pop %v1272
      %1275 = vrot.lane.b32.xlu0 %v1273, 64
      %v1276 = vpop.permute.xlu0 %1275
      %v1278 = vmul.f32 %v1260, %v1276
      %1280 = vrot.lane.b32.xlu0 %v1278, 32
      %v1281 = vpop.permute.xlu0 %1280
      %v1283 = vsel %vm187, %v1281, 0.0
      %v1284 = vld [vmem:[#allocation3 + $0x8] sm:$0xff]
      %1285 = vmatprep.subr.mxu0 0.0
      %1286 = vmatpush1.msra.mxu0 %v1168
      %1287 = vmatprep.subr.mxu0 0.0
      %1288 = vmatpush1.msra.mxu0 %v1169
      %1289 = vmatprep.subr.mxu0 0.0
      %1290 = vmatpush1.msra.mxu0 %v1170
      %1291 = vmatprep.subr.mxu0 0.0
      %1292 = vmatpush1.msra.mxu0 %v1171
      %1293 = vmatprep.subr.mxu0 0.0
      %1294 = vmatpush1.msra.mxu0 %v1172
      %1295 = vmatprep.subr.mxu0 0.0
      %1296 = vmatpush1.msra.mxu0 %v1173
      %1297 = vmatprep.subr.mxu0 0.0
      %1298 = vmatpush1.msra.mxu0 %v1174
      %1299 = vmatprep.subr.mxu0 0.0
      %1300 = vmatpush1.msra.mxu0 %v1175
      %1301 = vmatprep.subr.mxu0 0.0
      %1302 = vmatpush1.msra.mxu0 %v1176
      %1303 = vmatprep.subr.mxu0 0.0
      %1304 = vmatpush1.msra.mxu0 %v1177
      %1305 = vmatprep.subr.mxu0 0.0
      %1306 = vmatpush1.msra.mxu0 %v1178
      %1307 = vmatprep.subr.mxu0 0.0
      %1308 = vmatpush1.msra.mxu0 %v1179
      %1309 = vmatprep.subr.mxu0 0.0
      %1310 = vmatpush1.msra.mxu0 %v1180
      %1311 = vmatprep.subr.mxu0 0.0
      %1312 = vmatpush1.msra.mxu0 %v1181
      %1313 = vmatprep.subr.mxu0 0.0
      %1314 = vmatpush1.msra.mxu0 %v1182
      %1315 = vmatprep.subr.mxu0 0.0
      %1316 = vmatpush1.msra.mxu0 %v1183
      %1317 = vmatprep.subr.mxu0 0.0
      %1318 = vmatpush1.msra.mxu0 0.0
      %1319 = vmatprep.subr.mxu0 0.0
      %1320 = vmatpush1.msra.mxu0 0.0
      %1321 = vmatprep.subr.mxu0 0.0
      %1322 = vmatpush1.msra.mxu0 0.0
      %1323 = vmatprep.subr.mxu0 0.0
      %1324 = vmatpush1.msra.mxu0 0.0
      %1325 = vmatprep.subr.mxu0 0.0
      %1326 = vmatpush1.msra.mxu0 0.0
      %1327 = vmatprep.subr.mxu0 0.0
      %1328 = vmatpush1.msra.mxu0 0.0
      %1329 = vmatprep.subr.mxu0 0.0
      %1330 = vmatpush1.msra.mxu0 0.0
      %1331 = vmatprep.subr.mxu0 0.0
      %1332 = vmatpush1.msra.mxu0 0.0
      %1333 = vmatprep.subr.mxu0 0.0
      %1334 = vmatpush1.msra.mxu0 0.0
      %1335 = vmatprep.subr.mxu0 0.0
      %1336 = vmatpush1.msra.mxu0 0.0
      %1337 = vmatprep.subr.mxu0 0.0
      %1338 = vmatpush1.msra.mxu0 0.0
      %1339 = vmatprep.subr.mxu0 0.0
      %1340 = vmatpush1.msra.mxu0 0.0
      %1341 = vmatprep.subr.mxu0 0.0
      %1342 = vmatpush1.msra.mxu0 0.0
      %1343 = vmatprep.subr.mxu0 0.0
      %1344 = vmatpush1.msra.mxu0 0.0
      %1345 = vmatprep.subr.mxu0 0.0
      %1346 = vmatpush1.msra.mxu0 0.0
      %1347 = vmatprep.subr.mxu0 0.0
      %1348 = vmatpush1.msra.mxu0 0.0
      %1349 = vmatprep.mubr.f32.mxu0 0.0
      %1350 = vmatmul.mubr.f32.gmra.mrb[0].mxu0 %v1283
      %v1351 = vpop.f32.mrb[0].mxu0
      %v1352 = vadd.f32 0.0, %v1351
      %v1353 = vpop.f32.mrb[0].mxu0
      %1354 = vdwg.mxu0
      %v1355 = vadd.f32 %v1284, %v1352
      %v1356 = vxor.u32 %v1355, 2147483648
      %v1357 = vmul.f32 %v1356, 1.442695
      %v1358 = vpow.pop %v1357
      %v1359 = vadd.f32 %v1358, 1.0
      %v1360 = vrcp.pop %v1359
      %v1361 = vmul.f32 1.0, %v1360
      %v1362 = vtanh.pop %v1355
      %v1363 = vmul.f32 %v1361, %v1272
      %1365 = vrot.lane.b32.xlu0 %v1362, 64
      %v1366 = vpop.permute.xlu0 %1365
      %v1368 = vmul.f32 %v1361, %v1366
      %1370 = vrot.lane.b32.xlu0 %v1368, 32
      %v1371 = vpop.permute.xlu0 %1370
      %v1373 = vadd.f32 %v1363, %v1371
      %v1374 = vtanh.pop %v1373
      %1376 = vrot.lane.b32.xlu0 %v1374, 64
      %v1377 = vpop.permute.xlu0 %1376
      %v1379 = vmul.f32 %v1361, %v1377
      %1381 = vrot.lane.b32.xlu0 %v1379, 32
      %v1382 = vpop.permute.xlu0 %1381
      %v1384 = vsel %vm187, %v1382, 0.0
      %v1385 = vld [vmem:[#allocation3 + $0x10] sm:$0xff]
      %1386 = vmatprep.subr.mxu0 0.0
      %1387 = vmatpush1.msra.mxu0 %v1168
      %1388 = vmatprep.subr.mxu0 0.0
      %1389 = vmatpush1.msra.mxu0 %v1169
      %1390 = vmatprep.subr.mxu0 0.0
      %1391 = vmatpush1.msra.mxu0 %v1170
      %1392 = vmatprep.subr.mxu0 0.0
      %1393 = vmatpush1.msra.mxu0 %v1171
      %1394 = vmatprep.subr.mxu0 0.0
      %1395 = vmatpush1.msra.mxu0 %v1172
      %1396 = vmatprep.subr.mxu0 0.0
      %1397 = vmatpush1.msra.mxu0 %v1173
      %1398 = vmatprep.subr.mxu0 0.0
      %1399 = vmatpush1.msra.mxu0 %v1174
      %1400 = vmatprep.subr.mxu0 0.0
      %1401 = vmatpush1.msra.mxu0 %v1175
      %1402 = vmatprep.subr.mxu0 0.0
      %1403 = vmatpush1.msra.mxu0 %v1176
      %1404 = vmatprep.subr.mxu0 0.0
      %1405 = vmatpush1.msra.mxu0 %v1177
      %1406 = vmatprep.subr.mxu0 0.0
      %1407 = vmatpush1.msra.mxu0 %v1178
      %1408 = vmatprep.subr.mxu0 0.0
      %1409 = vmatpush1.msra.mxu0 %v1179
      %1410 = vmatprep.subr.mxu0 0.0
      %1411 = vmatpush1.msra.mxu0 %v1180
      %1412 = vmatprep.subr.mxu0 0.0
      %1413 = vmatpush1.msra.mxu0 %v1181
      %1414 = vmatprep.subr.mxu0 0.0
      %1415 = vmatpush1.msra.mxu0 %v1182
      %1416 = vmatprep.subr.mxu0 0.0
      %1417 = vmatpush1.msra.mxu0 %v1183
      %1418 = vmatprep.subr.mxu0 0.0
      %1419 = vmatpush1.msra.mxu0 0.0
      %1420 = vmatprep.subr.mxu0 0.0
      %1421 = vmatpush1.msra.mxu0 0.0
      %1422 = vmatprep.subr.mxu0 0.0
      %1423 = vmatpush1.msra.mxu0 0.0
      %1424 = vmatprep.subr.mxu0 0.0
      %1425 = vmatpush1.msra.mxu0 0.0
      %1426 = vmatprep.subr.mxu0 0.0
      %1427 = vmatpush1.msra.mxu0 0.0
      %1428 = vmatprep.subr.mxu0 0.0
      %1429 = vmatpush1.msra.mxu0 0.0
      %1430 = vmatprep.subr.mxu0 0.0
      %1431 = vmatpush1.msra.mxu0 0.0
      %1432 = vmatprep.subr.mxu0 0.0
      %1433 = vmatpush1.msra.mxu0 0.0
      %1434 = vmatprep.subr.mxu0 0.0
      %1435 = vmatpush1.msra.mxu0 0.0
      %1436 = vmatprep.subr.mxu0 0.0
      %1437 = vmatpush1.msra.mxu0 0.0
      %1438 = vmatprep.subr.mxu0 0.0
      %1439 = vmatpush1.msra.mxu0 0.0
      %1440 = vmatprep.subr.mxu0 0.0
      %1441 = vmatpush1.msra.mxu0 0.0
      %1442 = vmatprep.subr.mxu0 0.0
      %1443 = vmatpush1.msra.mxu0 0.0
      %1444 = vmatprep.subr.mxu0 0.0
      %1445 = vmatpush1.msra.mxu0 0.0
      %1446 = vmatprep.subr.mxu0 0.0
      %1447 = vmatpush1.msra.mxu0 0.0
      %1448 = vmatprep.subr.mxu0 0.0
      %1449 = vmatpush1.msra.mxu0 0.0
      %1450 = vmatprep.mubr.f32.mxu0 0.0
      %1451 = vmatmul.mubr.f32.gmra.mrb[0].mxu0 %v1384
      %v1452 = vpop.f32.mrb[0].mxu0
      %v1453 = vadd.f32 0.0, %v1452
      %v1454 = vpop.f32.mrb[0].mxu0
      %1455 = vdwg.mxu0
      %v1456 = vadd.f32 %v1385, %v1453
      %v1457 = vxor.u32 %v1456, 2147483648
      %v1458 = vmul.f32 %v1457, 1.442695
      %v1459 = vpow.pop %v1458
      %v1460 = vadd.f32 %v1459, 1.0
      %v1461 = vrcp.pop %v1460
      %v1462 = vmul.f32 1.0, %v1461
      %v1463 = vtanh.pop %v1456
      %v1464 = vmul.f32 %v1462, %v1373
      %1466 = vrot.lane.b32.xlu0 %v1463, 64
      %v1467 = vpop.permute.xlu0 %1466
      %v1469 = vmul.f32 %v1462, %v1467
      %1471 = vrot.lane.b32.xlu0 %v1469, 32
      %v1472 = vpop.permute.xlu0 %1471
      %v1474 = vadd.f32 %v1464, %v1472
      %v1475 = vtanh.pop %v1474
      %1477 = vrot.lane.b32.xlu0 %v1475, 64
      %v1478 = vpop.permute.xlu0 %1477
      %v1480 = vmul.f32 %v1462, %v1478
      %1482 = vrot.lane.b32.xlu0 %v1480, 32
      %v1483 = vpop.permute.xlu0 %1482
      %v1485 = vsel %vm187, %v1483, 0.0
      %v1486 = vld [vmem:[#allocation3 + $0x18] sm:$0xff]
      %1487 = vmatprep.subr.mxu0 0.0
      %1488 = vmatpush1.msra.mxu0 %v1168
      %1489 = vmatprep.subr.mxu0 0.0
      %1490 = vmatpush1.msra.mxu0 %v1169
      %1491 = vmatprep.subr.mxu0 0.0
      %1492 = vmatpush1.msra.mxu0 %v1170
      %1493 = vmatprep.subr.mxu0 0.0
      %1494 = vmatpush1.msra.mxu0 %v1171
      %1495 = vmatprep.subr.mxu0 0.0
      %1496 = vmatpush1.msra.mxu0 %v1172
      %1497 = vmatprep.subr.mxu0 0.0
      %1498 = vmatpush1.msra.mxu0 %v1173
      %1499 = vmatprep.subr.mxu0 0.0
      %1500 = vmatpush1.msra.mxu0 %v1174
      %1501 = vmatprep.subr.mxu0 0.0
      %1502 = vmatpush1.msra.mxu0 %v1175
      %1503 = vmatprep.subr.mxu0 0.0
      %1504 = vmatpush1.msra.mxu0 %v1176
      %1505 = vmatprep.subr.mxu0 0.0
      %1506 = vmatpush1.msra.mxu0 %v1177
      %1507 = vmatprep.subr.mxu0 0.0
      %1508 = vmatpush1.msra.mxu0 %v1178
      %1509 = vmatprep.subr.mxu0 0.0
      %1510 = vmatpush1.msra.mxu0 %v1179
      %1511 = vmatprep.subr.mxu0 0.0
      %1512 = vmatpush1.msra.mxu0 %v1180
      %1513 = vmatprep.subr.mxu0 0.0
      %1514 = vmatpush1.msra.mxu0 %v1181
      %1515 = vmatprep.subr.mxu0 0.0
      %1516 = vmatpush1.msra.mxu0 %v1182
      %1517 = vmatprep.subr.mxu0 0.0
      %1518 = vmatpush1.msra.mxu0 %v1183
      %1519 = vmatprep.subr.mxu0 0.0
      %1520 = vmatpush1.msra.mxu0 0.0
      %1521 = vmatprep.subr.mxu0 0.0
      %1522 = vmatpush1.msra.mxu0 0.0
      %1523 = vmatprep.subr.mxu0 0.0
      %1524 = vmatpush1.msra.mxu0 0.0
      %1525 = vmatprep.subr.mxu0 0.0
      %1526 = vmatpush1.msra.mxu0 0.0
      %1527 = vmatprep.subr.mxu0 0.0
      %1528 = vmatpush1.msra.mxu0 0.0
      %1529 = vmatprep.subr.mxu0 0.0
      %1530 = vmatpush1.msra.mxu0 0.0
      %1531 = vmatprep.subr.mxu0 0.0
      %1532 = vmatpush1.msra.mxu0 0.0
      %1533 = vmatprep.subr.mxu0 0.0
      %1534 = vmatpush1.msra.mxu0 0.0
      %1535 = vmatprep.subr.mxu0 0.0
      %1536 = vmatpush1.msra.mxu0 0.0
      %1537 = vmatprep.subr.mxu0 0.0
      %1538 = vmatpush1.msra.mxu0 0.0
      %1539 = vmatprep.subr.mxu0 0.0
      %1540 = vmatpush1.msra.mxu0 0.0
      %1541 = vmatprep.subr.mxu0 0.0
      %1542 = vmatpush1.msra.mxu0 0.0
      %1543 = vmatprep.subr.mxu0 0.0
      %1544 = vmatpush1.msra.mxu0 0.0
      %1545 = vmatprep.subr.mxu0 0.0
      %1546 = vmatpush1.msra.mxu0 0.0
      %1547 = vmatprep.subr.mxu0 0.0
      %1548 = vmatpush1.msra.mxu0 0.0
      %1549 = vmatprep.subr.mxu0 0.0
      %1550 = vmatpush1.msra.mxu0 0.0
      %1551 = vmatprep.mubr.f32.mxu0 0.0
      %1552 = vmatmul.mubr.f32.gmra.mrb[0].mxu0 %v1485
      %v1553 = vpop.f32.mrb[0].mxu0
      %v1554 = vadd.f32 0.0, %v1553
      %v1555 = vpop.f32.mrb[0].mxu0
      %1556 = vdwg.mxu0
      %v1557 = vadd.f32 %v1486, %v1554
      %v1558 = vxor.u32 %v1557, 2147483648
      %v1559 = vmul.f32 %v1558, 1.442695
      %v1560 = vpow.pop %v1559
      %v1561 = vadd.f32 %v1560, 1.0
      %v1562 = vrcp.pop %v1561
      %v1563 = vmul.f32 1.0, %v1562
      %v1564 = vtanh.pop %v1557
      %v1565 = vmul.f32 %v1563, %v1474
      %1567 = vrot.lane.b32.xlu0 %v1564, 64
      %v1568 = vpop.permute.xlu0 %1567
      %v1570 = vmul.f32 %v1563, %v1568
      %1572 = vrot.lane.b32.xlu0 %v1570, 32
      %v1573 = vpop.permute.xlu0 %1572
      %v1575 = vadd.f32 %v1565, %v1573
      %v1576 = vtanh.pop %v1575
      %1578 = vrot.lane.b32.xlu0 %v1576, 64
      %v1579 = vpop.permute.xlu0 %1578
      %v1581 = vmul.f32 %v1563, %v1579
      %1583 = vrot.lane.b32.xlu0 %v1581, 32
      %v1584 = vpop.permute.xlu0 %1583
      %v1586 = vsel %vm187, %v1584, 0.0
      %v1587 = vld [vmem:[#allocation3 + $0x20] sm:$0xff]
      %1588 = vmatprep.subr.mxu0 0.0
      %1589 = vmatpush1.msra.mxu0 %v1168
      %1590 = vmatprep.subr.mxu0 0.0
      %1591 = vmatpush1.msra.mxu0 %v1169
      %1592 = vmatprep.subr.mxu0 0.0
      %1593 = vmatpush1.msra.mxu0 %v1170
      %1594 = vmatprep.subr.mxu0 0.0
      %1595 = vmatpush1.msra.mxu0 %v1171
      %1596 = vmatprep.subr.mxu0 0.0
      %1597 = vmatpush1.msra.mxu0 %v1172
      %1598 = vmatprep.subr.mxu0 0.0
      %1599 = vmatpush1.msra.mxu0 %v1173
      %1600 = vmatprep.subr.mxu0 0.0
      %1601 = vmatpush1.msra.mxu0 %v1174
      %1602 = vmatprep.subr.mxu0 0.0
      %1603 = vmatpush1.msra.mxu0 %v1175
      %1604 = vmatprep.subr.mxu0 0.0
      %1605 = vmatpush1.msra.mxu0 %v1176
      %1606 = vmatprep.subr.mxu0 0.0
      %1607 = vmatpush1.msra.mxu0 %v1177
      %1608 = vmatprep.subr.mxu0 0.0
      %1609 = vmatpush1.msra.mxu0 %v1178
      %1610 = vmatprep.subr.mxu0 0.0
      %1611 = vmatpush1.msra.mxu0 %v1179
      %1612 = vmatprep.subr.mxu0 0.0
      %1613 = vmatpush1.msra.mxu0 %v1180
      %1614 = vmatprep.subr.mxu0 0.0
      %1615 = vmatpush1.msra.mxu0 %v1181
      %1616 = vmatprep.subr.mxu0 0.0
      %1617 = vmatpush1.msra.mxu0 %v1182
      %1618 = vmatprep.subr.mxu0 0.0
      %1619 = vmatpush1.msra.mxu0 %v1183
      %1620 = vmatprep.subr.mxu0 0.0
      %1621 = vmatpush1.msra.mxu0 0.0
      %1622 = vmatprep.subr.mxu0 0.0
      %1623 = vmatpush1.msra.mxu0 0.0
      %1624 = vmatprep.subr.mxu0 0.0
      %1625 = vmatpush1.msra.mxu0 0.0
      %1626 = vmatprep.subr.mxu0 0.0
      %1627 = vmatpush1.msra.mxu0 0.0
      %1628 = vmatprep.subr.mxu0 0.0
      %1629 = vmatpush1.msra.mxu0 0.0
      %1630 = vmatprep.subr.mxu0 0.0
      %1631 = vmatpush1.msra.mxu0 0.0
      %1632 = vmatprep.subr.mxu0 0.0
      %1633 = vmatpush1.msra.mxu0 0.0
      %1634 = vmatprep.subr.mxu0 0.0
      %1635 = vmatpush1.msra.mxu0 0.0
      %1636 = vmatprep.subr.mxu0 0.0
      %1637 = vmatpush1.msra.mxu0 0.0
      %1638 = vmatprep.subr.mxu0 0.0
      %1639 = vmatpush1.msra.mxu0 0.0
      %1640 = vmatprep.subr.mxu0 0.0
      %1641 = vmatpush1.msra.mxu0 0.0
      %1642 = vmatprep.subr.mxu0 0.0
      %1643 = vmatpush1.msra.mxu0 0.0
      %1644 = vmatprep.subr.mxu0 0.0
      %1645 = vmatpush1.msra.mxu0 0.0
      %1646 = vmatprep.subr.mxu0 0.0
      %1647 = vmatpush1.msra.mxu0 0.0
      %1648 = vmatprep.subr.mxu0 0.0
      %1649 = vmatpush1.msra.mxu0 0.0
      %1650 = vmatprep.subr.mxu0 0.0
      %1651 = vmatpush1.msra.mxu0 0.0
      %1652 = vmatprep.mubr.f32.mxu0 0.0
      %1653 = vmatmul.mubr.f32.gmra.mrb[0].mxu0 %v1586
      %v1654 = vpop.f32.mrb[0].mxu0
      %v1655 = vadd.f32 0.0, %v1654
      %v1656 = vpop.f32.mrb[0].mxu0
      %1657 = vdwg.mxu0
      %v1658 = vadd.f32 %v1587, %v1655
      %v1659 = vxor.u32 %v1658, 2147483648
      %v1660 = vmul.f32 %v1659, 1.442695
      %v1661 = vpow.pop %v1660
      %v1662 = vadd.f32 %v1661, 1.0
      %v1663 = vrcp.pop %v1662
      %v1664 = vmul.f32 1.0, %v1663
      %v1665 = vtanh.pop %v1658
      %v1666 = vmul.f32 %v1664, %v1575
      %1668 = vrot.lane.b32.xlu0 %v1665, 64
      %v1669 = vpop.permute.xlu0 %1668
      %v1671 = vmul.f32 %v1664, %v1669
      %1673 = vrot.lane.b32.xlu0 %v1671, 32
      %v1674 = vpop.permute.xlu0 %1673
      %v1676 = vadd.f32 %v1666, %v1674
      %v1677 = vtanh.pop %v1676
      %1679 = vrot.lane.b32.xlu0 %v1677, 64
      %v1680 = vpop.permute.xlu0 %1679
      %v1682 = vmul.f32 %v1664, %v1680
      %1684 = vrot.lane.b32.xlu0 %v1682, 32
      %v1685 = vpop.permute.xlu0 %1684
      %v1687 = vsel %vm187, %v1685, 0.0
      %v1688 = vld [vmem:[#allocation3 + $0x28] sm:$0xff]
      %1689 = vmatprep.subr.mxu0 0.0
      %1690 = vmatpush1.msra.mxu0 %v1168
      %1691 = vmatprep.subr.mxu0 0.0
      %1692 = vmatpush1.msra.mxu0 %v1169
      %1693 = vmatprep.subr.mxu0 0.0
      %1694 = vmatpush1.msra.mxu0 %v1170
      %1695 = vmatprep.subr.mxu0 0.0
      %1696 = vmatpush1.msra.mxu0 %v1171
      %1697 = vmatprep.subr.mxu0 0.0
      %1698 = vmatpush1.msra.mxu0 %v1172
      %1699 = vmatprep.subr.mxu0 0.0
      %1700 = vmatpush1.msra.mxu0 %v1173
      %1701 = vmatprep.subr.mxu0 0.0
      %1702 = vmatpush1.msra.mxu0 %v1174
      %1703 = vmatprep.subr.mxu0 0.0
      %1704 = vmatpush1.msra.mxu0 %v1175
      %1705 = vmatprep.subr.mxu0 0.0
      %1706 = vmatpush1.msra.mxu0 %v1176
      %1707 = vmatprep.subr.mxu0 0.0
      %1708 = vmatpush1.msra.mxu0 %v1177
      %1709 = vmatprep.subr.mxu0 0.0
      %1710 = vmatpush1.msra.mxu0 %v1178
      %1711 = vmatprep.subr.mxu0 0.0
      %1712 = vmatpush1.msra.mxu0 %v1179
      %1713 = vmatprep.subr.mxu0 0.0
      %1714 = vmatpush1.msra.mxu0 %v1180
      %1715 = vmatprep.subr.mxu0 0.0
      %1716 = vmatpush1.msra.mxu0 %v1181
      %1717 = vmatprep.subr.mxu0 0.0
      %1718 = vmatpush1.msra.mxu0 %v1182
      %1719 = vmatprep.subr.mxu0 0.0
      %1720 = vmatpush1.msra.mxu0 %v1183
      %1721 = vmatprep.subr.mxu0 0.0
      %1722 = vmatpush1.msra.mxu0 0.0
      %1723 = vmatprep.subr.mxu0 0.0
      %1724 = vmatpush1.msra.mxu0 0.0
      %1725 = vmatprep.subr.mxu0 0.0
      %1726 = vmatpush1.msra.mxu0 0.0
      %1727 = vmatprep.subr.mxu0 0.0
      %1728 = vmatpush1.msra.mxu0 0.0
      %1729 = vmatprep.subr.mxu0 0.0
      %1730 = vmatpush1.msra.mxu0 0.0
      %1731 = vmatprep.subr.mxu0 0.0
      %1732 = vmatpush1.msra.mxu0 0.0
      %1733 = vmatprep.subr.mxu0 0.0
      %1734 = vmatpush1.msra.mxu0 0.0
      %1735 = vmatprep.subr.mxu0 0.0
      %1736 = vmatpush1.msra.mxu0 0.0
      %1737 = vmatprep.subr.mxu0 0.0
      %1738 = vmatpush1.msra.mxu0 0.0
      %1739 = vmatprep.subr.mxu0 0.0
      %1740 = vmatpush1.msra.mxu0 0.0
      %1741 = vmatprep.subr.mxu0 0.0
      %1742 = vmatpush1.msra.mxu0 0.0
      %1743 = vmatprep.subr.mxu0 0.0
      %1744 = vmatpush1.msra.mxu0 0.0
      %1745 = vmatprep.subr.mxu0 0.0
      %1746 = vmatpush1.msra.mxu0 0.0
      %1747 = vmatprep.subr.mxu0 0.0
      %1748 = vmatpush1.msra.mxu0 0.0
      %1749 = vmatprep.subr.mxu0 0.0
      %1750 = vmatpush1.msra.mxu0 0.0
      %1751 = vmatprep.subr.mxu0 0.0
      %1752 = vmatpush1.msra.mxu0 0.0
      %1753 = vmatprep.mubr.f32.mxu0 0.0
      %1754 = vmatmul.mubr.f32.gmra.mrb[0].mxu0 %v1687
      %v1755 = vpop.f32.mrb[0].mxu0
      %v1756 = vadd.f32 0.0, %v1755
      %v1757 = vpop.f32.mrb[0].mxu0
      %1758 = vdwg.mxu0
      %v1759 = vadd.f32 %v1688, %v1756
      %v1760 = vxor.u32 %v1759, 2147483648
      %v1761 = vmul.f32 %v1760, 1.442695
      %v1762 = vpow.pop %v1761
      %v1763 = vadd.f32 %v1762, 1.0
      %v1764 = vrcp.pop %v1763
      %v1765 = vmul.f32 1.0, %v1764
      %v1766 = vtanh.pop %v1759
      %v1767 = vmul.f32 %v1765, %v1676
      %1769 = vrot.lane.b32.xlu0 %v1766, 64
      %v1770 = vpop.permute.xlu0 %1769
      %v1772 = vmul.f32 %v1765, %v1770
      %1774 = vrot.lane.b32.xlu0 %v1772, 32
      %v1775 = vpop.permute.xlu0 %1774
      %v1777 = vadd.f32 %v1767, %v1775
      %v1778 = vtanh.pop %v1777
      %1780 = vrot.lane.b32.xlu0 %v1778, 64
      %v1781 = vpop.permute.xlu0 %1780
      %v1783 = vmul.f32 %v1765, %v1781
      %1785 = vrot.lane.b32.xlu0 %v1783, 32
      %v1786 = vpop.permute.xlu0 %1785
      %v1788 = vsel %vm187, %v1786, 0.0
      %v1789 = vld [vmem:[#allocation3 + $0x30] sm:$0xff]
      %1790 = vmatprep.subr.mxu0 0.0
      %1791 = vmatpush1.msra.mxu0 %v1168
      %1792 = vmatprep.subr.mxu0 0.0
      %1793 = vmatpush1.msra.mxu0 %v1169
      %1794 = vmatprep.subr.mxu0 0.0
      %1795 = vmatpush1.msra.mxu0 %v1170
      %1796 = vmatprep.subr.mxu0 0.0
      %1797 = vmatpush1.msra.mxu0 %v1171
      %1798 = vmatprep.subr.mxu0 0.0
      %1799 = vmatpush1.msra.mxu0 %v1172
      %1800 = vmatprep.subr.mxu0 0.0
      %1801 = vmatpush1.msra.mxu0 %v1173
      %1802 = vmatprep.subr.mxu0 0.0
      %1803 = vmatpush1.msra.mxu0 %v1174
      %1804 = vmatprep.subr.mxu0 0.0
      %1805 = vmatpush1.msra.mxu0 %v1175
      %1806 = vmatprep.subr.mxu0 0.0
      %1807 = vmatpush1.msra.mxu0 %v1176
      %1808 = vmatprep.subr.mxu0 0.0
      %1809 = vmatpush1.msra.mxu0 %v1177
      %1810 = vmatprep.subr.mxu0 0.0
      %1811 = vmatpush1.msra.mxu0 %v1178
      %1812 = vmatprep.subr.mxu0 0.0
      %1813 = vmatpush1.msra.mxu0 %v1179
      %1814 = vmatprep.subr.mxu0 0.0
      %1815 = vmatpush1.msra.mxu0 %v1180
      %1816 = vmatprep.subr.mxu0 0.0
      %1817 = vmatpush1.msra.mxu0 %v1181
      %1818 = vmatprep.subr.mxu0 0.0
      %1819 = vmatpush1.msra.mxu0 %v1182
      %1820 = vmatprep.subr.mxu0 0.0
      %1821 = vmatpush1.msra.mxu0 %v1183
      %1822 = vmatprep.subr.mxu0 0.0
      %1823 = vmatpush1.msra.mxu0 0.0
      %1824 = vmatprep.subr.mxu0 0.0
      %1825 = vmatpush1.msra.mxu0 0.0
      %1826 = vmatprep.subr.mxu0 0.0
      %1827 = vmatpush1.msra.mxu0 0.0
      %1828 = vmatprep.subr.mxu0 0.0
      %1829 = vmatpush1.msra.mxu0 0.0
      %1830 = vmatprep.subr.mxu0 0.0
      %1831 = vmatpush1.msra.mxu0 0.0
      %1832 = vmatprep.subr.mxu0 0.0
      %1833 = vmatpush1.msra.mxu0 0.0
      %1834 = vmatprep.subr.mxu0 0.0
      %1835 = vmatpush1.msra.mxu0 0.0
      %1836 = vmatprep.subr.mxu0 0.0
      %1837 = vmatpush1.msra.mxu0 0.0
      %1838 = vmatprep.subr.mxu0 0.0
      %1839 = vmatpush1.msra.mxu0 0.0
      %1840 = vmatprep.subr.mxu0 0.0
      %1841 = vmatpush1.msra.mxu0 0.0
      %1842 = vmatprep.subr.mxu0 0.0
      %1843 = vmatpush1.msra.mxu0 0.0
      %1844 = vmatprep.subr.mxu0 0.0
      %1845 = vmatpush1.msra.mxu0 0.0
      %1846 = vmatprep.subr.mxu0 0.0
      %1847 = vmatpush1.msra.mxu0 0.0
      %1848 = vmatprep.subr.mxu0 0.0
      %1849 = vmatpush1.msra.mxu0 0.0
      %1850 = vmatprep.subr.mxu0 0.0
      %1851 = vmatpush1.msra.mxu0 0.0
      %1852 = vmatprep.subr.mxu0 0.0
      %1853 = vmatpush1.msra.mxu0 0.0
      %1854 = vmatprep.mubr.f32.mxu0 0.0
      %1855 = vmatmul.mubr.f32.gmra.mrb[0].mxu0 %v1788
      %v1856 = vpop.f32.mrb[0].mxu0
      %v1857 = vadd.f32 0.0, %v1856
      %v1858 = vpop.f32.mrb[0].mxu0
      %1859 = vdwg.mxu0
      %v1860 = vadd.f32 %v1789, %v1857
      %v1861 = vxor.u32 %v1860, 2147483648
      %v1862 = vmul.f32 %v1861, 1.442695
      %v1863 = vpow.pop %v1862
      %v1864 = vadd.f32 %v1863, 1.0
      %v1865 = vrcp.pop %v1864
      %v1866 = vmul.f32 1.0, %v1865
      %v1867 = vtanh.pop %v1860
      %v1868 = vmul.f32 %v1866, %v1777
      %1870 = vrot.lane.b32.xlu0 %v1867, 64
      %v1871 = vpop.permute.xlu0 %1870
      %v1873 = vmul.f32 %v1866, %v1871
      %1875 = vrot.lane.b32.xlu0 %v1873, 32
      %v1876 = vpop.permute.xlu0 %1875
      %v1878 = vadd.f32 %v1868, %v1876
      %v1879 = vtanh.pop %v1878
      %1881 = vrot.lane.b32.xlu0 %v1879, 64
      %v1882 = vpop.permute.xlu0 %1881
      %v1884 = vmul.f32 %v1866, %v1882
      %1886 = vrot.lane.b32.xlu0 %v1884, 32
      %v1887 = vpop.permute.xlu0 %1886
      %v1889 = vsel %vm187, %v1887, 0.0
      %v1890 = vld [vmem:[#allocation3 + $0x38] sm:$0xff]
      %1891 = vmatprep.subr.mxu0 0.0
      %1892 = vmatpush1.msra.mxu0 %v1168
      %1893 = vmatprep.subr.mxu0 0.0
      %1894 = vmatpush1.msra.mxu0 %v1169
      %1895 = vmatprep.subr.mxu0 0.0
      %1896 = vmatpush1.msra.mxu0 %v1170
      %1897 = vmatprep.subr.mxu0 0.0
      %1898 = vmatpush1.msra.mxu0 %v1171
      %1899 = vmatprep.subr.mxu0 0.0
      %1900 = vmatpush1.msra.mxu0 %v1172
      %1901 = vmatprep.subr.mxu0 0.0
      %1902 = vmatpush1.msra.mxu0 %v1173
      %1903 = vmatprep.subr.mxu0 0.0
      %1904 = vmatpush1.msra.mxu0 %v1174
      %1905 = vmatprep.subr.mxu0 0.0
      %1906 = vmatpush1.msra.mxu0 %v1175
      %1907 = vmatprep.subr.mxu0 0.0
      %1908 = vmatpush1.msra.mxu0 %v1176
      %1909 = vmatprep.subr.mxu0 0.0
      %1910 = vmatpush1.msra.mxu0 %v1177
      %1911 = vmatprep.subr.mxu0 0.0
      %1912 = vmatpush1.msra.mxu0 %v1178
      %1913 = vmatprep.subr.mxu0 0.0
      %1914 = vmatpush1.msra.mxu0 %v1179
      %1915 = vmatprep.subr.mxu0 0.0
      %1916 = vmatpush1.msra.mxu0 %v1180
      %1917 = vmatprep.subr.mxu0 0.0
      %1918 = vmatpush1.msra.mxu0 %v1181
      %1919 = vmatprep.subr.mxu0 0.0
      %1920 = vmatpush1.msra.mxu0 %v1182
      %1921 = vmatprep.subr.mxu0 0.0
      %1922 = vmatpush1.msra.mxu0 %v1183
      %1923 = vmatprep.subr.mxu0 0.0
      %1924 = vmatpush1.msra.mxu0 0.0
      %1925 = vmatprep.subr.mxu0 0.0
      %1926 = vmatpush1.msra.mxu0 0.0
      %1927 = vmatprep.subr.mxu0 0.0
      %1928 = vmatpush1.msra.mxu0 0.0
      %1929 = vmatprep.subr.mxu0 0.0
      %1930 = vmatpush1.msra.mxu0 0.0
      %1931 = vmatprep.subr.mxu0 0.0
      %1932 = vmatpush1.msra.mxu0 0.0
      %1933 = vmatprep.subr.mxu0 0.0
      %1934 = vmatpush1.msra.mxu0 0.0
      %1935 = vmatprep.subr.mxu0 0.0
      %1936 = vmatpush1.msra.mxu0 0.0
      %1937 = vmatprep.subr.mxu0 0.0
      %1938 = vmatpush1.msra.mxu0 0.0
      %1939 = vmatprep.subr.mxu0 0.0
      %1940 = vmatpush1.msra.mxu0 0.0
      %1941 = vmatprep.subr.mxu0 0.0
      %1942 = vmatpush1.msra.mxu0 0.0
      %1943 = vmatprep.subr.mxu0 0.0
      %1944 = vmatpush1.msra.mxu0 0.0
      %1945 = vmatprep.subr.mxu0 0.0
      %1946 = vmatpush1.msra.mxu0 0.0
      %1947 = vmatprep.subr.mxu0 0.0
      %1948 = vmatpush1.msra.mxu0 0.0
      %1949 = vmatprep.subr.mxu0 0.0
      %1950 = vmatpush1.msra.mxu0 0.0
      %1951 = vmatprep.subr.mxu0 0.0
      %1952 = vmatpush1.msra.mxu0 0.0
      %1953 = vmatprep.subr.mxu0 0.0
      %1954 = vmatpush1.msra.mxu0 0.0
      %1955 = vmatprep.mubr.f32.mxu0 0.0
      %1956 = vmatmul.mubr.f32.gmra.mrb[0].mxu0 %v1889
      %v1957 = vpop.f32.mrb[0].mxu0
      %v1958 = vadd.f32 0.0, %v1957
      %v1959 = vpop.f32.mrb[0].mxu0
      %1960 = vdwg.mxu0
      %v1961 = vadd.f32 %v1890, %v1958
      %v1962 = vxor.u32 %v1961, 2147483648
      %v1963 = vmul.f32 %v1962, 1.442695
      %v1964 = vpow.pop %v1963
      %v1965 = vadd.f32 %v1964, 1.0
      %v1966 = vrcp.pop %v1965
      %v1967 = vmul.f32 1.0, %v1966
      %v1968 = vtanh.pop %v1961
      %v1969 = vmul.f32 %v1967, %v1878
      %1971 = vrot.lane.b32.xlu0 %v1968, 64
      %v1972 = vpop.permute.xlu0 %1971
      %v1974 = vmul.f32 %v1967, %v1972
      %1976 = vrot.lane.b32.xlu0 %v1974, 32
      %v1977 = vpop.permute.xlu0 %1976
      %v1979 = vadd.f32 %v1969, %v1977
      %v1980 = vtanh.pop %v1979
      %1982 = vrot.lane.b32.xlu0 %v1980, 64
      %v1983 = vpop.permute.xlu0 %1982
      %v1985 = vmul.f32 %v1967, %v1983
      %1987 = vrot.lane.b32.xlu0 %v1985, 32
      %v1988 = vpop.permute.xlu0 %1987
      %v1990 = vsel %vm187, %v1988, 0.0
      %1991 = vst [vmem:[#allocation2] sm:$0xff] %v1990
    $region45: #{lstm_interaction_encoder.1} parent=1 // pred_fallthru
      _
    %v1992 = vld [vmem:[#allocation2] sm:$0xff]
    %v1993 = vld [vmem:[#allocation9] sm:$0xff]
    %v1994 = vld [vmem:[#allocation9 + $0x8] sm:$0xff]
    %v1995 = vld [vmem:[#allocation9 + $0x10] sm:$0xff]
    %v1996 = vld [vmem:[#allocation9 + $0x18] sm:$0xff]
    %v1997 = vld [vmem:[#allocation9 + $0x20] sm:$0xff]
    %v1998 = vld [vmem:[#allocation9 + $0x28] sm:$0xff]
    %v1999 = vld [vmem:[#allocation9 + $0x30] sm:$0xff]
    %v2000 = vld [vmem:[#allocation9 + $0x38] sm:$0xff]
    %v2001 = vld [vmem:[#allocation9 + $0x40] sm:$0xff]
    %v2002 = vld [vmem:[#allocation9 + $0x48] sm:$0xff]
    %v2003 = vld [vmem:[#allocation9 + $0x50] sm:$0xff]
    %v2004 = vld [vmem:[#allocation9 + $0x58] sm:$0xff]
    %v2005 = vld [vmem:[#allocation9 + $0x60] sm:$0xff]
    %v2006 = vld [vmem:[#allocation9 + $0x68] sm:$0xff]
    %v2007 = vld [vmem:[#allocation9 + $0x70] sm:$0xff]
    %v2008 = vld [vmem:[#allocation9 + $0x78] sm:$0xff]
    %v2009 = vld [vmem:[%s6] sm:$0x1]
    %v2011 = vlaneseq
    %v2012 = vshrl.u32 %v2011, 7
    %v2013 = vsub.s32 0, %v2012
    %v2014 = vrot.slane %v2009, %v2013
    %2016 = vmatprep.subr.mxu0 0.0
    %2017 = vmatpush1.msra.mxu0 %v1993
    %2018 = vmatprep.subr.mxu0 0.0
    %2019 = vmatpush1.msra.mxu0 %v1994
    %2020 = vmatprep.subr.mxu0 0.0
    %2021 = vmatpush1.msra.mxu0 %v1995
    %2022 = vmatprep.subr.mxu0 0.0
    %2023 = vmatpush1.msra.mxu0 %v1996
    %2024 = vmatprep.subr.mxu0 0.0
    %2025 = vmatpush1.msra.mxu0 %v1997
    %2026 = vmatprep.subr.mxu0 0.0
    %2027 = vmatpush1.msra.mxu0 %v1998
    %2028 = vmatprep.subr.mxu0 0.0
    %2029 = vmatpush1.msra.mxu0 %v1999
    %2030 = vmatprep.subr.mxu0 0.0
    %2031 = vmatpush1.msra.mxu0 %v2000
    %2032 = vmatprep.subr.mxu0 0.0
    %2033 = vmatpush1.msra.mxu0 %v2001
    %2034 = vmatprep.subr.mxu0 0.0
    %2035 = vmatpush1.msra.mxu0 %v2002
    %2036 = vmatprep.subr.mxu0 0.0
    %2037 = vmatpush1.msra.mxu0 %v2003
    %2038 = vmatprep.subr.mxu0 0.0
    %2039 = vmatpush1.msra.mxu0 %v2004
    %2040 = vmatprep.subr.mxu0 0.0
    %2041 = vmatpush1.msra.mxu0 %v2005
    %2042 = vmatprep.subr.mxu0 0.0
    %2043 = vmatpush1.msra.mxu0 %v2006
    %2044 = vmatprep.subr.mxu0 0.0
    %2045 = vmatpush1.msra.mxu0 %v2007
    %2046 = vmatprep.subr.mxu0 0.0
    %2047 = vmatpush1.msra.mxu0 %v2008
    %2048 = vmatprep.subr.mxu0 0.0
    %2049 = vmatpush1.msra.mxu0 0.0
    %2050 = vmatprep.subr.mxu0 0.0
    %2051 = vmatpush1.msra.mxu0 0.0
    %2052 = vmatprep.subr.mxu0 0.0
    %2053 = vmatpush1.msra.mxu0 0.0
    %2054 = vmatprep.subr.mxu0 0.0
    %2055 = vmatpush1.msra.mxu0 0.0
    %2056 = vmatprep.subr.mxu0 0.0
    %2057 = vmatpush1.msra.mxu0 0.0
    %2058 = vmatprep.subr.mxu0 0.0
    %2059 = vmatpush1.msra.mxu0 0.0
    %2060 = vmatprep.subr.mxu0 0.0
    %2061 = vmatpush1.msra.mxu0 0.0
    %2062 = vmatprep.subr.mxu0 0.0
    %2063 = vmatpush1.msra.mxu0 0.0
    %2064 = vmatprep.subr.mxu0 0.0
    %2065 = vmatpush1.msra.mxu0 0.0
    %2066 = vmatprep.subr.mxu0 0.0
    %2067 = vmatpush1.msra.mxu0 0.0
    %2068 = vmatprep.subr.mxu0 0.0
    %2069 = vmatpush1.msra.mxu0 0.0
    %2070 = vmatprep.subr.mxu0 0.0
    %2071 = vmatpush1.msra.mxu0 0.0
    %2072 = vmatprep.subr.mxu0 0.0
    %2073 = vmatpush1.msra.mxu0 0.0
    %2074 = vmatprep.subr.mxu0 0.0
    %2075 = vmatpush1.msra.mxu0 0.0
    %2076 = vmatprep.subr.mxu0 0.0
    %2077 = vmatpush1.msra.mxu0 0.0
    %2078 = vmatprep.subr.mxu0 0.0
    %2079 = vmatpush1.msra.mxu0 0.0
    %2080 = vmatprep.mubr.f32.mxu0 0.0
    %2081 = vmatmul.mubr.f32.gmra.mrb[0].mxu0 %v1992
    %v2082 = vpop.f32.mrb[0].mxu0
    %v2083 = vadd.f32 %v2014, %v2082
    %v2084 = vpop.f32.mrb[0].mxu0
    %2085 = vdwg.mxu0
    %2086 = vst [vmem:[%s7] sm:$0xff] %v2083
    // Predicated region
    $region46: #{lstm_interaction_encoder.1} parent=1 // pred_check
      _
    $region47: #{lstm_interaction_encoder.1} parent=1 // pred_check_branch
      %2088 = sbr.rel (0) target = $region49
    $region48: #{lstm_interaction_encoder.1} parent=1 // pred_region
      _
    $region49: #{lstm_interaction_encoder.1} parent=1 // pred_fallthru
      _
    // Predicated region
    $region50: #{lstm_interaction_encoder.1} parent=1 // pred_check
      _
    $region51: #{lstm_interaction_encoder.1} parent=1 // pred_check_branch
      %2090 = sbr.rel (0) target = $region53
    $region52: #{lstm_interaction_encoder.1} parent=1 // pred_region
      _
    $region53: #{lstm_interaction_encoder.1} parent=1 // pred_fallthru
      _
    %2091 = vsyncpa [#allocation6], 1
    %2092 = vsyncpa [#allocation8], 1

</llo_original>
